<compile_context>
chip_gen: v7x
topology: tpu7x:2x2x1
jax: 0.10.0
libtpu: 0.0.40
codegen_flags: <defaults>
</compile_context>

<pallas_src>
import functools

import numpy as np
import jax
import jax.numpy as jnp
from jax import lax
from jax.experimental import pallas as pl
from jax.experimental.pallas import tpu as pltpu

_VMEM_LIMIT = 48 * 1024 * 1024  # fits v7x's 64 MiB physical VMEM with headroom
_LN_EPS = 1e-5                  # PyTorch nn.LayerNorm default


# ------------------- kernel 1: QKV + relu^2 attention + norm1 ----------------

def _attn_norm1_kernel(x_ref, wqkv_ref, bqkv_ref, g1_ref, b1_ref,
                       y_ref, attn_ref, *, d_model, eps):
    x = x_ref[0].astype(jnp.float32)                                  # (L, D)
    # Fused QKV projection: one (L, D) @ (D, 3D) matmul.
    qkv = jnp.dot(x, wqkv_ref[...],
                  preferred_element_type=jnp.float32) + bqkv_ref[...]  # (L, 3D)
    q = qkv[:, :d_model]
    k = qkv[:, d_model:2 * d_model]
    v = qkv[:, 2 * d_model:]
    # scores = Q K^T without an explicit transpose (contract the feature axis).
    s = lax.dot_general(q, k, dimension_numbers=(((1,), (1,)), ((), ())),
                        preferred_element_type=jnp.float32)            # (L, L)
    s = jnp.maximum(s, 0.0)
    w = s * s
    denom = jnp.sum(w, axis=-1, keepdims=True) + 1e-9
    w = w * pl.reciprocal(denom, approx=True)                          # EUP slot
    new_x = jnp.dot(w, v, preferred_element_type=jnp.float32)          # (L, D)
    z = x + new_x                                                      # dropout = id
    mu = jnp.mean(z, axis=-1, keepdims=True)
    var = jnp.mean(jnp.square(z - mu), axis=-1, keepdims=True)
    y = (z - mu) * lax.rsqrt(var + eps) * g1_ref[...] + b1_ref[...]
    y_ref[0] = y.astype(y_ref.dtype)
    attn_ref[0] = w.astype(attn_ref.dtype)


def attention_norm1(x, wqkv, bqkv, g1, b1, *, eps=_LN_EPS):
    B, L, D = x.shape
    kern = functools.partial(_attn_norm1_kernel, d_model=D, eps=eps)
    return pl.pallas_call(
        kern,
        out_shape=(jax.ShapeDtypeStruct((B, L, D), x.dtype),
                   jax.ShapeDtypeStruct((B, L, L), x.dtype)),
        grid=(B,),
        in_specs=[
            pl.BlockSpec((1, L, D), lambda b: (b, 0, 0)),
            pl.BlockSpec((D, 3 * D), lambda b: (0, 0)),
            pl.BlockSpec((1, 3 * D), lambda b: (0, 0)),
            pl.BlockSpec((1, D), lambda b: (0, 0)),
            pl.BlockSpec((1, D), lambda b: (0, 0)),
        ],
        out_specs=(pl.BlockSpec((1, L, D), lambda b: (b, 0, 0)),
                   pl.BlockSpec((1, L, L), lambda b: (b, 0, 0))),
        compiler_params=pltpu.CompilerParams(
            dimension_semantics=("parallel",),
            vmem_limit_bytes=_VMEM_LIMIT),
    )(x, wqkv, bqkv, g1, b1)


# ---- kernel 2: freq-split FFN branches + GateFusion + FFN branches + norm2 ---

def _sigmoid(a):
    return 1.0 / (1.0 + jnp.exp(-a))


def _freq_ffn_gate_norm2_kernel(
        y_ref,
        w1l_ref, b1l_ref, w2l_ref, b2l_ref,
        w1h_ref, b1h_ref, w2h_ref, b2h_ref,
        wgl_ref, bgl_ref, wgh_ref, bgh_ref,
        w1lo_ref, b1lo_ref, w2lo_ref, b2lo_ref,
        w1hg_ref, b1hg_ref, w2hg_ref, b2hg_ref,
        g2_ref, beta2_ref,
        o_ref, *, eps):
    y = y_ref[...].astype(jnp.float32)                                # (TM, D)

    # First FFN pair.  The FFT band split (low/high) is a linear map along D and
    # has been pre-folded into w1l / w1h, so y already plays the role of y_low /
    # y_high after the first matmul.  (dropout = identity)
    hl = jnp.maximum(jnp.dot(y, w1l_ref[...],
                             preferred_element_type=jnp.float32) + b1l_ref[...], 0.0)
    yl = jnp.dot(hl, w2l_ref[...],
                 preferred_element_type=jnp.float32) + b2l_ref[...]
    hh = jnp.maximum(jnp.dot(y, w1h_ref[...],
                             preferred_element_type=jnp.float32) + b1h_ref[...], 0.0)
    yh = jnp.dot(hh, w2h_ref[...],
                 preferred_element_type=jnp.float32) + b2h_ref[...]

    # GateFusion (linear_low / linear_high unused in the reference forward).
    gl = _sigmoid(jnp.dot(yl, wgl_ref[...],
                          preferred_element_type=jnp.float32) + bgl_ref[...])
    gh = _sigmoid(jnp.dot(yh, wgh_ref[...],
                          preferred_element_type=jnp.float32) + bgh_ref[...])
    yl_f = gl * yl + (1.0 - gl) * yh
    yh_f = gh * yh + (1.0 - gh) * yl

    # Second FFN pair.
    h2l = jnp.maximum(jnp.dot(yl_f, w1lo_ref[...],
                              preferred_element_type=jnp.float32) + b1lo_ref[...], 0.0)
    yl2 = jnp.dot(h2l, w2lo_ref[...],
                  preferred_element_type=jnp.float32) + b2lo_ref[...]
    h2h = jnp.maximum(jnp.dot(yh_f, w1hg_ref[...],
                              preferred_element_type=jnp.float32) + b1hg_ref[...], 0.0)
    yh2 = jnp.dot(h2h, w2hg_ref[...],
                  preferred_element_type=jnp.float32) + b2hg_ref[...]

    # Residual (x == y after norm1) + LayerNorm2.
    z = y + yl2 + yh2
    mu = jnp.mean(z, axis=-1, keepdims=True)
    var = jnp.mean(jnp.square(z - mu), axis=-1, keepdims=True)
    o_ref[...] = ((z - mu) * lax.rsqrt(var + eps) * g2_ref[...]
                  + beta2_ref[...]).astype(o_ref.dtype)


def _pick_tile_m(M, target=256):
    """Largest multiple-of-8 divisor of M that is <= target (full M otherwise)."""
    if M <= target:
        return M
    best = None
    t = 8
    while t <= target:
        if M % t == 0:
            best = t
        t += 8
    return best if best is not None else M


def freq_ffn_gate_norm2(y2d, p, *, eps=_LN_EPS, tile_m=None):
    M, D = y2d.shape
    tm = tile_m if tile_m is not None else _pick_tile_m(M)
    if M % tm != 0 or (tm != M and tm % 8 != 0):
        tm = M
    grid = (M // tm,)

    weights = [p["w1l"], p["b1l"], p["w2l"], p["b2l"],
               p["w1h"], p["b1h"], p["w2h"], p["b2h"],
               p["wgl"], p["bgl"], p["wgh"], p["bgh"],
               p["w1lo"], p["b1lo"], p["w2lo"], p["b2lo"],
               p["w1hg"], p["b1hg"], p["w2hg"], p["b2hg"],
               p["g2"], p["beta2"]]

    in_specs = ([pl.BlockSpec((tm, D), lambda i: (i, 0))]
                + [pl.BlockSpec(w.shape, lambda i: (0, 0)) for w in weights])

    return pl.pallas_call(
        functools.partial(_freq_ffn_gate_norm2_kernel, eps=eps),
        out_shape=jax.ShapeDtypeStruct((M, D), y2d.dtype),
        grid=grid,
        in_specs=in_specs,
        out_specs=pl.BlockSpec((tm, D), lambda i: (i, 0)),
        compiler_params=pltpu.CompilerParams(
            dimension_semantics=("parallel",),
            vmem_limit_bytes=_VMEM_LIMIT),
    )(y2d, *weights)


# ------------------------------ layer forward --------------------------------

def encoder_layer_forward(x, params, *, tile_m=None):
    B, L, D = x.shape
    y, attn = attention_norm1(x, params["wqkv"], params["bqkv"],
                              params["g1"], params["b1"])
    out2d = freq_ffn_gate_norm2(y.reshape(B * L, D), params, tile_m=tile_m)
    return out2d.reshape(B, L, D), attn


# ------------------------------ parameter init --------------------------------

def _band_projection_matrices(d_model):
    """Real (D, D) matrices M s.t. y @ M == Re(ifft(mask * fft(y, -1), -1))."""
    lfe = d_model // 2 // 4
    mask_low = np.zeros(d_model, np.float32)
    mask_high = np.zeros(d_model, np.float32)
    # Same (negative-index) slicing as the PyTorch reference.
    mask_low[:lfe] = 1.0
    mask_low[-lfe:] = 1.0
    mask_high[lfe:d_model // 2] = 1.0
    mask_high[d_model // 2:-lfe] = 1.0
    eye = np.eye(d_model, dtype=np.complex64)
    fft_eye = np.fft.fft(eye, axis=-1)
    m_low = np.real(np.fft.ifft(fft_eye * mask_low[None, :], axis=-1))
    m_high = np.real(np.fft.ifft(fft_eye * mask_high[None, :], axis=-1))
    return (jnp.asarray(m_low, jnp.float32), jnp.asarray(m_high, jnp.float32))


def init_params(key, d_model, d_ff):
    def dense(k, fi, fo, scale=0.02):
        return jax.random.normal(k, (fi, fo), jnp.float32) * scale

    ks = jax.random.split(key, 13)
    wq = dense(ks[0], d_model, d_model)
    wk = dense(ks[1], d_model, d_model)
    wv = dense(ks[2], d_model, d_model)
    w1_low = dense(ks[3], d_model, d_ff)
    w2_low = dense(ks[4], d_ff, d_model)
    w1_high = dense(ks[5], d_model, d_ff)
    w2_high = dense(ks[6], d_ff, d_model)
    wg_low = dense(ks[7], d_model, d_model)
    wg_high = dense(ks[8], d_model, d_model)
    w1_lo = dense(ks[9], d_model, d_ff)
    w2_lo = dense(ks[10], d_ff, d_model)
    w1_hig = dense(ks[11], d_model, d_ff)
    w2_hig = dense(ks[12], d_ff, d_model)

    m_low, m_high = _band_projection_matrices(d_model)

    zD = jnp.zeros((1, d_model), jnp.float32)
    zF = jnp.zeros((1, d_ff), jnp.float32)
    oneD = jnp.ones((1, d_model), jnp.float32)

    return dict(
        # fused QKV projection
        wqkv=jnp.concatenate([wq, wk, wv], axis=1),          # (D, 3D)
        bqkv=jnp.zeros((1, 3 * d_model), jnp.float32),
        g1=oneD, b1=zD,
        # first FFN pair with the FFT band projection folded into conv1
        w1l=m_low @ w1_low, b1l=zF, w2l=w2_low, b2l=zD,
        w1h=m_high @ w1_high, b1h=zF, w2h=w2_high, b2h=zD,
        # GateFusion
        wgl=wg_low, bgl=zD, wgh=wg_high, bgh=zD,
        # second FFN pair
        w1lo=w1_lo, b1lo=zF, w2lo=w2_lo, b2lo=zD,
        w1hg=w1_hig, b1hg=zF, w2hg=w2_hig, b2hg=zD,
        # norm2
        g2=oneD, beta2=zD,
    )


# ----------------------------------- main -------------------------------------

if __name__ == "__main__":
    B, L = 2, 16
    d_model, d_ff = 32, 128      # d_ff = 4 * d_model (reference default)

    key = jax.random.PRNGKey(0)
    kx, kp = jax.random.split(key)
    x = jax.random.normal(kx, (B, L, d_model), jnp.float32)
    params = init_params(kp, d_model, d_ff)

    # tile_m=16 just to exercise the multi-step pipelined grid at toy sizes;
    # at production sizes the auto-picker uses up to 256-row tiles.
    fwd = jax.jit(functools.partial(encoder_layer_forward, tile_m=16))
    out, attn = fwd(x, params)
    jax.block_until_ready((out, attn))

    assert out.shape == (B, L, d_model), out.shape
    assert attn.shape == (B, L, L), attn.shape
    assert bool(jnp.all(jnp.isfinite(out)))
    assert bool(jnp.all(jnp.isfinite(attn)))
    print("KERNEL_OK")
</pallas_src>

<mosaic_0001>
module attributes {stable_mosaic.version = 11 : i64} {
  func.func @_attn_norm1_kernel(%arg0: i32, %arg1: memref<1x16x32xf32, #tpu.memory_space<vmem>>, %arg2: memref<32x96xf32, #tpu.memory_space<vmem>>, %arg3: memref<1x96xf32, #tpu.memory_space<vmem>>, %arg4: memref<1x32xf32, #tpu.memory_space<vmem>>, %arg5: memref<1x32xf32, #tpu.memory_space<vmem>>, %arg6: memref<1x16x32xf32, #tpu.memory_space<vmem>>, %arg7: memref<1x16x16xf32, #tpu.memory_space<vmem>>) attributes {dimension_semantics = [#tpu.dimension_semantics<parallel>], iteration_bounds = array<i64: 2>, scalar_prefetch = 0 : i64, scratch_operands = 0 : i64, tpu.core_type = #tpu.core_type<tc>, window_params = [{transform_indices = @transform_0, window_bounds = array<i64: 1, 16, 32>}, {pipeline_mode = #tpu.pipeline_mode<synchronous>, transform_indices = @transform_1, window_bounds = array<i64: 32, 96>}, {pipeline_mode = #tpu.pipeline_mode<synchronous>, transform_indices = @transform_2, window_bounds = array<i64: 1, 96>}, {pipeline_mode = #tpu.pipeline_mode<synchronous>, transform_indices = @transform_3, window_bounds = array<i64: 1, 32>}, {pipeline_mode = #tpu.pipeline_mode<synchronous>, transform_indices = @transform_4, window_bounds = array<i64: 1, 32>}, {transform_indices = @transform_5, window_bounds = array<i64: 1, 16, 32>}, {transform_indices = @transform_6, window_bounds = array<i64: 1, 16, 16>}]} {
    %c0 = arith.constant 0 : index
    %c0_0 = arith.constant 0 : index
    %c0_1 = arith.constant 0 : index
    %0 = vector.load %arg1[%c0, %c0_0, %c0_1] : memref<1x16x32xf32, #tpu.memory_space<vmem>>, vector<1x16x32xf32>
    %1 = vector.shape_cast %0 : vector<1x16x32xf32> to vector<16x32xf32>
    %c0_2 = arith.constant 0 : index
    %c0_3 = arith.constant 0 : index
    %2 = vector.load %arg2[%c0_2, %c0_3] : memref<32x96xf32, #tpu.memory_space<vmem>>, vector<32x96xf32>
    %cst = arith.constant dense<0.000000e+00> : vector<16x96xf32>
    %3 = tpu.matmul %1, %2, %cst {dimension_numbers = #tpu.dot_dimension_numbers<[1], [0], [0], [1], [0, 0, 1, 1], [], []>} : vector<16x32xf32>, vector<32x96xf32>, vector<16x96xf32> -> vector<16x96xf32>
    %c0_4 = arith.constant 0 : index
    %c0_5 = arith.constant 0 : index
    %4 = vector.load %arg3[%c0_4, %c0_5] : memref<1x96xf32, #tpu.memory_space<vmem>>, vector<1x96xf32>
    %5 = vector.broadcast %4 : vector<1x96xf32> to vector<16x96xf32>
    %6 = arith.addf %3, %5 : vector<16x96xf32>
    %7 = vector.extract_strided_slice %6 {offsets = [0, 0], sizes = [16, 32], strides = [1, 1]} : vector<16x96xf32> to vector<16x32xf32>
    %8 = vector.extract_strided_slice %6 {offsets = [0, 32], sizes = [16, 32], strides = [1, 1]} : vector<16x96xf32> to vector<16x32xf32>
    %9 = vector.extract_strided_slice %6 {offsets = [0, 64], sizes = [16, 32], strides = [1, 1]} : vector<16x96xf32> to vector<16x32xf32>
    %cst_6 = arith.constant dense<0.000000e+00> : vector<16x16xf32>
    %10 = tpu.matmul %7, %8, %cst_6 {dimension_numbers = #tpu.dot_dimension_numbers<[1], [1], [0], [0], [0, 0, 1, 0], [], []>} : vector<16x32xf32>, vector<16x32xf32>, vector<16x16xf32> -> vector<16x16xf32>
    %cst_7 = arith.constant 0.000000e+00 : f32
    %11 = vector.broadcast %cst_7 : f32 to vector<16x16xf32>
    %12 = arith.maximumf %10, %11 : vector<16x16xf32>
    %13 = arith.mulf %12, %12 : vector<16x16xf32>
    %cst_8 = arith.constant dense<0.000000e+00> : vector<16xf32>
    %14 = vector.multi_reduction <add>, %13, %cst_8 [1] : vector<16x16xf32> to vector<16xf32>
    %15 = vector.shape_cast %14 : vector<16xf32> to vector<16x1xf32>
    %cst_9 = arith.constant 9.99999971E-10 : f32
    %16 = vector.broadcast %cst_9 : f32 to vector<16x1xf32>
    %17 = arith.addf %15, %16 : vector<16x1xf32>
    %18 = tpu.reciprocal %17 {approx = true} : vector<16x1xf32> -> vector<16x1xf32>
    %19 = vector.broadcast %18 : vector<16x1xf32> to vector<16x16xf32>
    %20 = arith.mulf %13, %19 : vector<16x16xf32>
    %cst_10 = arith.constant dense<0.000000e+00> : vector<16x32xf32>
    %21 = tpu.matmul %20, %9, %cst_10 {dimension_numbers = #tpu.dot_dimension_numbers<[1], [0], [0], [1], [0, 0, 1, 1], [], []>} : vector<16x16xf32>, vector<16x32xf32>, vector<16x32xf32> -> vector<16x32xf32>
    %22 = arith.addf %1, %21 : vector<16x32xf32>
    %cst_11 = arith.constant dense<0.000000e+00> : vector<16xf32>
    %23 = vector.multi_reduction <add>, %22, %cst_11 [1] : vector<16x32xf32> to vector<16xf32>
    %24 = vector.shape_cast %23 : vector<16xf32> to vector<16x1xf32>
    %cst_12 = arith.constant 3.200000e+01 : f32
    %25 = vector.broadcast %cst_12 : f32 to vector<16x1xf32>
    %26 = arith.divf %24, %25 : vector<16x1xf32>
    %27 = vector.broadcast %26 : vector<16x1xf32> to vector<16x32xf32>
    %28 = arith.subf %22, %27 : vector<16x32xf32>
    %29 = arith.mulf %28, %28 : vector<16x32xf32>
    %cst_13 = arith.constant dense<0.000000e+00> : vector<16xf32>
    %30 = vector.multi_reduction <add>, %29, %cst_13 [1] : vector<16x32xf32> to vector<16xf32>
    %31 = vector.shape_cast %30 : vector<16xf32> to vector<16x1xf32>
    %cst_14 = arith.constant 3.200000e+01 : f32
    %32 = vector.broadcast %cst_14 : f32 to vector<16x1xf32>
    %33 = arith.divf %31, %32 : vector<16x1xf32>
    %34 = vector.broadcast %26 : vector<16x1xf32> to vector<16x32xf32>
    %35 = arith.subf %22, %34 : vector<16x32xf32>
    %cst_15 = arith.constant 9.99999974E-6 : f32
    %36 = vector.broadcast %cst_15 : f32 to vector<16x1xf32>
    %37 = arith.addf %33, %36 : vector<16x1xf32>
    %38 = math.rsqrt %37 : vector<16x1xf32>
    %39 = vector.broadcast %38 : vector<16x1xf32> to vector<16x32xf32>
    %40 = arith.mulf %35, %39 : vector<16x32xf32>
    %c0_16 = arith.constant 0 : index
    %c0_17 = arith.constant 0 : index
    %41 = vector.load %arg4[%c0_16, %c0_17] : memref<1x32xf32, #tpu.memory_space<vmem>>, vector<1x32xf32>
    %42 = vector.broadcast %41 : vector<1x32xf32> to vector<16x32xf32>
    %43 = arith.mulf %40, %42 : vector<16x32xf32>
    %c0_18 = arith.constant 0 : index
    %c0_19 = arith.constant 0 : index
    %44 = vector.load %arg5[%c0_18, %c0_19] : memref<1x32xf32, #tpu.memory_space<vmem>>, vector<1x32xf32>
    %45 = vector.broadcast %44 : vector<1x32xf32> to vector<16x32xf32>
    %46 = arith.addf %43, %45 : vector<16x32xf32>
    %c0_20 = arith.constant 0 : index
    %c0_21 = arith.constant 0 : index
    %c0_22 = arith.constant 0 : index
    %47 = vector.load %arg6[%c0_20, %c0_21, %c0_22] : memref<1x16x32xf32, #tpu.memory_space<vmem>>, vector<1x16x32xf32>
    %48 = vector.shape_cast %47 : vector<1x16x32xf32> to vector<16x32xf32>
    %49 = vector.shape_cast %46 : vector<16x32xf32> to vector<1x16x32xf32>
    tpu.vector_store %arg6[%c0_20, %c0_21, %c0_22], %49 {strides = array<i32>} : memref<1x16x32xf32, #tpu.memory_space<vmem>>, vector<1x16x32xf32>,
    %c0_23 = arith.constant 0 : index
    %c0_24 = arith.constant 0 : index
    %c0_25 = arith.constant 0 : index
    %50 = vector.load %arg7[%c0_23, %c0_24, %c0_25] : memref<1x16x16xf32, #tpu.memory_space<vmem>>, vector<1x16x16xf32>
    %51 = vector.shape_cast %50 : vector<1x16x16xf32> to vector<16x16xf32>
    %52 = vector.shape_cast %20 : vector<16x16xf32> to vector<1x16x16xf32>
    tpu.vector_store %arg7[%c0_23, %c0_24, %c0_25], %52 {strides = array<i32>} : memref<1x16x16xf32, #tpu.memory_space<vmem>>, vector<1x16x16xf32>,
    return
  }
  func.func @transform_0(%arg0: i32) -> (i32, i32, i32) {
    %c0_i32 = arith.constant 0 : i32
    %c0_i32_0 = arith.constant 0 : i32
    %c0_i32_1 = arith.constant 0 : i32
    return %arg0, %c0_i32, %c0_i32_0 : i32, i32, i32
  }
  func.func @transform_1(%arg0: i32) -> (i32, i32) {
    %c0_i32 = arith.constant 0 : i32
    %c0_i32_0 = arith.constant 0 : i32
    %c0_i32_1 = arith.constant 0 : i32
    return %c0_i32, %c0_i32_0 : i32, i32
  }
  func.func @transform_2(%arg0: i32) -> (i32, i32) {
    %c0_i32 = arith.constant 0 : i32
    %c0_i32_0 = arith.constant 0 : i32
    %c0_i32_1 = arith.constant 0 : i32
    return %c0_i32, %c0_i32_0 : i32, i32
  }
  func.func @transform_3(%arg0: i32) -> (i32, i32) {
    %c0_i32 = arith.constant 0 : i32
    %c0_i32_0 = arith.constant 0 : i32
    %c0_i32_1 = arith.constant 0 : i32
    return %c0_i32, %c0_i32_0 : i32, i32
  }
  func.func @transform_4(%arg0: i32) -> (i32, i32) {
    %c0_i32 = arith.constant 0 : i32
    %c0_i32_0 = arith.constant 0 : i32
    %c0_i32_1 = arith.constant 0 : i32
    return %c0_i32, %c0_i32_0 : i32, i32
  }
  func.func @transform_5(%arg0: i32) -> (i32, i32, i32) {
    %c0_i32 = arith.constant 0 : i32
    %c0_i32_0 = arith.constant 0 : i32
    %c0_i32_1 = arith.constant 0 : i32
    return %arg0, %c0_i32, %c0_i32_0 : i32, i32, i32
  }
  func.func @transform_6(%arg0: i32) -> (i32, i32, i32) {
    %c0_i32 = arith.constant 0 : i32
    %c0_i32_0 = arith.constant 0 : i32
    %c0_i32_1 = arith.constant 0 : i32
    return %arg0, %c0_i32, %c0_i32_0 : i32, i32, i32
  }
}

module attributes {stable_mosaic.version = 11 : i64} {
  func.func @_freq_ffn_gate_norm2_kernel(%arg0: i32, %arg1: memref<16x32xf32, #tpu.memory_space<vmem>>, %arg2: memref<32x128xf32, #tpu.memory_space<vmem>>, %arg3: memref<1x128xf32, #tpu.memory_space<vmem>>, %arg4: memref<128x32xf32, #tpu.memory_space<vmem>>, %arg5: memref<1x32xf32, #tpu.memory_space<vmem>>, %arg6: memref<32x128xf32, #tpu.memory_space<vmem>>, %arg7: memref<1x128xf32, #tpu.memory_space<vmem>>, %arg8: memref<128x32xf32, #tpu.memory_space<vmem>>, %arg9: memref<1x32xf32, #tpu.memory_space<vmem>>, %arg10: memref<32x32xf32, #tpu.memory_space<vmem>>, %arg11: memref<1x32xf32, #tpu.memory_space<vmem>>, %arg12: memref<32x32xf32, #tpu.memory_space<vmem>>, %arg13: memref<1x32xf32, #tpu.memory_space<vmem>>, %arg14: memref<32x128xf32, #tpu.memory_space<vmem>>, %arg15: memref<1x128xf32, #tpu.memory_space<vmem>>, %arg16: memref<128x32xf32, #tpu.memory_space<vmem>>, %arg17: memref<1x32xf32, #tpu.memory_space<vmem>>, %arg18: memref<32x128xf32, #tpu.memory_space<vmem>>, %arg19: memref<1x128xf32, #tpu.memory_space<vmem>>, %arg20: memref<128x32xf32, #tpu.memory_space<vmem>>, %arg21: memref<1x32xf32, #tpu.memory_space<vmem>>, %arg22: memref<1x32xf32, #tpu.memory_space<vmem>>, %arg23: memref<1x32xf32, #tpu.memory_space<vmem>>, %arg24: memref<16x32xf32, #tpu.memory_space<vmem>>) attributes {dimension_semantics = [#tpu.dimension_semantics<parallel>], iteration_bounds = array<i64: 2>, scalar_prefetch = 0 : i64, scratch_operands = 0 : i64, tpu.core_type = #tpu.core_type<tc>, window_params = [{transform_indices = @transform_0, window_bounds = array<i64: 16, 32>}, {pipeline_mode = #tpu.pipeline_mode<synchronous>, transform_indices = @transform_1, window_bounds = array<i64: 32, 128>}, {pipeline_mode = #tpu.pipeline_mode<synchronous>, transform_indices = @transform_2, window_bounds = array<i64: 1, 128>}, {pipeline_mode = #tpu.pipeline_mode<synchronous>, transform_indices = @transform_3, window_bounds = array<i64: 128, 32>}, {pipeline_mode = #tpu.pipeline_mode<synchronous>, transform_indices = @transform_4, window_bounds = array<i64: 1, 32>}, {pipeline_mode = #tpu.pipeline_mode<synchronous>, transform_indices = @transform_5, window_bounds = array<i64: 32, 128>}, {pipeline_mode = #tpu.pipeline_mode<synchronous>, transform_indices = @transform_6, window_bounds = array<i64: 1, 128>}, {pipeline_mode = #tpu.pipeline_mode<synchronous>, transform_indices = @transform_7, window_bounds = array<i64: 128, 32>}, {pipeline_mode = #tpu.pipeline_mode<synchronous>, transform_indices = @transform_8, window_bounds = array<i64: 1, 32>}, {pipeline_mode = #tpu.pipeline_mode<synchronous>, transform_indices = @transform_9, window_bounds = array<i64: 32, 32>}, {pipeline_mode = #tpu.pipeline_mode<synchronous>, transform_indices = @transform_10, window_bounds = array<i64: 1, 32>}, {pipeline_mode = #tpu.pipeline_mode<synchronous>, transform_indices = @transform_11, window_bounds = array<i64: 32, 32>}, {pipeline_mode = #tpu.pipeline_mode<synchronous>, transform_indices = @transform_12, window_bounds = array<i64: 1, 32>}, {pipeline_mode = #tpu.pipeline_mode<synchronous>, transform_indices = @transform_13, window_bounds = array<i64: 32, 128>}, {pipeline_mode = #tpu.pipeline_mode<synchronous>, transform_indices = @transform_14, window_bounds = array<i64: 1, 128>}, {pipeline_mode = #tpu.pipeline_mode<synchronous>, transform_indices = @transform_15, window_bounds = array<i64: 128, 32>}, {pipeline_mode = #tpu.pipeline_mode<synchronous>, transform_indices = @transform_16, window_bounds = array<i64: 1, 32>}, {pipeline_mode = #tpu.pipeline_mode<synchronous>, transform_indices = @transform_17, window_bounds = array<i64: 32, 128>}, {pipeline_mode = #tpu.pipeline_mode<synchronous>, transform_indices = @transform_18, window_bounds = array<i64: 1, 128>}, {pipeline_mode = #tpu.pipeline_mode<synchronous>, transform_indices = @transform_19, window_bounds = array<i64: 128, 32>}, {pipeline_mode = #tpu.pipeline_mode<synchronous>, transform_indices = @transform_20, window_bounds = array<i64: 1, 32>}, {pipeline_mode = #tpu.pipeline_mode<synchronous>, transform_indices = @transform_21, window_bounds = array<i64: 1, 32>}, {pipeline_mode = #tpu.pipeline_mode<synchronous>, transform_indices = @transform_22, window_bounds = array<i64: 1, 32>}, {transform_indices = @transform_23, window_bounds = array<i64: 16, 32>}]} {
    %c0 = arith.constant 0 : index
    %c0_0 = arith.constant 0 : index
    %0 = vector.load %arg1[%c0, %c0_0] : memref<16x32xf32, #tpu.memory_space<vmem>>, vector<16x32xf32>
    %c0_1 = arith.constant 0 : index
    %c0_2 = arith.constant 0 : index
    %1 = vector.load %arg2[%c0_1, %c0_2] : memref<32x128xf32, #tpu.memory_space<vmem>>, vector<32x128xf32>
    %cst = arith.constant dense<0.000000e+00> : vector<16x128xf32>
    %2 = tpu.matmul %0, %1, %cst {dimension_numbers = #tpu.dot_dimension_numbers<[1], [0], [0], [1], [0, 0, 1, 1], [], []>} : vector<16x32xf32>, vector<32x128xf32>, vector<16x128xf32> -> vector<16x128xf32>
    %c0_3 = arith.constant 0 : index
    %c0_4 = arith.constant 0 : index
    %3 = vector.load %arg3[%c0_3, %c0_4] : memref<1x128xf32, #tpu.memory_space<vmem>>, vector<1x128xf32>
    %4 = vector.broadcast %3 : vector<1x128xf32> to vector<16x128xf32>
    %5 = arith.addf %2, %4 : vector<16x128xf32>
    %cst_5 = arith.constant 0.000000e+00 : f32
    %6 = vector.broadcast %cst_5 : f32 to vector<16x128xf32>
    %7 = arith.maximumf %5, %6 : vector<16x128xf32>
    %c0_6 = arith.constant 0 : index
    %c0_7 = arith.constant 0 : index
    %8 = vector.load %arg4[%c0_6, %c0_7] : memref<128x32xf32, #tpu.memory_space<vmem>>, vector<128x32xf32>
    %cst_8 = arith.constant dense<0.000000e+00> : vector<16x32xf32>
    %9 = tpu.matmul %7, %8, %cst_8 {dimension_numbers = #tpu.dot_dimension_numbers<[1], [0], [0], [1], [0, 0, 1, 1], [], []>} : vector<16x128xf32>, vector<128x32xf32>, vector<16x32xf32> -> vector<16x32xf32>
    %c0_9 = arith.constant 0 : index
    %c0_10 = arith.constant 0 : index
    %10 = vector.load %arg5[%c0_9, %c0_10] : memref<1x32xf32, #tpu.memory_space<vmem>>, vector<1x32xf32>
    %11 = vector.broadcast %10 : vector<1x32xf32> to vector<16x32xf32>
    %12 = arith.addf %9, %11 : vector<16x32xf32>
    %c0_11 = arith.constant 0 : index
    %c0_12 = arith.constant 0 : index
    %13 = vector.load %arg6[%c0_11, %c0_12] : memref<32x128xf32, #tpu.memory_space<vmem>>, vector<32x128xf32>
    %cst_13 = arith.constant dense<0.000000e+00> : vector<16x128xf32>
    %14 = tpu.matmul %0, %13, %cst_13 {dimension_numbers = #tpu.dot_dimension_numbers<[1], [0], [0], [1], [0, 0, 1, 1], [], []>} : vector<16x32xf32>, vector<32x128xf32>, vector<16x128xf32> -> vector<16x128xf32>
    %c0_14 = arith.constant 0 : index
    %c0_15 = arith.constant 0 : index
    %15 = vector.load %arg7[%c0_14, %c0_15] : memref<1x128xf32, #tpu.memory_space<vmem>>, vector<1x128xf32>
    %16 = vector.broadcast %15 : vector<1x128xf32> to vector<16x128xf32>
    %17 = arith.addf %14, %16 : vector<16x128xf32>
    %cst_16 = arith.constant 0.000000e+00 : f32
    %18 = vector.broadcast %cst_16 : f32 to vector<16x128xf32>
    %19 = arith.maximumf %17, %18 : vector<16x128xf32>
    %c0_17 = arith.constant 0 : index
    %c0_18 = arith.constant 0 : index
    %20 = vector.load %arg8[%c0_17, %c0_18] : memref<128x32xf32, #tpu.memory_space<vmem>>, vector<128x32xf32>
    %cst_19 = arith.constant dense<0.000000e+00> : vector<16x32xf32>
    %21 = tpu.matmul %19, %20, %cst_19 {dimension_numbers = #tpu.dot_dimension_numbers<[1], [0], [0], [1], [0, 0, 1, 1], [], []>} : vector<16x128xf32>, vector<128x32xf32>, vector<16x32xf32> -> vector<16x32xf32>
    %c0_20 = arith.constant 0 : index
    %c0_21 = arith.constant 0 : index
    %22 = vector.load %arg9[%c0_20, %c0_21] : memref<1x32xf32, #tpu.memory_space<vmem>>, vector<1x32xf32>
    %23 = vector.broadcast %22 : vector<1x32xf32> to vector<16x32xf32>
    %24 = arith.addf %21, %23 : vector<16x32xf32>
    %c0_22 = arith.constant 0 : index
    %c0_23 = arith.constant 0 : index
    %25 = vector.load %arg10[%c0_22, %c0_23] : memref<32x32xf32, #tpu.memory_space<vmem>>, vector<32x32xf32>
    %cst_24 = arith.constant dense<0.000000e+00> : vector<16x32xf32>
    %26 = tpu.matmul %12, %25, %cst_24 {dimension_numbers = #tpu.dot_dimension_numbers<[1], [0], [0], [1], [0, 0, 1, 1], [], []>} : vector<16x32xf32>, vector<32x32xf32>, vector<16x32xf32> -> vector<16x32xf32>
    %c0_25 = arith.constant 0 : index
    %c0_26 = arith.constant 0 : index
    %27 = vector.load %arg11[%c0_25, %c0_26] : memref<1x32xf32, #tpu.memory_space<vmem>>, vector<1x32xf32>
    %28 = vector.broadcast %27 : vector<1x32xf32> to vector<16x32xf32>
    %29 = arith.addf %26, %28 : vector<16x32xf32>
    %cst_27 = arith.constant 0.000000e+00 : f32
    %30 = vector.broadcast %cst_27 : f32 to vector<16x32xf32>
    %31 = arith.subf %30, %29 : vector<16x32xf32>
    %32 = math.exp %31 : vector<16x32xf32>
    %cst_28 = arith.constant 1.000000e+00 : f32
    %33 = vector.broadcast %cst_28 : f32 to vector<16x32xf32>
    %34 = arith.addf %33, %32 : vector<16x32xf32>
    %cst_29 = arith.constant 1.000000e+00 : f32
    %35 = vector.broadcast %cst_29 : f32 to vector<16x32xf32>
    %36 = arith.divf %35, %34 : vector<16x32xf32>
    %c0_30 = arith.constant 0 : index
    %c0_31 = arith.constant 0 : index
    %37 = vector.load %arg12[%c0_30, %c0_31] : memref<32x32xf32, #tpu.memory_space<vmem>>, vector<32x32xf32>
    %cst_32 = arith.constant dense<0.000000e+00> : vector<16x32xf32>
    %38 = tpu.matmul %24, %37, %cst_32 {dimension_numbers = #tpu.dot_dimension_numbers<[1], [0], [0], [1], [0, 0, 1, 1], [], []>} : vector<16x32xf32>, vector<32x32xf32>, vector<16x32xf32> -> vector<16x32xf32>
    %c0_33 = arith.constant 0 : index
    %c0_34 = arith.constant 0 : index
    %39 = vector.load %arg13[%c0_33, %c0_34] : memref<1x32xf32, #tpu.memory_space<vmem>>, vector<1x32xf32>
    %40 = vector.broadcast %39 : vector<1x32xf32> to vector<16x32xf32>
    %41 = arith.addf %38, %40 : vector<16x32xf32>
    %cst_35 = arith.constant 0.000000e+00 : f32
    %42 = vector.broadcast %cst_35 : f32 to vector<16x32xf32>
    %43 = arith.subf %42, %41 : vector<16x32xf32>
    %44 = math.exp %43 : vector<16x32xf32>
    %cst_36 = arith.constant 1.000000e+00 : f32
    %45 = vector.broadcast %cst_36 : f32 to vector<16x32xf32>
    %46 = arith.addf %45, %44 : vector<16x32xf32>
    %cst_37 = arith.constant 1.000000e+00 : f32
    %47 = vector.broadcast %cst_37 : f32 to vector<16x32xf32>
    %48 = arith.divf %47, %46 : vector<16x32xf32>
    %49 = arith.mulf %36, %12 : vector<16x32xf32>
    %cst_38 = arith.constant 1.000000e+00 : f32
    %50 = vector.broadcast %cst_38 : f32 to vector<16x32xf32>
    %51 = arith.subf %50, %36 : vector<16x32xf32>
    %52 = arith.mulf %51, %24 : vector<16x32xf32>
    %53 = arith.addf %49, %52 : vector<16x32xf32>
    %54 = arith.mulf %48, %24 : vector<16x32xf32>
    %cst_39 = arith.constant 1.000000e+00 : f32
    %55 = vector.broadcast %cst_39 : f32 to vector<16x32xf32>
    %56 = arith.subf %55, %48 : vector<16x32xf32>
    %57 = arith.mulf %56, %12 : vector<16x32xf32>
    %58 = arith.addf %54, %57 : vector<16x32xf32>
    %c0_40 = arith.constant 0 : index
    %c0_41 = arith.constant 0 : index
    %59 = vector.load %arg14[%c0_40, %c0_41] : memref<32x128xf32, #tpu.memory_space<vmem>>, vector<32x128xf32>
    %cst_42 = arith.constant dense<0.000000e+00> : vector<16x128xf32>
    %60 = tpu.matmul %53, %59, %cst_42 {dimension_numbers = #tpu.dot_dimension_numbers<[1], [0], [0], [1], [0, 0, 1, 1], [], []>} : vector<16x32xf32>, vector<32x128xf32>, vector<16x128xf32> -> vector<16x128xf32>
    %c0_43 = arith.constant 0 : index
    %c0_44 = arith.constant 0 : index
    %61 = vector.load %arg15[%c0_43, %c0_44] : memref<1x128xf32, #tpu.memory_space<vmem>>, vector<1x128xf32>
    %62 = vector.broadcast %61 : vector<1x128xf32> to vector<16x128xf32>
    %63 = arith.addf %60, %62 : vector<16x128xf32>
    %cst_45 = arith.constant 0.000000e+00 : f32
    %64 = vector.broadcast %cst_45 : f32 to vector<16x128xf32>
    %65 = arith.maximumf %63, %64 : vector<16x128xf32>
    %c0_46 = arith.constant 0 : index
    %c0_47 = arith.constant 0 : index
    %66 = vector.load %arg16[%c0_46, %c0_47] : memref<128x32xf32, #tpu.memory_space<vmem>>, vector<128x32xf32>
    %cst_48 = arith.constant dense<0.000000e+00> : vector<16x32xf32>
    %67 = tpu.matmul %65, %66, %cst_48 {dimension_numbers = #tpu.dot_dimension_numbers<[1], [0], [0], [1], [0, 0, 1, 1], [], []>} : vector<16x128xf32>, vector<128x32xf32>, vector<16x32xf32> -> vector<16x32xf32>
    %c0_49 = arith.constant 0 : index
    %c0_50 = arith.constant 0 : index
    %68 = vector.load %arg17[%c0_49, %c0_50] : memref<1x32xf32, #tpu.memory_space<vmem>>, vector<1x32xf32>
    %69 = vector.broadcast %68 : vector<1x32xf32> to vector<16x32xf32>
    %70 = arith.addf %67, %69 : vector<16x32xf32>
    %c0_51 = arith.constant 0 : index
    %c0_52 = arith.constant 0 : index
    %71 = vector.load %arg18[%c0_51, %c0_52] : memref<32x128xf32, #tpu.memory_space<vmem>>, vector<32x128xf32>
    %cst_53 = arith.constant dense<0.000000e+00> : vector<16x128xf32>
    %72 = tpu.matmul %58, %71, %cst_53 {dimension_numbers = #tpu.dot_dimension_numbers<[1], [0], [0], [1], [0, 0, 1, 1], [], []>} : vector<16x32xf32>, vector<32x128xf32>, vector<16x128xf32> -> vector<16x128xf32>
    %c0_54 = arith.constant 0 : index
    %c0_55 = arith.constant 0 : index
    %73 = vector.load %arg19[%c0_54, %c0_55] : memref<1x128xf32, #tpu.memory_space<vmem>>, vector<1x128xf32>
    %74 = vector.broadcast %73 : vector<1x128xf32> to vector<16x128xf32>
    %75 = arith.addf %72, %74 : vector<16x128xf32>
    %cst_56 = arith.constant 0.000000e+00 : f32
    %76 = vector.broadcast %cst_56 : f32 to vector<16x128xf32>
    %77 = arith.maximumf %75, %76 : vector<16x128xf32>
    %c0_57 = arith.constant 0 : index
    %c0_58 = arith.constant 0 : index
    %78 = vector.load %arg20[%c0_57, %c0_58] : memref<128x32xf32, #tpu.memory_space<vmem>>, vector<128x32xf32>
    %cst_59 = arith.constant dense<0.000000e+00> : vector<16x32xf32>
    %79 = tpu.matmul %77, %78, %cst_59 {dimension_numbers = #tpu.dot_dimension_numbers<[1], [0], [0], [1], [0, 0, 1, 1], [], []>} : vector<16x128xf32>, vector<128x32xf32>, vector<16x32xf32> -> vector<16x32xf32>
    %c0_60 = arith.constant 0 : index
    %c0_61 = arith.constant 0 : index
    %80 = vector.load %arg21[%c0_60, %c0_61] : memref<1x32xf32, #tpu.memory_space<vmem>>, vector<1x32xf32>
    %81 = vector.broadcast %80 : vector<1x32xf32> to vector<16x32xf32>
    %82 = arith.addf %79, %81 : vector<16x32xf32>
    %83 = arith.addf %0, %70 : vector<16x32xf32>
    %84 = arith.addf %83, %82 : vector<16x32xf32>
    %cst_62 = arith.constant dense<0.000000e+00> : vector<16xf32>
    %85 = vector.multi_reduction <add>, %84, %cst_62 [1] : vector<16x32xf32> to vector<16xf32>
    %86 = vector.shape_cast %85 : vector<16xf32> to vector<16x1xf32>
    %cst_63 = arith.constant 3.200000e+01 : f32
    %87 = vector.broadcast %cst_63 : f32 to vector<16x1xf32>
    %88 = arith.divf %86, %87 : vector<16x1xf32>
    %89 = vector.broadcast %88 : vector<16x1xf32> to vector<16x32xf32>
    %90 = arith.subf %84, %89 : vector<16x32xf32>
    %91 = arith.mulf %90, %90 : vector<16x32xf32>
    %cst_64 = arith.constant dense<0.000000e+00> : vector<16xf32>
    %92 = vector.multi_reduction <add>, %91, %cst_64 [1] : vector<16x32xf32> to vector<16xf32>
    %93 = vector.shape_cast %92 : vector<16xf32> to vector<16x1xf32>
    %cst_65 = arith.constant 3.200000e+01 : f32
    %94 = vector.broadcast %cst_65 : f32 to vector<16x1xf32>
    %95 = arith.divf %93, %94 : vector<16x1xf32>
    %96 = vector.broadcast %88 : vector<16x1xf32> to vector<16x32xf32>
    %97 = arith.subf %84, %96 : vector<16x32xf32>
    %cst_66 = arith.constant 9.99999974E-6 : f32
    %98 = vector.broadcast %cst_66 : f32 to vector<16x1xf32>
    %99 = arith.addf %95, %98 : vector<16x1xf32>
    %100 = math.rsqrt %99 : vector<16x1xf32>
    %101 = vector.broadcast %100 : vector<16x1xf32> to vector<16x32xf32>
    %102 = arith.mulf %97, %101 : vector<16x32xf32>
    %c0_67 = arith.constant 0 : index
    %c0_68 = arith.constant 0 : index
    %103 = vector.load %arg22[%c0_67, %c0_68] : memref<1x32xf32, #tpu.memory_space<vmem>>, vector<1x32xf32>
    %104 = vector.broadcast %103 : vector<1x32xf32> to vector<16x32xf32>
    %105 = arith.mulf %102, %104 : vector<16x32xf32>
    %c0_69 = arith.constant 0 : index
    %c0_70 = arith.constant 0 : index
    %106 = vector.load %arg23[%c0_69, %c0_70] : memref<1x32xf32, #tpu.memory_space<vmem>>, vector<1x32xf32>
    %107 = vector.broadcast %106 : vector<1x32xf32> to vector<16x32xf32>
    %108 = arith.addf %105, %107 : vector<16x32xf32>
    %c0_71 = arith.constant 0 : index
    %c0_72 = arith.constant 0 : index
    %109 = vector.load %arg24[%c0_71, %c0_72] : memref<16x32xf32, #tpu.memory_space<vmem>>, vector<16x32xf32>
    tpu.vector_store %arg24[%c0_71, %c0_72], %108 {strides = array<i32>} : memref<16x32xf32, #tpu.memory_space<vmem>>, vector<16x32xf32>,
    return
  }
  func.func @transform_0(%arg0: i32) -> (i32, i32) {
    %c0_i32 = arith.constant 0 : i32
    %c0_i32_0 = arith.constant 0 : i32
    return %arg0, %c0_i32 : i32, i32
  }
  func.func @transform_1(%arg0: i32) -> (i32, i32) {
    %c0_i32 = arith.constant 0 : i32
    %c0_i32_0 = arith.constant 0 : i32
    %c0_i32_1 = arith.constant 0 : i32
    return %c0_i32, %c0_i32_0 : i32, i32
  }
  func.func @transform_2(%arg0: i32) -> (i32, i32) {
    %c0_i32 = arith.constant 0 : i32
    %c0_i32_0 = arith.constant 0 : i32
    %c0_i32_1 = arith.constant 0 : i32
    return %c0_i32, %c0_i32_0 : i32, i32
  }
  func.func @transform_3(%arg0: i32) -> (i32, i32) {
    %c0_i32 = arith.constant 0 : i32
    %c0_i32_0 = arith.constant 0 : i32
    %c0_i32_1 = arith.constant 0 : i32
    return %c0_i32, %c0_i32_0 : i32, i32
  }
  func.func @transform_4(%arg0: i32) -> (i32, i32) {
    %c0_i32 = arith.constant 0 : i32
    %c0_i32_0 = arith.constant 0 : i32
    %c0_i32_1 = arith.constant 0 : i32
    return %c0_i32, %c0_i32_0 : i32, i32
  }
  func.func @transform_5(%arg0: i32) -> (i32, i32) {
    %c0_i32 = arith.constant 0 : i32
    %c0_i32_0 = arith.constant 0 : i32
    %c0_i32_1 = arith.constant 0 : i32
    return %c0_i32, %c0_i32_0 : i32, i32
  }
  func.func @transform_6(%arg0: i32) -> (i32, i32) {
    %c0_i32 = arith.constant 0 : i32
    %c0_i32_0 = arith.constant 0 : i32
    %c0_i32_1 = arith.constant 0 : i32
    return %c0_i32, %c0_i32_0 : i32, i32
  }
  func.func @transform_7(%arg0: i32) -> (i32, i32) {
    %c0_i32 = arith.constant 0 : i32
    %c0_i32_0 = arith.constant 0 : i32
    %c0_i32_1 = arith.constant 0 : i32
    return %c0_i32, %c0_i32_0 : i32, i32
  }
  func.func @transform_8(%arg0: i32) -> (i32, i32) {
    %c0_i32 = arith.constant 0 : i32
    %c0_i32_0 = arith.constant 0 : i32
    %c0_i32_1 = arith.constant 0 : i32
    return %c0_i32, %c0_i32_0 : i32, i32
  }
  func.func @transform_9(%arg0: i32) -> (i32, i32) {
    %c0_i32 = arith.constant 0 : i32
    %c0_i32_0 = arith.constant 0 : i32
    %c0_i32_1 = arith.constant 0 : i32
    return %c0_i32, %c0_i32_0 : i32, i32
  }
  func.func @transform_10(%arg0: i32) -> (i32, i32) {
    %c0_i32 = arith.constant 0 : i32
    %c0_i32_0 = arith.constant 0 : i32
    %c0_i32_1 = arith.constant 0 : i32
    return %c0_i32, %c0_i32_0 : i32, i32
  }
  func.func @transform_11(%arg0: i32) -> (i32, i32) {
    %c0_i32 = arith.constant 0 : i32
    %c0_i32_0 = arith.constant 0 : i32
    %c0_i32_1 = arith.constant 0 : i32
    return %c0_i32, %c0_i32_0 : i32, i32
  }
  func.func @transform_12(%arg0: i32) -> (i32, i32) {
    %c0_i32 = arith.constant 0 : i32
    %c0_i32_0 = arith.constant 0 : i32
    %c0_i32_1 = arith.constant 0 : i32
    return %c0_i32, %c0_i32_0 : i32, i32
  }
  func.func @transform_13(%arg0: i32) -> (i32, i32) {
    %c0_i32 = arith.constant 0 : i32
    %c0_i32_0 = arith.constant 0 : i32
    %c0_i32_1 = arith.constant 0 : i32
    return %c0_i32, %c0_i32_0 : i32, i32
  }
  func.func @transform_14(%arg0: i32) -> (i32, i32) {
    %c0_i32 = arith.constant 0 : i32
    %c0_i32_0 = arith.constant 0 : i32
    %c0_i32_1 = arith.constant 0 : i32
    return %c0_i32, %c0_i32_0 : i32, i32
  }
  func.func @transform_15(%arg0: i32) -> (i32, i32) {
    %c0_i32 = arith.constant 0 : i32
    %c0_i32_0 = arith.constant 0 : i32
    %c0_i32_1 = arith.constant 0 : i32
    return %c0_i32, %c0_i32_0 : i32, i32
  }
  func.func @transform_16(%arg0: i32) -> (i32, i32) {
    %c0_i32 = arith.constant 0 : i32
    %c0_i32_0 = arith.constant 0 : i32
    %c0_i32_1 = arith.constant 0 : i32
    return %c0_i32, %c0_i32_0 : i32, i32
  }
  func.func @transform_17(%arg0: i32) -> (i32, i32) {
    %c0_i32 = arith.constant 0 : i32
    %c0_i32_0 = arith.constant 0 : i32
    %c0_i32_1 = arith.constant 0 : i32
    return %c0_i32, %c0_i32_0 : i32, i32
  }
  func.func @transform_18(%arg0: i32) -> (i32, i32) {
    %c0_i32 = arith.constant 0 : i32
    %c0_i32_0 = arith.constant 0 : i32
    %c0_i32_1 = arith.constant 0 : i32
    return %c0_i32, %c0_i32_0 : i32, i32
  }
  func.func @transform_19(%arg0: i32) -> (i32, i32) {
    %c0_i32 = arith.constant 0 : i32
    %c0_i32_0 = arith.constant 0 : i32
    %c0_i32_1 = arith.constant 0 : i32
    return %c0_i32, %c0_i32_0 : i32, i32
  }
  func.func @transform_20(%arg0: i32) -> (i32, i32) {
    %c0_i32 = arith.constant 0 : i32
    %c0_i32_0 = arith.constant 0 : i32
    %c0_i32_1 = arith.constant 0 : i32
    return %c0_i32, %c0_i32_0 : i32, i32
  }
  func.func @transform_21(%arg0: i32) -> (i32, i32) {
    %c0_i32 = arith.constant 0 : i32
    %c0_i32_0 = arith.constant 0 : i32
    %c0_i32_1 = arith.constant 0 : i32
    return %c0_i32, %c0_i32_0 : i32, i32
  }
  func.func @transform_22(%arg0: i32) -> (i32, i32) {
    %c0_i32 = arith.constant 0 : i32
    %c0_i32_0 = arith.constant 0 : i32
    %c0_i32_1 = arith.constant 0 : i32
    return %c0_i32, %c0_i32_0 : i32, i32
  }
  func.func @transform_23(%arg0: i32) -> (i32, i32) {
    %c0_i32 = arith.constant 0 : i32
    %c0_i32_0 = arith.constant 0 : i32
    return %arg0, %c0_i32 : i32, i32
  }
}

</mosaic_0001>

<llo_original>
// kernel: encoder_layer_forward.2
$region0: #{encoder_layer_forward.2}
  #allocation0 [shape = 'u32[]', space=smem, size = 0x4, offset = 0x4, fixed_abs, tag = 'smem constant byte address 0x4 - core index']
  #allocation1 [shape = 'u32[144,128]{1,0:T(1,128)}', space=vmem, size = 0x12000, scoped, tag = 'internal scratch']
  %s0 = inlined_call_operand.hbm [shape: f32[2,16,32], index: 0, kind: input, shape index: {}]
  %s1 = inlined_call_operand.vmem [shape: f32[32,96], index: 1, kind: input, shape index: {}]
  %s2 = inlined_call_operand.vmem [shape: f32[1,96], index: 2, kind: input, shape index: {}]
  %s3 = inlined_call_operand.vmem [shape: f32[1,32], index: 3, kind: input, shape index: {}]
  %s4 = inlined_call_operand.vmem [shape: f32[1,32], index: 4, kind: input, shape index: {}]
  %s5 = inlined_call_operand.vmem [shape: f32[2,16,32], index: 5, kind: output, shape index: {0}]
  %s6 = inlined_call_operand.hbm [shape: f32[2,16,16], index: 6, kind: output, shape index: {1}]
  %7 = xla_tuple %s5, %s6
  %s8 = sld [smem:[#allocation0]]
  $region65: #{encoder_layer_forward.2} parent=0
    _
  %s10 = ssub.s32 1, %s8
  %s11 = scalar_select 0, %s10, %s8
  $region1: #{encoder_layer_forward.2} parent=0
    #allocation2 [shape = 'u8[16384]{0}', space=vmem, size = 0x4000, scoped, tag = 'input window, operand 0']
    #allocation3 [shape = 's32[2]{0}', space=sflag, size = 0x8, scoped, tag = 'scoped memory for encoder_layer_forward.2']
    #allocation4 [shape = 's32[2]{0}', space=sflag, size = 0x8, scoped, tag = 'scoped memory for encoder_layer_forward.2']
    #allocation5 [shape = 'u8[16384]{0}', space=vmem, size = 0x4000, scoped, tag = 'output window, operand 1']
    %12 = vsyncpa [#allocation3], 0
    %s13 = scalar_lea.sflag [#allocation3], 1
    %14 = vsyncpa %s13, 0
    %15 = vsyncpa [#allocation4], 0
    %s16 = scalar_lea.sflag [#allocation4], 1
    %17 = vsyncpa %s16, 0
    loop: start=0, step=1, limit=4
    $region2: #{encoder_layer_forward.2} parent=1 // loop_pre_header
      _
    $region3: #{encoder_layer_forward.2} parent=1 // loop_header
      %s19 = sphi 0, %s23
      %p20 = scmp.ge.s32.totalorder %s19, 4
      %s29 = sphi 0, %s31
      %s32 = sphi 0, %s29
      %s33 = sphi 0, %s32
      %s49 = sphi 0, %s33
      %s53 = sphi 0, %s53
      %s55 = sphi 0, %s53
      %s56 = sphi 0, %s55
      %s70 = sphi 0, %s56
      %s74 = sphi 0, %s74
      %s76 = sphi 0, %s74
      %s77 = sphi 0, %s76
      %s91 = sphi 0, %s77
      %s95 = sphi 0, %s95
      %s97 = sphi 0, %s95
      %s98 = sphi 0, %s97
      %s112 = sphi 0, %s98
      %s116 = sphi 0, %s116
      %s118 = sphi 0, %s116
      %s119 = sphi 0, %s118
      %s133 = sphi 0, %s119
      %s139 = sphi 0, %s141
      %s142 = sphi 0, %s139
      %s143 = sphi 0, %s142
      %s159 = sphi 0, %s143
      %s165 = sphi 0, %s167
      %s168 = sphi 0, %s165
      %s169 = sphi 0, %s168
      %s185 = sphi 0, %s169
    $region4: #{encoder_layer_forward.2} parent=1 // loop_header_branch
      %22 = sbr.rel (%p20) target = $region8
    $region5: #{encoder_layer_forward.2} parent=1 // loop_body
      %s24 = ssub.s32 %s19, 1
      %s25 = ssub.s32 %s19, 2
      %s26 = sadd.s32 %s19, 1
      %s27 = ssub.s32 %s19, %s26
      %p28 = scmp.eq.s32.totalorder %s27, 0
      %s30 = sadd.s32 %s29, 1
      %s31 = scalar_select %p28, %s29, %s30
      %p34 = pneg %p28
      %p35 = scmp.eq.s32.totalorder %s19, 1
      %p36 = por %p34, %p35
      %p37 = scmp.ne.s32.totalorder %s29, %s32
      %p38 = scmp.eq.s32.totalorder %s19, 0
      %p39 = por %p37, %p38
      %p40 = scmp.ne.s32.totalorder %s29, %s32
      %p41 = scmp.eq.s32.totalorder %s24, 1
      %p42 = por %p40, %p41
      %p43 = scmp.ne.s32.totalorder %s32, %s33
      %p44 = scmp.eq.s32.totalorder %s24, 0
      %p45 = por %p43, %p44
      %p46 = scmp.ne.s32.totalorder %s32, %s33
      %p47 = scmp.eq.s32.totalorder %s25, 1
      %p48 = por %p46, %p47
      %p50 = scmp.ne.s32.totalorder %s33, %s49
      %p51 = scmp.eq.s32.totalorder %s25, 0
      %p52 = por %p50, %p51
      %s54 = sadd.s32 %s53, 1
      %p57 = scmp.eq.s32.totalorder %s19, 1
      %p58 = scmp.ne.s32.totalorder %s53, %s55
      %p59 = scmp.eq.s32.totalorder %s19, 0
      %p60 = por %p58, %p59
      %p61 = scmp.ne.s32.totalorder %s53, %s55
      %p62 = scmp.eq.s32.totalorder %s24, 1
      %p63 = por %p61, %p62
      %p64 = scmp.ne.s32.totalorder %s55, %s56
      %p65 = scmp.eq.s32.totalorder %s24, 0
      %p66 = por %p64, %p65
      %p67 = scmp.ne.s32.totalorder %s55, %s56
      %p68 = scmp.eq.s32.totalorder %s25, 1
      %p69 = por %p67, %p68
      %p71 = scmp.ne.s32.totalorder %s56, %s70
      %p72 = scmp.eq.s32.totalorder %s25, 0
      %p73 = por %p71, %p72
      %s75 = sadd.s32 %s74, 1
      %p78 = scmp.eq.s32.totalorder %s19, 1
      %p79 = scmp.ne.s32.totalorder %s74, %s76
      %p80 = scmp.eq.s32.totalorder %s19, 0
      %p81 = por %p79, %p80
      %p82 = scmp.ne.s32.totalorder %s74, %s76
      %p83 = scmp.eq.s32.totalorder %s24, 1
      %p84 = por %p82, %p83
      %p85 = scmp.ne.s32.totalorder %s76, %s77
      %p86 = scmp.eq.s32.totalorder %s24, 0
      %p87 = por %p85, %p86
      %p88 = scmp.ne.s32.totalorder %s76, %s77
      %p89 = scmp.eq.s32.totalorder %s25, 1
      %p90 = por %p88, %p89
      %p92 = scmp.ne.s32.totalorder %s77, %s91
      %p93 = scmp.eq.s32.totalorder %s25, 0
      %p94 = por %p92, %p93
      %s96 = sadd.s32 %s95, 1
      %p99 = scmp.eq.s32.totalorder %s19, 1
      %p100 = scmp.ne.s32.totalorder %s95, %s97
      %p101 = scmp.eq.s32.totalorder %s19, 0
      %p102 = por %p100, %p101
      %p103 = scmp.ne.s32.totalorder %s95, %s97
      %p104 = scmp.eq.s32.totalorder %s24, 1
      %p105 = por %p103, %p104
      %p106 = scmp.ne.s32.totalorder %s97, %s98
      %p107 = scmp.eq.s32.totalorder %s24, 0
      %p108 = por %p106, %p107
      %p109 = scmp.ne.s32.totalorder %s97, %s98
      %p110 = scmp.eq.s32.totalorder %s25, 1
      %p111 = por %p109, %p110
      %p113 = scmp.ne.s32.totalorder %s98, %s112
      %p114 = scmp.eq.s32.totalorder %s25, 0
      %p115 = por %p113, %p114
      %s117 = sadd.s32 %s116, 1
      %p120 = scmp.eq.s32.totalorder %s19, 1
      %p121 = scmp.ne.s32.totalorder %s116, %s118
      %p122 = scmp.eq.s32.totalorder %s19, 0
      %p123 = por %p121, %p122
      %p124 = scmp.ne.s32.totalorder %s116, %s118
      %p125 = scmp.eq.s32.totalorder %s24, 1
      %p126 = por %p124, %p125
      %p127 = scmp.ne.s32.totalorder %s118, %s119
      %p128 = scmp.eq.s32.totalorder %s24, 0
      %p129 = por %p127, %p128
      %p130 = scmp.ne.s32.totalorder %s118, %s119
      %p131 = scmp.eq.s32.totalorder %s25, 1
      %p132 = por %p130, %p131
      %p134 = scmp.ne.s32.totalorder %s119, %s133
      %p135 = scmp.eq.s32.totalorder %s25, 0
      %p136 = por %p134, %p135
      %s137 = ssub.s32 %s19, %s26
      %p138 = scmp.eq.s32.totalorder %s137, 0
      %s140 = sadd.s32 %s139, 1
      %s141 = scalar_select %p138, %s139, %s140
      %p144 = pneg %p138
      %p145 = scmp.eq.s32.totalorder %s19, 1
      %p146 = por %p144, %p145
      %p147 = scmp.ne.s32.totalorder %s139, %s142
      %p148 = scmp.eq.s32.totalorder %s19, 0
      %p149 = por %p147, %p148
      %p150 = scmp.ne.s32.totalorder %s139, %s142
      %p151 = scmp.eq.s32.totalorder %s24, 1
      %p152 = por %p150, %p151
      %p153 = scmp.ne.s32.totalorder %s142, %s143
      %p154 = scmp.eq.s32.totalorder %s24, 0
      %p155 = por %p153, %p154
      %p156 = scmp.ne.s32.totalorder %s142, %s143
      %p157 = scmp.eq.s32.totalorder %s25, 1
      %p158 = por %p156, %p157
      %p160 = scmp.ne.s32.totalorder %s143, %s159
      %p161 = scmp.eq.s32.totalorder %s25, 0
      %p162 = por %p160, %p161
      %s163 = ssub.s32 %s19, %s26
      %p164 = scmp.eq.s32.totalorder %s163, 0
      %s166 = sadd.s32 %s165, 1
      %s167 = scalar_select %p164, %s165, %s166
      %p170 = pneg %p164
      %p171 = scmp.eq.s32.totalorder %s19, 1
      %p172 = por %p170, %p171
      %p173 = scmp.ne.s32.totalorder %s165, %s168
      %p174 = scmp.eq.s32.totalorder %s19, 0
      %p175 = por %p173, %p174
      %p176 = scmp.ne.s32.totalorder %s165, %s168
      %p177 = scmp.eq.s32.totalorder %s24, 1
      %p178 = por %p176, %p177
      %p179 = scmp.ne.s32.totalorder %s168, %s169
      %p180 = scmp.eq.s32.totalorder %s24, 0
      %p181 = por %p179, %p180
      %p182 = scmp.ne.s32.totalorder %s168, %s169
      %p183 = scmp.eq.s32.totalorder %s25, 1
      %p184 = por %p182, %p183
      %p186 = scmp.ne.s32.totalorder %s169, %s185
      %p187 = scmp.eq.s32.totalorder %s25, 0
      %p188 = por %p186, %p187
      %p189 = scmp.le.s32.totalorder 1, %s19
      %p190 = scmp.lt.s32.totalorder %s19, 3
      %p191 = pnand %p189, %p190
      %p192 = pneg %p191
      // Predicated region
      $region9: #{encoder_layer_forward.2} parent=5 // pred_check
        _
      $region10: #{encoder_layer_forward.2} parent=5 // pred_check_branch
        %194 = sbr.rel (%p191) target = $region12
      $region11: #{encoder_layer_forward.2} parent=5 // pred_region
        %s195 = ssub.s32 %s19, 1
        // Predicated region
        $region13: #{encoder_layer_forward.2} parent=11 // pred_check
          %p196 = pneg %p66
        $region14: #{encoder_layer_forward.2} parent=11 // pred_check_branch
          %198 = sbr.rel (%p196) target = $region16
        $region15: #{encoder_layer_forward.2} parent=11 // pred_region
          _
        $region16: #{encoder_layer_forward.2} parent=11 // pred_fallthru
          _
        // Predicated region
        $region17: #{encoder_layer_forward.2} parent=11 // pred_check
          %p199 = pneg %p87
        $region18: #{encoder_layer_forward.2} parent=11 // pred_check_branch
          %201 = sbr.rel (%p199) target = $region20
        $region19: #{encoder_layer_forward.2} parent=11 // pred_region
          _
        $region20: #{encoder_layer_forward.2} parent=11 // pred_fallthru
          _
        // Predicated region
        $region21: #{encoder_layer_forward.2} parent=11 // pred_check
          %p202 = pneg %p108
        $region22: #{encoder_layer_forward.2} parent=11 // pred_check_branch
          %204 = sbr.rel (%p202) target = $region24
        $region23: #{encoder_layer_forward.2} parent=11 // pred_region
          _
        $region24: #{encoder_layer_forward.2} parent=11 // pred_fallthru
          _
        // Predicated region
        $region25: #{encoder_layer_forward.2} parent=11 // pred_check
          %p205 = pneg %p129
        $region26: #{encoder_layer_forward.2} parent=11 // pred_check_branch
          %207 = sbr.rel (%p205) target = $region28
        $region27: #{encoder_layer_forward.2} parent=11 // pred_region
          _
        $region28: #{encoder_layer_forward.2} parent=11 // pred_fallthru
          _
      $region12: #{encoder_layer_forward.2} parent=5 // pred_fallthru
        _
      %p208 = scmp.lt.s32.totalorder %s19, 2
      // Predicated region
      $region29: #{encoder_layer_forward.2} parent=5 // pred_check
        %p209 = pneg %p208
      $region30: #{encoder_layer_forward.2} parent=5 // pred_check_branch
        %211 = sbr.rel (%p209) target = $region32
      $region31: #{encoder_layer_forward.2} parent=5 // pred_region
        // Predicated region
        $region33: #{encoder_layer_forward.2} parent=31 // pred_check
          %p212 = pneg %p39
        $region34: #{encoder_layer_forward.2} parent=31 // pred_check_branch
          %214 = sbr.rel (%p212) target = $region36
        $region35: #{encoder_layer_forward.2} parent=31 // pred_region
          %s215 = sand.u32 %s29, 1
          %s216 = scalar_lea.sflag [#allocation3], %s215
          %s217 = sand.u32 %s29, 1
          %s218 = smul.addr %s217, 16
          %s219 = scalar_lea.vmem [#allocation2], %s218
          %s221 = ssub.s32 256, 256
          %222 = vsyncadd %s216, %s221
          %s223 = smul.addr %s19, 2
          %s224 = smul.addr %s223, 128
          %s225 = scalar_lea.hbm %s0, %s224
          %s226 = sshll.u32 %s219, 4
          %s227 = int_to_ptr.vmem [resolvable:$true] %s226
          %232 = dma.hbm_to_vmem [thread:$0]  %s225, 256, %s227, %s216, 128, 128, 8
        $region36: #{encoder_layer_forward.2} parent=31 // pred_fallthru
          _
      $region32: #{encoder_layer_forward.2} parent=5 // pred_fallthru
        _
      %p233 = scmp.le.s32.totalorder 1, %s19
      %p234 = scmp.lt.s32.totalorder %s19, 3
      %p235 = pnand %p233, %p234
      %p236 = pneg %p235
      // Predicated region
      $region37: #{encoder_layer_forward.2} parent=5 // pred_check
        _
      $region38: #{encoder_layer_forward.2} parent=5 // pred_check_branch
        %238 = sbr.rel (%p235) target = $region40
      $region39: #{encoder_layer_forward.2} parent=5 // pred_region
        %s239 = ssub.s32 %s19, 1
        %s240 = sand.u32 %s32, 1
        %s241 = scalar_lea.sflag [#allocation3], %s240
        %s242 = sand.u32 %s32, 1
        %s243 = smul.addr %s242, 16
        %s244 = scalar_lea.vmem [#allocation2], %s243
        // Predicated region
        $region41: #{encoder_layer_forward.2} parent=39 // pred_check
          %p245 = pneg %p45
        $region42: #{encoder_layer_forward.2} parent=39 // pred_check_branch
          %247 = sbr.rel (%p245) target = $region44
        $region43: #{encoder_layer_forward.2} parent=39 // pred_region
          %248 = dma.done %s241, 256
        $region44: #{encoder_layer_forward.2} parent=39 // pred_fallthru
          _
        %s249 = sand.u32 %s32, 1
        %s250 = scalar_lea.sflag [#allocation3], %s249
        %s251 = sand.u32 %s32, 1
        %s252 = smul.addr %s251, 16
        %s253 = scalar_lea.vmem [#allocation2], %s252
        %p254 = pneg %p45
        %p255 = pneg %p42
        %p256 = pneg %p66
        %p257 = pneg %p63
        %p258 = pneg %p87
        %p259 = pneg %p84
        %p260 = pneg %p108
        %p261 = pneg %p105
        %p262 = pneg %p129
        %p263 = pneg %p126
        %p264 = pneg %p155
        %p265 = pneg %p152
        %p266 = scmp.lt.s32.totalorder %s24, 1
        %s267 = scalar_select %p266, %s24, 1
        %s268 = smul.addr %s267, 2
        %s269 = smul.addr %s268, 8
        %s270 = scalar_lea.vmem %s5, %s269
        %p271 = pneg %p181
        %p272 = pneg %p178
        %s273 = sand.u32 %s168, 1
        %s274 = scalar_lea.sflag [#allocation4], %s273
        %s275 = sand.u32 %s168, 1
        %s276 = smul.addr %s275, 16
        %s277 = scalar_lea.vmem [#allocation5], %s276
        %p278 = scmp.lt.s32.totalorder %s24, 1
        %s279 = scalar_select %p278, %s24, 1
        %s280 = smul.addr %s279, 2
        %s281 = smul.addr %s280, 8
        %s282 = scalar_lea.vmem %s5, %s281
        %v283 = vld [vmem:[%s244] sm:$0xff]
        %v284 = vld [vmem:[%s244 + $0x8] sm:$0xff]
        %v285 = vld [vmem:[%s1] sm:$0xff]
        %v286 = vld [vmem:[%s1 + $0x8] sm:$0xff]
        %v287 = vld [vmem:[%s1 + $0x10] sm:$0xff]
        %v288 = vld [vmem:[%s1 + $0x18] sm:$0xff]
        %v289 = vld [vmem:[%s2] sm:$0x1]
        %v291 = vlaneseq
        %v292 = vshrl.u32 %v291, 7
        %v293 = vsub.s32 0, %v292
        %v294 = vrot.slane %v289, %v293
        %vm296 = vcmask 261120
        %v298 = vsel %vm296, %v283, 0
        %v301 = vsel %vm296, %v284, 0
        %303 = vmatprep.subr.mxu0 0.0
        %304 = vmatpush1.msra.mxu0 %v285
        %305 = vmatprep.subr.mxu0 0.0
        %306 = vmatpush1.msra.mxu0 %v286
        %307 = vmatprep.subr.mxu0 0.0
        %308 = vmatpush1.msra.mxu0 %v287
        %309 = vmatprep.subr.mxu0 0.0
        %310 = vmatpush1.msra.mxu0 %v288
        %311 = vmatprep.subr.mxu0 0.0
        %312 = vmatpush1.msra.mxu0 0.0
        %313 = vmatprep.subr.mxu0 0.0
        %314 = vmatpush1.msra.mxu0 0.0
        %315 = vmatprep.subr.mxu0 0.0
        %316 = vmatpush1.msra.mxu0 0.0
        %317 = vmatprep.subr.mxu0 0.0
        %318 = vmatpush1.msra.mxu0 0.0
        %319 = vmatprep.subr.mxu0 0.0
        %320 = vmatpush1.msra.mxu0 0.0
        %321 = vmatprep.subr.mxu0 0.0
        %322 = vmatpush1.msra.mxu0 0.0
        %323 = vmatprep.subr.mxu0 0.0
        %324 = vmatpush1.msra.mxu0 0.0
        %325 = vmatprep.subr.mxu0 0.0
        %326 = vmatpush1.msra.mxu0 0.0
        %327 = vmatprep.subr.mxu0 0.0
        %328 = vmatpush1.msra.mxu0 0.0
        %329 = vmatprep.subr.mxu0 0.0
        %330 = vmatpush1.msra.mxu0 0.0
        %331 = vmatprep.subr.mxu0 0.0
        %332 = vmatpush1.msra.mxu0 0.0
        %333 = vmatprep.subr.mxu0 0.0
        %334 = vmatpush1.msra.mxu0 0.0
        %335 = vmatprep.subr.mxu0 0.0
        %336 = vmatpush1.msra.mxu0 0.0
        %337 = vmatprep.subr.mxu0 0.0
        %338 = vmatpush1.msra.mxu0 0.0
        %339 = vmatprep.subr.mxu0 0.0
        %340 = vmatpush1.msra.mxu0 0.0
        %341 = vmatprep.subr.mxu0 0.0
        %342 = vmatpush1.msra.mxu0 0.0
        %343 = vmatprep.subr.mxu0 0.0
        %344 = vmatpush1.msra.mxu0 0.0
        %345 = vmatprep.subr.mxu0 0.0
        %346 = vmatpush1.msra.mxu0 0.0
        %347 = vmatprep.subr.mxu0 0.0
        %348 = vmatpush1.msra.mxu0 0.0
        %349 = vmatprep.subr.mxu0 0.0
        %350 = vmatpush1.msra.mxu0 0.0
        %351 = vmatprep.subr.mxu0 0.0
        %352 = vmatpush1.msra.mxu0 0.0
        %353 = vmatprep.subr.mxu0 0.0
        %354 = vmatpush1.msra.mxu0 0.0
        %355 = vmatprep.subr.mxu0 0.0
        %356 = vmatpush1.msra.mxu0 0.0
        %357 = vmatprep.subr.mxu0 0.0
        %358 = vmatpush1.msra.mxu0 0.0
        %359 = vmatprep.subr.mxu0 0.0
        %360 = vmatpush1.msra.mxu0 0.0
        %361 = vmatprep.subr.mxu0 0.0
        %362 = vmatpush1.msra.mxu0 0.0
        %363 = vmatprep.subr.mxu0 0.0
        %364 = vmatpush1.msra.mxu0 0.0
        %365 = vmatprep.subr.mxu0 0.0
        %366 = vmatpush1.msra.mxu0 0.0
        %367 = vmatprep.mubr.f32.mxu0 0.0
        %368 = vmatmul.mubr.f32.gmra.mrb[0].mxu0 %v298
        %v369 = vpop.f32.mrb[0].mxu0
        %v370 = vadd.f32 %v294, %v369
        %v371 = vpop.f32.mrb[0].mxu0
        %372 = vmatprep.mubr.f32.mxu0 0.0
        %373 = vmatmul.mubr.f32.gmra.mrb[0].mxu0 %v301
        %v374 = vpop.f32.mrb[0].mxu0
        %v375 = vadd.f32 %v294, %v374
        %v376 = vpop.f32.mrb[0].mxu0
        %377 = vdwg.mxu0
        %380 = vrot.lane.b32.xlu0 %v370, 96
        %v381 = vpop.permute.xlu0 %380
        %382 = vrot.lane.b32.xlu0 %v375, 96
        %v383 = vpop.permute.xlu0 %382
        %v384 = vsel %vm296, %v370, 0
        %v386 = vsel %vm296, %v375, 0
        %v388 = vsel %vm296, %v381, 0
        %v390 = vsel %vm296, %v383, 0
        %392 = vmatprep.subr.mxu0 0.0
        %393 = vmatpush1.xpose.msra.mxu0 %v388
        %394 = vmatprep.subr.mxu0 0.0
        %395 = vmatpush1.xpose.msra.mxu0 %v390
        %396 = vmatprep.subr.mxu0 0.0
        %397 = vmatpush1.xpose.msra.mxu0 0.0
        %398 = vmatprep.subr.mxu0 0.0
        %399 = vmatpush1.xpose.msra.mxu0 0.0
        %400 = vmatprep.subr.mxu0 0.0
        %401 = vmatpush1.xpose.msra.mxu0 0.0
        %402 = vmatprep.subr.mxu0 0.0
        %403 = vmatpush1.xpose.msra.mxu0 0.0
        %404 = vmatprep.subr.mxu0 0.0
        %405 = vmatpush1.xpose.msra.mxu0 0.0
        %406 = vmatprep.subr.mxu0 0.0
        %407 = vmatpush1.xpose.msra.mxu0 0.0
        %408 = vmatprep.subr.mxu0 0.0
        %409 = vmatpush1.xpose.msra.mxu0 0.0
        %410 = vmatprep.subr.mxu0 0.0
        %411 = vmatpush1.xpose.msra.mxu0 0.0
        %412 = vmatprep.subr.mxu0 0.0
        %413 = vmatpush1.xpose.msra.mxu0 0.0
        %414 = vmatprep.subr.mxu0 0.0
        %415 = vmatpush1.xpose.msra.mxu0 0.0
        %416 = vmatprep.subr.mxu0 0.0
        %417 = vmatpush1.xpose.msra.mxu0 0.0
        %418 = vmatprep.subr.mxu0 0.0
        %419 = vmatpush1.xpose.msra.mxu0 0.0
        %420 = vmatprep.subr.mxu0 0.0
        %421 = vmatpush1.xpose.msra.mxu0 0.0
        %422 = vmatprep.subr.mxu0 0.0
        %423 = vmatpush1.xpose.msra.mxu0 0.0
        %424 = vmatprep.subr.mxu0 0.0
        %425 = vmatpush1.xpose.msra.mxu0 0.0
        %426 = vmatprep.subr.mxu0 0.0
        %427 = vmatpush1.xpose.msra.mxu0 0.0
        %428 = vmatprep.subr.mxu0 0.0
        %429 = vmatpush1.xpose.msra.mxu0 0.0
        %430 = vmatprep.subr.mxu0 0.0
        %431 = vmatpush1.xpose.msra.mxu0 0.0
        %432 = vmatprep.subr.mxu0 0.0
        %433 = vmatpush1.xpose.msra.mxu0 0.0
        %434 = vmatprep.subr.mxu0 0.0
        %435 = vmatpush1.xpose.msra.mxu0 0.0
        %436 = vmatprep.subr.mxu0 0.0
        %437 = vmatpush1.xpose.msra.mxu0 0.0
        %438 = vmatprep.subr.mxu0 0.0
        %439 = vmatpush1.xpose.msra.mxu0 0.0
        %440 = vmatprep.subr.mxu0 0.0
        %441 = vmatpush1.xpose.msra.mxu0 0.0
        %442 = vmatprep.subr.mxu0 0.0
        %443 = vmatpush1.xpose.msra.mxu0 0.0
        %444 = vmatprep.subr.mxu0 0.0
        %445 = vmatpush1.xpose.msra.mxu0 0.0
        %446 = vmatprep.subr.mxu0 0.0
        %447 = vmatpush1.xpose.msra.mxu0 0.0
        %448 = vmatprep.subr.mxu0 0.0
        %449 = vmatpush1.xpose.msra.mxu0 0.0
        %450 = vmatprep.subr.mxu0 0.0
        %451 = vmatpush1.xpose.msra.mxu0 0.0
        %452 = vmatprep.subr.mxu0 0.0
        %453 = vmatpush1.xpose.msra.mxu0 0.0
        %454 = vmatprep.subr.mxu0 0.0
        %455 = vmatpush1.xpose.msra.mxu0 0.0
        %456 = vmatprep.mubr.f32.mxu0 0.0
        %457 = vmatmul.mubr.f32.gmra.mrb[0].mxu0 %v384
        %v458 = vpop.f32.mrb[0].mxu0
        %v459 = vadd.f32 0.0, %v458
        %v460 = vpop.f32.mrb[0].mxu0
        %461 = vmatprep.mubr.f32.mxu0 0.0
        %462 = vmatmul.mubr.f32.gmra.mrb[0].mxu0 %v386
        %v463 = vpop.f32.mrb[0].mxu0
        %v464 = vadd.f32 0.0, %v463
        %v465 = vpop.f32.mrb[0].mxu0
        %466 = vdwg.mxu0
        %v467 = vmax.f32 %v459, 0.0
        %v468 = vmax.f32 %v464, 0.0
        %v469 = vmul.f32 %v467, %v467
        %v470 = vmul.f32 %v468, %v468
        %vm471 = vcmask 130048
        %v472 = vsel %vm471, %v469, 0.0
        %473 = vadd.xlane.f32.xlu0 %v472
        %v474 = vpop.xlane.xlu0 %473
        %v475 = vsel %vm471, %v470, 0.0
        %476 = vadd.xlane.f32.xlu0 %v475
        %v477 = vpop.xlane.xlu0 %476
        %v478 = vadd.f32 %v474, 1e-09
        %v479 = vadd.f32 %v477, 1e-09
        %v480 = vrcp.pop %v478
        %v481 = vrcp.pop %v479
        %v482 = vmul.f32 %v469, %v480
        %v483 = vmul.f32 %v470, %v481
        %484 = vrot.lane.b32.xlu0 %v370, 64
        %v485 = vpop.permute.xlu0 %484
        %486 = vrot.lane.b32.xlu0 %v375, 64
        %v487 = vpop.permute.xlu0 %486
        %v491 = vsel %vm471, %v482, 0
        %v494 = vsel %vm471, %v483, 0
        %496 = vmatprep.subr.mxu0 0.0
        %497 = vmatpush1.msra.mxu0 %v485
        %498 = vmatprep.subr.mxu0 0.0
        %499 = vmatpush1.msra.mxu0 %v487
        %500 = vmatprep.subr.mxu0 0.0
        %501 = vmatpush1.msra.mxu0 0.0
        %502 = vmatprep.subr.mxu0 0.0
        %503 = vmatpush1.msra.mxu0 0.0
        %504 = vmatprep.subr.mxu0 0.0
        %505 = vmatpush1.msra.mxu0 0.0
        %506 = vmatprep.subr.mxu0 0.0
        %507 = vmatpush1.msra.mxu0 0.0
        %508 = vmatprep.subr.mxu0 0.0
        %509 = vmatpush1.msra.mxu0 0.0
        %510 = vmatprep.subr.mxu0 0.0
        %511 = vmatpush1.msra.mxu0 0.0
        %512 = vmatprep.subr.mxu0 0.0
        %513 = vmatpush1.msra.mxu0 0.0
        %514 = vmatprep.subr.mxu0 0.0
        %515 = vmatpush1.msra.mxu0 0.0
        %516 = vmatprep.subr.mxu0 0.0
        %517 = vmatpush1.msra.mxu0 0.0
        %518 = vmatprep.subr.mxu0 0.0
        %519 = vmatpush1.msra.mxu0 0.0
        %520 = vmatprep.subr.mxu0 0.0
        %521 = vmatpush1.msra.mxu0 0.0
        %522 = vmatprep.subr.mxu0 0.0
        %523 = vmatpush1.msra.mxu0 0.0
        %524 = vmatprep.subr.mxu0 0.0
        %525 = vmatpush1.msra.mxu0 0.0
        %526 = vmatprep.subr.mxu0 0.0
        %527 = vmatpush1.msra.mxu0 0.0
        %528 = vmatprep.subr.mxu0 0.0
        %529 = vmatpush1.msra.mxu0 0.0
        %530 = vmatprep.subr.mxu0 0.0
        %531 = vmatpush1.msra.mxu0 0.0
        %532 = vmatprep.subr.mxu0 0.0
        %533 = vmatpush1.msra.mxu0 0.0
        %534 = vmatprep.subr.mxu0 0.0
        %535 = vmatpush1.msra.mxu0 0.0
        %536 = vmatprep.subr.mxu0 0.0
        %537 = vmatpush1.msra.mxu0 0.0
        %538 = vmatprep.subr.mxu0 0.0
        %539 = vmatpush1.msra.mxu0 0.0
        %540 = vmatprep.subr.mxu0 0.0
        %541 = vmatpush1.msra.mxu0 0.0
        %542 = vmatprep.subr.mxu0 0.0
        %543 = vmatpush1.msra.mxu0 0.0
        %544 = vmatprep.subr.mxu0 0.0
        %545 = vmatpush1.msra.mxu0 0.0
        %546 = vmatprep.subr.mxu0 0.0
        %547 = vmatpush1.msra.mxu0 0.0
        %548 = vmatprep.subr.mxu0 0.0
        %549 = vmatpush1.msra.mxu0 0.0
        %550 = vmatprep.subr.mxu0 0.0
        %551 = vmatpush1.msra.mxu0 0.0
        %552 = vmatprep.subr.mxu0 0.0
        %553 = vmatpush1.msra.mxu0 0.0
        %554 = vmatprep.subr.mxu0 0.0
        %555 = vmatpush1.msra.mxu0 0.0
        %556 = vmatprep.subr.mxu0 0.0
        %557 = vmatpush1.msra.mxu0 0.0
        %558 = vmatprep.subr.mxu0 0.0
        %559 = vmatpush1.msra.mxu0 0.0
        %560 = vmatprep.mubr.f32.mxu0 0.0
        %561 = vmatmul.mubr.f32.gmra.mrb[0].mxu0 %v491
        %v562 = vpop.f32.mrb[0].mxu0
        %v563 = vadd.f32 0.0, %v562
        %v564 = vpop.f32.mrb[0].mxu0
        %565 = vmatprep.mubr.f32.mxu0 0.0
        %566 = vmatmul.mubr.f32.gmra.mrb[0].mxu0 %v494
        %v567 = vpop.f32.mrb[0].mxu0
        %v568 = vadd.f32 0.0, %v567
        %v569 = vpop.f32.mrb[0].mxu0
        %570 = vdwg.mxu0
        %v571 = vadd.f32 %v283, %v563
        %v572 = vadd.f32 %v284, %v568
        %v573 = vsel %vm296, %v571, 0.0
        %574 = vadd.xlane.f32.xlu0 %v573
        %v575 = vpop.xlane.xlu0 %574
        %v576 = vsel %vm296, %v572, 0.0
        %577 = vadd.xlane.f32.xlu0 %v576
        %v578 = vpop.xlane.xlu0 %577
        %v579 = vrcp.pop 32.0
        %v580 = vmul.f32 %v575, %v579
        %v581 = vmul.f32 %v578, %v579
        %v582 = vsub.f32 %v571, %v580
        %v583 = vsub.f32 %v572, %v581
        %v584 = vmul.f32 %v582, %v582
        %v585 = vmul.f32 %v583, %v583
        %v586 = vsel %vm296, %v584, 0.0
        %587 = vadd.xlane.f32.xlu0 %v586
        %v588 = vpop.xlane.xlu0 %587
        %v589 = vsel %vm296, %v585, 0.0
        %590 = vadd.xlane.f32.xlu0 %v589
        %v591 = vpop.xlane.xlu0 %590
        %v592 = vmul.f32 %v588, %v579
        %v593 = vmul.f32 %v591, %v579
        %v594 = vadd.f32 %v592, 1e-05
        %v595 = vadd.f32 %v593, 1e-05
        %v596 = vrsqrt.pop %v594
        %v597 = vrsqrt.pop %v595
        %v598 = vmul.f32 %v582, %v596
        %v599 = vmul.f32 %v583, %v597
        %v600 = vld [vmem:[%s3] sm:$0x1]
        %v602 = vlaneseq
        %v603 = vshrl.u32 %v602, 7
        %v604 = vsub.s32 0, %v603
        %v605 = vrot.slane %v600, %v604
        %v607 = vmul.f32 %v598, %v605
        %v608 = vmul.f32 %v599, %v605
        %v609 = vld [vmem:[%s4] sm:$0x1]
        %v611 = vlaneseq
        %v612 = vshrl.u32 %v611, 7
        %v613 = vsub.s32 0, %v612
        %v614 = vrot.slane %v609, %v613
        %v616 = vadd.f32 %v607, %v614
        %v617 = vadd.f32 %v608, %v614
        %618 = vst.msk [vmem:[%s282] sm:$0xff] %vm296, %v616
        %619 = vst.msk [vmem:[%s282 + $0x8] sm:$0xff] %vm296, %v617
        %620 = vst.msk [vmem:[%s277] sm:$0xff] %vm471, %v482
        %621 = vst.msk [vmem:[%s277 + $0x8] sm:$0xff] %vm471, %v483
        %p622 = scmp.lt.s32.totalorder %s24, 1
        %s623 = scalar_select %p622, %s24, 1
        %s624 = smul.addr %s623, 2
        %s625 = smul.addr %s624, 8
        %s626 = scalar_lea.vmem %s5, %s625
        %s627 = sand.u32 %s168, 1
        %s628 = scalar_lea.sflag [#allocation4], %s627
        %s629 = sand.u32 %s168, 1
        %s630 = smul.addr %s629, 16
        %s631 = scalar_lea.vmem [#allocation5], %s630
        // Predicated region
        $region45: #{encoder_layer_forward.2} parent=39 // pred_check
          %p632 = pneg %p152
        $region46: #{encoder_layer_forward.2} parent=39 // pred_check_branch
          %634 = sbr.rel (%p632) target = $region48
        $region47: #{encoder_layer_forward.2} parent=39 // pred_region
          _
        $region48: #{encoder_layer_forward.2} parent=39 // pred_fallthru
          _
        // Predicated region
        $region49: #{encoder_layer_forward.2} parent=39 // pred_check
          %p635 = pneg %p178
        $region50: #{encoder_layer_forward.2} parent=39 // pred_check_branch
          %637 = sbr.rel (%p635) target = $region52
        $region51: #{encoder_layer_forward.2} parent=39 // pred_region
          %s639 = ssub.s32 256, 256
          %640 = vsyncadd %s628, %s639
          %s641 = smul.addr %s24, 2
          %s642 = smul.addr %s641, 128
          %s643 = scalar_lea.hbm %s6, %s642
          %s644 = sshll.u32 %s631, 4
          %s645 = int_to_ptr.vmem [resolvable:$true] %s644
          %650 = dma.vmem_to_hbm [thread:$0]  %s645, 256, %s643, %s628, 128, 128, 8
        $region52: #{encoder_layer_forward.2} parent=39 // pred_fallthru
          _
      $region40: #{encoder_layer_forward.2} parent=5 // pred_fallthru
        _
      %p651 = scmp.le.s32.totalorder 2, %s19
      // Predicated region
      $region53: #{encoder_layer_forward.2} parent=5 // pred_check
        %p652 = pneg %p651
      $region54: #{encoder_layer_forward.2} parent=5 // pred_check_branch
        %654 = sbr.rel (%p652) target = $region56
      $region55: #{encoder_layer_forward.2} parent=5 // pred_region
        %s655 = ssub.s32 %s19, 2
        // Predicated region
        $region57: #{encoder_layer_forward.2} parent=55 // pred_check
          %p656 = pneg %p158
        $region58: #{encoder_layer_forward.2} parent=55 // pred_check_branch
          %658 = sbr.rel (%p656) target = $region60
        $region59: #{encoder_layer_forward.2} parent=55 // pred_region
          %p659 = scmp.lt.s32.totalorder %s25, 1
          %s660 = scalar_select %p659, %s25, 1
          %s661 = smul.addr %s660, 2
          %s662 = smul.addr %s661, 8
          %s663 = scalar_lea.vmem %s5, %s662
        $region60: #{encoder_layer_forward.2} parent=55 // pred_fallthru
          _
        // Predicated region
        $region61: #{encoder_layer_forward.2} parent=55 // pred_check
          %p664 = pneg %p184
        $region62: #{encoder_layer_forward.2} parent=55 // pred_check_branch
          %666 = sbr.rel (%p664) target = $region64
        $region63: #{encoder_layer_forward.2} parent=55 // pred_region
          %s667 = sand.u32 %s169, 1
          %s668 = scalar_lea.sflag [#allocation4], %s667
          %s669 = sand.u32 %s169, 1
          %s670 = smul.addr %s669, 16
          %s671 = scalar_lea.vmem [#allocation5], %s670
          %672 = dma.done %s668, 256
        $region64: #{encoder_layer_forward.2} parent=55 // pred_fallthru
          _
      $region56: #{encoder_layer_forward.2} parent=5 // pred_fallthru
        _
    $region6: #{encoder_layer_forward.2} parent=1 // loop_footer
      %s23 = sadd.s32 1, %s19
    $region7: #{encoder_layer_forward.2} parent=1 // loop_footer_branch
      %18 = sbr.rel target = $region3
    $region8: #{encoder_layer_forward.2} parent=1 // loop_exit
      _
    %673 = vsyncpa [#allocation3], 1
    %s674 = scalar_lea.sflag [#allocation3], 1
    %675 = vsyncpa %s674, 1
    %676 = vsyncpa [#allocation4], 1
    %s677 = scalar_lea.sflag [#allocation4], 1
    %678 = vsyncpa %s677, 1

// kernel: encoder_layer_forward.3
$region0: #{encoder_layer_forward.3}
  #allocation0 [shape = 'u32[]', space=smem, size = 0x4, offset = 0x4, fixed_abs, tag = 'smem constant byte address 0x4 - core index']
  #allocation1 [shape = 'u32[144,128]{1,0:T(1,128)}', space=vmem, size = 0x12000, scoped, tag = 'internal scratch']
  %s0 = inlined_call_operand.vmem [shape: f32[32,32], index: 0, kind: input, shape index: {}]
  %s1 = inlined_call_operand.vmem [shape: f32[32,128], index: 1, kind: input, shape index: {}]
  %s2 = inlined_call_operand.vmem [shape: f32[1,128], index: 2, kind: input, shape index: {}]
  %s3 = inlined_call_operand.vmem [shape: f32[128,32], index: 3, kind: input, shape index: {}]
  %s4 = inlined_call_operand.vmem [shape: f32[1,32], index: 4, kind: input, shape index: {}]
  %s5 = inlined_call_operand.vmem [shape: f32[32,128], index: 5, kind: input, shape index: {}]
  %s6 = inlined_call_operand.vmem [shape: f32[1,128], index: 6, kind: input, shape index: {}]
  %s7 = inlined_call_operand.vmem [shape: f32[128,32], index: 7, kind: input, shape index: {}]
  %s8 = inlined_call_operand.vmem [shape: f32[1,32], index: 8, kind: input, shape index: {}]
  %s9 = inlined_call_operand.vmem [shape: f32[32,32], index: 9, kind: input, shape index: {}]
  %s10 = inlined_call_operand.vmem [shape: f32[1,32], index: 10, kind: input, shape index: {}]
  %s11 = inlined_call_operand.vmem [shape: f32[32,32], index: 11, kind: input, shape index: {}]
  %s12 = inlined_call_operand.vmem [shape: f32[1,32], index: 12, kind: input, shape index: {}]
  %s13 = inlined_call_operand.vmem [shape: f32[32,128], index: 13, kind: input, shape index: {}]
  %s14 = inlined_call_operand.vmem [shape: f32[1,128], index: 14, kind: input, shape index: {}]
  %s15 = inlined_call_operand.vmem [shape: f32[128,32], index: 15, kind: input, shape index: {}]
  %s16 = inlined_call_operand.vmem [shape: f32[1,32], index: 16, kind: input, shape index: {}]
  %s17 = inlined_call_operand.vmem [shape: f32[32,128], index: 17, kind: input, shape index: {}]
  %s18 = inlined_call_operand.vmem [shape: f32[1,128], index: 18, kind: input, shape index: {}]
  %s19 = inlined_call_operand.vmem [shape: f32[128,32], index: 19, kind: input, shape index: {}]
  %s20 = inlined_call_operand.vmem [shape: f32[1,32], index: 20, kind: input, shape index: {}]
  %s21 = inlined_call_operand.vmem [shape: f32[1,32], index: 21, kind: input, shape index: {}]
  %s22 = inlined_call_operand.vmem [shape: f32[1,32], index: 22, kind: input, shape index: {}]
  %s23 = inlined_call_operand.hbm [shape: f32[32,32], index: 23, kind: output, shape index: {}]
  %s24 = sld [smem:[#allocation0]]
  $region125: #{encoder_layer_forward.3} parent=0
    _
  %s26 = ssub.s32 1, %s24
  %s27 = scalar_select 0, %s26, %s24
  $region1: #{encoder_layer_forward.3} parent=0
    #allocation2 [shape = 'u8[16384]{0}', space=vmem, size = 0x4000, scoped, tag = 'output window, operand 0']
    #allocation3 [shape = 's32[2]{0}', space=sflag, size = 0x8, scoped, tag = 'scoped memory for encoder_layer_forward.3']
    %28 = vsyncpa [#allocation3], 0
    %s29 = scalar_lea.sflag [#allocation3], 1
    %30 = vsyncpa %s29, 0
    loop: start=0, step=1, limit=4
    $region2: #{encoder_layer_forward.3} parent=1 // loop_pre_header
      _
    $region3: #{encoder_layer_forward.3} parent=1 // loop_header
      %s32 = sphi 0, %s36
      %p33 = scmp.ge.s32.totalorder %s32, 4
      %s42 = sphi 0, %s44
      %s45 = sphi 0, %s42
      %s46 = sphi 0, %s45
      %s62 = sphi 0, %s46
      %s66 = sphi 0, %s66
      %s68 = sphi 0, %s66
      %s69 = sphi 0, %s68
      %s83 = sphi 0, %s69
      %s87 = sphi 0, %s87
      %s89 = sphi 0, %s87
      %s90 = sphi 0, %s89
      %s104 = sphi 0, %s90
      %s108 = sphi 0, %s108
      %s110 = sphi 0, %s108
      %s111 = sphi 0, %s110
      %s125 = sphi 0, %s111
      %s129 = sphi 0, %s129
      %s131 = sphi 0, %s129
      %s132 = sphi 0, %s131
      %s146 = sphi 0, %s132
      %s150 = sphi 0, %s150
      %s152 = sphi 0, %s150
      %s153 = sphi 0, %s152
      %s167 = sphi 0, %s153
      %s171 = sphi 0, %s171
      %s173 = sphi 0, %s171
      %s174 = sphi 0, %s173
      %s188 = sphi 0, %s174
      %s192 = sphi 0, %s192
      %s194 = sphi 0, %s192
      %s195 = sphi 0, %s194
      %s209 = sphi 0, %s195
      %s213 = sphi 0, %s213
      %s215 = sphi 0, %s213
      %s216 = sphi 0, %s215
      %s230 = sphi 0, %s216
      %s234 = sphi 0, %s234
      %s236 = sphi 0, %s234
      %s237 = sphi 0, %s236
      %s251 = sphi 0, %s237
      %s255 = sphi 0, %s255
      %s257 = sphi 0, %s255
      %s258 = sphi 0, %s257
      %s272 = sphi 0, %s258
      %s276 = sphi 0, %s276
      %s278 = sphi 0, %s276
      %s279 = sphi 0, %s278
      %s293 = sphi 0, %s279
      %s297 = sphi 0, %s297
      %s299 = sphi 0, %s297
      %s300 = sphi 0, %s299
      %s314 = sphi 0, %s300
      %s318 = sphi 0, %s318
      %s320 = sphi 0, %s318
      %s321 = sphi 0, %s320
      %s335 = sphi 0, %s321
      %s339 = sphi 0, %s339
      %s341 = sphi 0, %s339
      %s342 = sphi 0, %s341
      %s356 = sphi 0, %s342
      %s360 = sphi 0, %s360
      %s362 = sphi 0, %s360
      %s363 = sphi 0, %s362
      %s377 = sphi 0, %s363
      %s381 = sphi 0, %s381
      %s383 = sphi 0, %s381
      %s384 = sphi 0, %s383
      %s398 = sphi 0, %s384
      %s402 = sphi 0, %s402
      %s404 = sphi 0, %s402
      %s405 = sphi 0, %s404
      %s419 = sphi 0, %s405
      %s423 = sphi 0, %s423
      %s425 = sphi 0, %s423
      %s426 = sphi 0, %s425
      %s440 = sphi 0, %s426
      %s444 = sphi 0, %s444
      %s446 = sphi 0, %s444
      %s447 = sphi 0, %s446
      %s461 = sphi 0, %s447
      %s465 = sphi 0, %s465
      %s467 = sphi 0, %s465
      %s468 = sphi 0, %s467
      %s482 = sphi 0, %s468
      %s486 = sphi 0, %s486
      %s488 = sphi 0, %s486
      %s489 = sphi 0, %s488
      %s503 = sphi 0, %s489
      %s507 = sphi 0, %s507
      %s509 = sphi 0, %s507
      %s510 = sphi 0, %s509
      %s524 = sphi 0, %s510
      %s530 = sphi 0, %s532
      %s533 = sphi 0, %s530
      %s534 = sphi 0, %s533
      %s550 = sphi 0, %s534
    $region4: #{encoder_layer_forward.3} parent=1 // loop_header_branch
      %35 = sbr.rel (%p33) target = $region8
    $region5: #{encoder_layer_forward.3} parent=1 // loop_body
      %s37 = ssub.s32 %s32, 1
      %s38 = ssub.s32 %s32, 2
      %s39 = sadd.s32 %s32, 1
      %s40 = ssub.s32 %s32, %s39
      %p41 = scmp.eq.s32.totalorder %s40, 0
      %s43 = sadd.s32 %s42, 1
      %s44 = scalar_select %p41, %s42, %s43
      %p47 = pneg %p41
      %p48 = scmp.eq.s32.totalorder %s32, 1
      %p49 = por %p47, %p48
      %p50 = scmp.ne.s32.totalorder %s42, %s45
      %p51 = scmp.eq.s32.totalorder %s32, 0
      %p52 = por %p50, %p51
      %p53 = scmp.ne.s32.totalorder %s42, %s45
      %p54 = scmp.eq.s32.totalorder %s37, 1
      %p55 = por %p53, %p54
      %p56 = scmp.ne.s32.totalorder %s45, %s46
      %p57 = scmp.eq.s32.totalorder %s37, 0
      %p58 = por %p56, %p57
      %p59 = scmp.ne.s32.totalorder %s45, %s46
      %p60 = scmp.eq.s32.totalorder %s38, 1
      %p61 = por %p59, %p60
      %p63 = scmp.ne.s32.totalorder %s46, %s62
      %p64 = scmp.eq.s32.totalorder %s38, 0
      %p65 = por %p63, %p64
      %s67 = sadd.s32 %s66, 1
      %p70 = scmp.eq.s32.totalorder %s32, 1
      %p71 = scmp.ne.s32.totalorder %s66, %s68
      %p72 = scmp.eq.s32.totalorder %s32, 0
      %p73 = por %p71, %p72
      %p74 = scmp.ne.s32.totalorder %s66, %s68
      %p75 = scmp.eq.s32.totalorder %s37, 1
      %p76 = por %p74, %p75
      %p77 = scmp.ne.s32.totalorder %s68, %s69
      %p78 = scmp.eq.s32.totalorder %s37, 0
      %p79 = por %p77, %p78
      %p80 = scmp.ne.s32.totalorder %s68, %s69
      %p81 = scmp.eq.s32.totalorder %s38, 1
      %p82 = por %p80, %p81
      %p84 = scmp.ne.s32.totalorder %s69, %s83
      %p85 = scmp.eq.s32.totalorder %s38, 0
      %p86 = por %p84, %p85
      %s88 = sadd.s32 %s87, 1
      %p91 = scmp.eq.s32.totalorder %s32, 1
      %p92 = scmp.ne.s32.totalorder %s87, %s89
      %p93 = scmp.eq.s32.totalorder %s32, 0
      %p94 = por %p92, %p93
      %p95 = scmp.ne.s32.totalorder %s87, %s89
      %p96 = scmp.eq.s32.totalorder %s37, 1
      %p97 = por %p95, %p96
      %p98 = scmp.ne.s32.totalorder %s89, %s90
      %p99 = scmp.eq.s32.totalorder %s37, 0
      %p100 = por %p98, %p99
      %p101 = scmp.ne.s32.totalorder %s89, %s90
      %p102 = scmp.eq.s32.totalorder %s38, 1
      %p103 = por %p101, %p102
      %p105 = scmp.ne.s32.totalorder %s90, %s104
      %p106 = scmp.eq.s32.totalorder %s38, 0
      %p107 = por %p105, %p106
      %s109 = sadd.s32 %s108, 1
      %p112 = scmp.eq.s32.totalorder %s32, 1
      %p113 = scmp.ne.s32.totalorder %s108, %s110
      %p114 = scmp.eq.s32.totalorder %s32, 0
      %p115 = por %p113, %p114
      %p116 = scmp.ne.s32.totalorder %s108, %s110
      %p117 = scmp.eq.s32.totalorder %s37, 1
      %p118 = por %p116, %p117
      %p119 = scmp.ne.s32.totalorder %s110, %s111
      %p120 = scmp.eq.s32.totalorder %s37, 0
      %p121 = por %p119, %p120
      %p122 = scmp.ne.s32.totalorder %s110, %s111
      %p123 = scmp.eq.s32.totalorder %s38, 1
      %p124 = por %p122, %p123
      %p126 = scmp.ne.s32.totalorder %s111, %s125
      %p127 = scmp.eq.s32.totalorder %s38, 0
      %p128 = por %p126, %p127
      %s130 = sadd.s32 %s129, 1
      %p133 = scmp.eq.s32.totalorder %s32, 1
      %p134 = scmp.ne.s32.totalorder %s129, %s131
      %p135 = scmp.eq.s32.totalorder %s32, 0
      %p136 = por %p134, %p135
      %p137 = scmp.ne.s32.totalorder %s129, %s131
      %p138 = scmp.eq.s32.totalorder %s37, 1
      %p139 = por %p137, %p138
      %p140 = scmp.ne.s32.totalorder %s131, %s132
      %p141 = scmp.eq.s32.totalorder %s37, 0
      %p142 = por %p140, %p141
      %p143 = scmp.ne.s32.totalorder %s131, %s132
      %p144 = scmp.eq.s32.totalorder %s38, 1
      %p145 = por %p143, %p144
      %p147 = scmp.ne.s32.totalorder %s132, %s146
      %p148 = scmp.eq.s32.totalorder %s38, 0
      %p149 = por %p147, %p148
      %s151 = sadd.s32 %s150, 1
      %p154 = scmp.eq.s32.totalorder %s32, 1
      %p155 = scmp.ne.s32.totalorder %s150, %s152
      %p156 = scmp.eq.s32.totalorder %s32, 0
      %p157 = por %p155, %p156
      %p158 = scmp.ne.s32.totalorder %s150, %s152
      %p159 = scmp.eq.s32.totalorder %s37, 1
      %p160 = por %p158, %p159
      %p161 = scmp.ne.s32.totalorder %s152, %s153
      %p162 = scmp.eq.s32.totalorder %s37, 0
      %p163 = por %p161, %p162
      %p164 = scmp.ne.s32.totalorder %s152, %s153
      %p165 = scmp.eq.s32.totalorder %s38, 1
      %p166 = por %p164, %p165
      %p168 = scmp.ne.s32.totalorder %s153, %s167
      %p169 = scmp.eq.s32.totalorder %s38, 0
      %p170 = por %p168, %p169
      %s172 = sadd.s32 %s171, 1
      %p175 = scmp.eq.s32.totalorder %s32, 1
      %p176 = scmp.ne.s32.totalorder %s171, %s173
      %p177 = scmp.eq.s32.totalorder %s32, 0
      %p178 = por %p176, %p177
      %p179 = scmp.ne.s32.totalorder %s171, %s173
      %p180 = scmp.eq.s32.totalorder %s37, 1
      %p181 = por %p179, %p180
      %p182 = scmp.ne.s32.totalorder %s173, %s174
      %p183 = scmp.eq.s32.totalorder %s37, 0
      %p184 = por %p182, %p183
      %p185 = scmp.ne.s32.totalorder %s173, %s174
      %p186 = scmp.eq.s32.totalorder %s38, 1
      %p187 = por %p185, %p186
      %p189 = scmp.ne.s32.totalorder %s174, %s188
      %p190 = scmp.eq.s32.totalorder %s38, 0
      %p191 = por %p189, %p190
      %s193 = sadd.s32 %s192, 1
      %p196 = scmp.eq.s32.totalorder %s32, 1
      %p197 = scmp.ne.s32.totalorder %s192, %s194
      %p198 = scmp.eq.s32.totalorder %s32, 0
      %p199 = por %p197, %p198
      %p200 = scmp.ne.s32.totalorder %s192, %s194
      %p201 = scmp.eq.s32.totalorder %s37, 1
      %p202 = por %p200, %p201
      %p203 = scmp.ne.s32.totalorder %s194, %s195
      %p204 = scmp.eq.s32.totalorder %s37, 0
      %p205 = por %p203, %p204
      %p206 = scmp.ne.s32.totalorder %s194, %s195
      %p207 = scmp.eq.s32.totalorder %s38, 1
      %p208 = por %p206, %p207
      %p210 = scmp.ne.s32.totalorder %s195, %s209
      %p211 = scmp.eq.s32.totalorder %s38, 0
      %p212 = por %p210, %p211
      %s214 = sadd.s32 %s213, 1
      %p217 = scmp.eq.s32.totalorder %s32, 1
      %p218 = scmp.ne.s32.totalorder %s213, %s215
      %p219 = scmp.eq.s32.totalorder %s32, 0
      %p220 = por %p218, %p219
      %p221 = scmp.ne.s32.totalorder %s213, %s215
      %p222 = scmp.eq.s32.totalorder %s37, 1
      %p223 = por %p221, %p222
      %p224 = scmp.ne.s32.totalorder %s215, %s216
      %p225 = scmp.eq.s32.totalorder %s37, 0
      %p226 = por %p224, %p225
      %p227 = scmp.ne.s32.totalorder %s215, %s216
      %p228 = scmp.eq.s32.totalorder %s38, 1
      %p229 = por %p227, %p228
      %p231 = scmp.ne.s32.totalorder %s216, %s230
      %p232 = scmp.eq.s32.totalorder %s38, 0
      %p233 = por %p231, %p232
      %s235 = sadd.s32 %s234, 1
      %p238 = scmp.eq.s32.totalorder %s32, 1
      %p239 = scmp.ne.s32.totalorder %s234, %s236
      %p240 = scmp.eq.s32.totalorder %s32, 0
      %p241 = por %p239, %p240
      %p242 = scmp.ne.s32.totalorder %s234, %s236
      %p243 = scmp.eq.s32.totalorder %s37, 1
      %p244 = por %p242, %p243
      %p245 = scmp.ne.s32.totalorder %s236, %s237
      %p246 = scmp.eq.s32.totalorder %s37, 0
      %p247 = por %p245, %p246
      %p248 = scmp.ne.s32.totalorder %s236, %s237
      %p249 = scmp.eq.s32.totalorder %s38, 1
      %p250 = por %p248, %p249
      %p252 = scmp.ne.s32.totalorder %s237, %s251
      %p253 = scmp.eq.s32.totalorder %s38, 0
      %p254 = por %p252, %p253
      %s256 = sadd.s32 %s255, 1
      %p259 = scmp.eq.s32.totalorder %s32, 1
      %p260 = scmp.ne.s32.totalorder %s255, %s257
      %p261 = scmp.eq.s32.totalorder %s32, 0
      %p262 = por %p260, %p261
      %p263 = scmp.ne.s32.totalorder %s255, %s257
      %p264 = scmp.eq.s32.totalorder %s37, 1
      %p265 = por %p263, %p264
      %p266 = scmp.ne.s32.totalorder %s257, %s258
      %p267 = scmp.eq.s32.totalorder %s37, 0
      %p268 = por %p266, %p267
      %p269 = scmp.ne.s32.totalorder %s257, %s258
      %p270 = scmp.eq.s32.totalorder %s38, 1
      %p271 = por %p269, %p270
      %p273 = scmp.ne.s32.totalorder %s258, %s272
      %p274 = scmp.eq.s32.totalorder %s38, 0
      %p275 = por %p273, %p274
      %s277 = sadd.s32 %s276, 1
      %p280 = scmp.eq.s32.totalorder %s32, 1
      %p281 = scmp.ne.s32.totalorder %s276, %s278
      %p282 = scmp.eq.s32.totalorder %s32, 0
      %p283 = por %p281, %p282
      %p284 = scmp.ne.s32.totalorder %s276, %s278
      %p285 = scmp.eq.s32.totalorder %s37, 1
      %p286 = por %p284, %p285
      %p287 = scmp.ne.s32.totalorder %s278, %s279
      %p288 = scmp.eq.s32.totalorder %s37, 0
      %p289 = por %p287, %p288
      %p290 = scmp.ne.s32.totalorder %s278, %s279
      %p291 = scmp.eq.s32.totalorder %s38, 1
      %p292 = por %p290, %p291
      %p294 = scmp.ne.s32.totalorder %s279, %s293
      %p295 = scmp.eq.s32.totalorder %s38, 0
      %p296 = por %p294, %p295
      %s298 = sadd.s32 %s297, 1
      %p301 = scmp.eq.s32.totalorder %s32, 1
      %p302 = scmp.ne.s32.totalorder %s297, %s299
      %p303 = scmp.eq.s32.totalorder %s32, 0
      %p304 = por %p302, %p303
      %p305 = scmp.ne.s32.totalorder %s297, %s299
      %p306 = scmp.eq.s32.totalorder %s37, 1
      %p307 = por %p305, %p306
      %p308 = scmp.ne.s32.totalorder %s299, %s300
      %p309 = scmp.eq.s32.totalorder %s37, 0
      %p310 = por %p308, %p309
      %p311 = scmp.ne.s32.totalorder %s299, %s300
      %p312 = scmp.eq.s32.totalorder %s38, 1
      %p313 = por %p311, %p312
      %p315 = scmp.ne.s32.totalorder %s300, %s314
      %p316 = scmp.eq.s32.totalorder %s38, 0
      %p317 = por %p315, %p316
      %s319 = sadd.s32 %s318, 1
      %p322 = scmp.eq.s32.totalorder %s32, 1
      %p323 = scmp.ne.s32.totalorder %s318, %s320
      %p324 = scmp.eq.s32.totalorder %s32, 0
      %p325 = por %p323, %p324
      %p326 = scmp.ne.s32.totalorder %s318, %s320
      %p327 = scmp.eq.s32.totalorder %s37, 1
      %p328 = por %p326, %p327
      %p329 = scmp.ne.s32.totalorder %s320, %s321
      %p330 = scmp.eq.s32.totalorder %s37, 0
      %p331 = por %p329, %p330
      %p332 = scmp.ne.s32.totalorder %s320, %s321
      %p333 = scmp.eq.s32.totalorder %s38, 1
      %p334 = por %p332, %p333
      %p336 = scmp.ne.s32.totalorder %s321, %s335
      %p337 = scmp.eq.s32.totalorder %s38, 0
      %p338 = por %p336, %p337
      %s340 = sadd.s32 %s339, 1
      %p343 = scmp.eq.s32.totalorder %s32, 1
      %p344 = scmp.ne.s32.totalorder %s339, %s341
      %p345 = scmp.eq.s32.totalorder %s32, 0
      %p346 = por %p344, %p345
      %p347 = scmp.ne.s32.totalorder %s339, %s341
      %p348 = scmp.eq.s32.totalorder %s37, 1
      %p349 = por %p347, %p348
      %p350 = scmp.ne.s32.totalorder %s341, %s342
      %p351 = scmp.eq.s32.totalorder %s37, 0
      %p352 = por %p350, %p351
      %p353 = scmp.ne.s32.totalorder %s341, %s342
      %p354 = scmp.eq.s32.totalorder %s38, 1
      %p355 = por %p353, %p354
      %p357 = scmp.ne.s32.totalorder %s342, %s356
      %p358 = scmp.eq.s32.totalorder %s38, 0
      %p359 = por %p357, %p358
      %s361 = sadd.s32 %s360, 1
      %p364 = scmp.eq.s32.totalorder %s32, 1
      %p365 = scmp.ne.s32.totalorder %s360, %s362
      %p366 = scmp.eq.s32.totalorder %s32, 0
      %p367 = por %p365, %p366
      %p368 = scmp.ne.s32.totalorder %s360, %s362
      %p369 = scmp.eq.s32.totalorder %s37, 1
      %p370 = por %p368, %p369
      %p371 = scmp.ne.s32.totalorder %s362, %s363
      %p372 = scmp.eq.s32.totalorder %s37, 0
      %p373 = por %p371, %p372
      %p374 = scmp.ne.s32.totalorder %s362, %s363
      %p375 = scmp.eq.s32.totalorder %s38, 1
      %p376 = por %p374, %p375
      %p378 = scmp.ne.s32.totalorder %s363, %s377
      %p379 = scmp.eq.s32.totalorder %s38, 0
      %p380 = por %p378, %p379
      %s382 = sadd.s32 %s381, 1
      %p385 = scmp.eq.s32.totalorder %s32, 1
      %p386 = scmp.ne.s32.totalorder %s381, %s383
      %p387 = scmp.eq.s32.totalorder %s32, 0
      %p388 = por %p386, %p387
      %p389 = scmp.ne.s32.totalorder %s381, %s383
      %p390 = scmp.eq.s32.totalorder %s37, 1
      %p391 = por %p389, %p390
      %p392 = scmp.ne.s32.totalorder %s383, %s384
      %p393 = scmp.eq.s32.totalorder %s37, 0
      %p394 = por %p392, %p393
      %p395 = scmp.ne.s32.totalorder %s383, %s384
      %p396 = scmp.eq.s32.totalorder %s38, 1
      %p397 = por %p395, %p396
      %p399 = scmp.ne.s32.totalorder %s384, %s398
      %p400 = scmp.eq.s32.totalorder %s38, 0
      %p401 = por %p399, %p400
      %s403 = sadd.s32 %s402, 1
      %p406 = scmp.eq.s32.totalorder %s32, 1
      %p407 = scmp.ne.s32.totalorder %s402, %s404
      %p408 = scmp.eq.s32.totalorder %s32, 0
      %p409 = por %p407, %p408
      %p410 = scmp.ne.s32.totalorder %s402, %s404
      %p411 = scmp.eq.s32.totalorder %s37, 1
      %p412 = por %p410, %p411
      %p413 = scmp.ne.s32.totalorder %s404, %s405
      %p414 = scmp.eq.s32.totalorder %s37, 0
      %p415 = por %p413, %p414
      %p416 = scmp.ne.s32.totalorder %s404, %s405
      %p417 = scmp.eq.s32.totalorder %s38, 1
      %p418 = por %p416, %p417
      %p420 = scmp.ne.s32.totalorder %s405, %s419
      %p421 = scmp.eq.s32.totalorder %s38, 0
      %p422 = por %p420, %p421
      %s424 = sadd.s32 %s423, 1
      %p427 = scmp.eq.s32.totalorder %s32, 1
      %p428 = scmp.ne.s32.totalorder %s423, %s425
      %p429 = scmp.eq.s32.totalorder %s32, 0
      %p430 = por %p428, %p429
      %p431 = scmp.ne.s32.totalorder %s423, %s425
      %p432 = scmp.eq.s32.totalorder %s37, 1
      %p433 = por %p431, %p432
      %p434 = scmp.ne.s32.totalorder %s425, %s426
      %p435 = scmp.eq.s32.totalorder %s37, 0
      %p436 = por %p434, %p435
      %p437 = scmp.ne.s32.totalorder %s425, %s426
      %p438 = scmp.eq.s32.totalorder %s38, 1
      %p439 = por %p437, %p438
      %p441 = scmp.ne.s32.totalorder %s426, %s440
      %p442 = scmp.eq.s32.totalorder %s38, 0
      %p443 = por %p441, %p442
      %s445 = sadd.s32 %s444, 1
      %p448 = scmp.eq.s32.totalorder %s32, 1
      %p449 = scmp.ne.s32.totalorder %s444, %s446
      %p450 = scmp.eq.s32.totalorder %s32, 0
      %p451 = por %p449, %p450
      %p452 = scmp.ne.s32.totalorder %s444, %s446
      %p453 = scmp.eq.s32.totalorder %s37, 1
      %p454 = por %p452, %p453
      %p455 = scmp.ne.s32.totalorder %s446, %s447
      %p456 = scmp.eq.s32.totalorder %s37, 0
      %p457 = por %p455, %p456
      %p458 = scmp.ne.s32.totalorder %s446, %s447
      %p459 = scmp.eq.s32.totalorder %s38, 1
      %p460 = por %p458, %p459
      %p462 = scmp.ne.s32.totalorder %s447, %s461
      %p463 = scmp.eq.s32.totalorder %s38, 0
      %p464 = por %p462, %p463
      %s466 = sadd.s32 %s465, 1
      %p469 = scmp.eq.s32.totalorder %s32, 1
      %p470 = scmp.ne.s32.totalorder %s465, %s467
      %p471 = scmp.eq.s32.totalorder %s32, 0
      %p472 = por %p470, %p471
      %p473 = scmp.ne.s32.totalorder %s465, %s467
      %p474 = scmp.eq.s32.totalorder %s37, 1
      %p475 = por %p473, %p474
      %p476 = scmp.ne.s32.totalorder %s467, %s468
      %p477 = scmp.eq.s32.totalorder %s37, 0
      %p478 = por %p476, %p477
      %p479 = scmp.ne.s32.totalorder %s467, %s468
      %p480 = scmp.eq.s32.totalorder %s38, 1
      %p481 = por %p479, %p480
      %p483 = scmp.ne.s32.totalorder %s468, %s482
      %p484 = scmp.eq.s32.totalorder %s38, 0
      %p485 = por %p483, %p484
      %s487 = sadd.s32 %s486, 1
      %p490 = scmp.eq.s32.totalorder %s32, 1
      %p491 = scmp.ne.s32.totalorder %s486, %s488
      %p492 = scmp.eq.s32.totalorder %s32, 0
      %p493 = por %p491, %p492
      %p494 = scmp.ne.s32.totalorder %s486, %s488
      %p495 = scmp.eq.s32.totalorder %s37, 1
      %p496 = por %p494, %p495
      %p497 = scmp.ne.s32.totalorder %s488, %s489
      %p498 = scmp.eq.s32.totalorder %s37, 0
      %p499 = por %p497, %p498
      %p500 = scmp.ne.s32.totalorder %s488, %s489
      %p501 = scmp.eq.s32.totalorder %s38, 1
      %p502 = por %p500, %p501
      %p504 = scmp.ne.s32.totalorder %s489, %s503
      %p505 = scmp.eq.s32.totalorder %s38, 0
      %p506 = por %p504, %p505
      %s508 = sadd.s32 %s507, 1
      %p511 = scmp.eq.s32.totalorder %s32, 1
      %p512 = scmp.ne.s32.totalorder %s507, %s509
      %p513 = scmp.eq.s32.totalorder %s32, 0
      %p514 = por %p512, %p513
      %p515 = scmp.ne.s32.totalorder %s507, %s509
      %p516 = scmp.eq.s32.totalorder %s37, 1
      %p517 = por %p515, %p516
      %p518 = scmp.ne.s32.totalorder %s509, %s510
      %p519 = scmp.eq.s32.totalorder %s37, 0
      %p520 = por %p518, %p519
      %p521 = scmp.ne.s32.totalorder %s509, %s510
      %p522 = scmp.eq.s32.totalorder %s38, 1
      %p523 = por %p521, %p522
      %p525 = scmp.ne.s32.totalorder %s510, %s524
      %p526 = scmp.eq.s32.totalorder %s38, 0
      %p527 = por %p525, %p526
      %s528 = ssub.s32 %s32, %s39
      %p529 = scmp.eq.s32.totalorder %s528, 0
      %s531 = sadd.s32 %s530, 1
      %s532 = scalar_select %p529, %s530, %s531
      %p535 = pneg %p529
      %p536 = scmp.eq.s32.totalorder %s32, 1
      %p537 = por %p535, %p536
      %p538 = scmp.ne.s32.totalorder %s530, %s533
      %p539 = scmp.eq.s32.totalorder %s32, 0
      %p540 = por %p538, %p539
      %p541 = scmp.ne.s32.totalorder %s530, %s533
      %p542 = scmp.eq.s32.totalorder %s37, 1
      %p543 = por %p541, %p542
      %p544 = scmp.ne.s32.totalorder %s533, %s534
      %p545 = scmp.eq.s32.totalorder %s37, 0
      %p546 = por %p544, %p545
      %p547 = scmp.ne.s32.totalorder %s533, %s534
      %p548 = scmp.eq.s32.totalorder %s38, 1
      %p549 = por %p547, %p548
      %p551 = scmp.ne.s32.totalorder %s534, %s550
      %p552 = scmp.eq.s32.totalorder %s38, 0
      %p553 = por %p551, %p552
      %p554 = scmp.le.s32.totalorder 1, %s32
      %p555 = scmp.lt.s32.totalorder %s32, 3
      %p556 = pnand %p554, %p555
      %p557 = pneg %p556
      // Predicated region
      $region9: #{encoder_layer_forward.3} parent=5 // pred_check
        _
      $region10: #{encoder_layer_forward.3} parent=5 // pred_check_branch
        %559 = sbr.rel (%p556) target = $region12
      $region11: #{encoder_layer_forward.3} parent=5 // pred_region
        %s560 = ssub.s32 %s32, 1
        // Predicated region
        $region13: #{encoder_layer_forward.3} parent=11 // pred_check
          %p561 = pneg %p79
        $region14: #{encoder_layer_forward.3} parent=11 // pred_check_branch
          %563 = sbr.rel (%p561) target = $region16
        $region15: #{encoder_layer_forward.3} parent=11 // pred_region
          _
        $region16: #{encoder_layer_forward.3} parent=11 // pred_fallthru
          _
        // Predicated region
        $region17: #{encoder_layer_forward.3} parent=11 // pred_check
          %p564 = pneg %p100
        $region18: #{encoder_layer_forward.3} parent=11 // pred_check_branch
          %566 = sbr.rel (%p564) target = $region20
        $region19: #{encoder_layer_forward.3} parent=11 // pred_region
          _
        $region20: #{encoder_layer_forward.3} parent=11 // pred_fallthru
          _
        // Predicated region
        $region21: #{encoder_layer_forward.3} parent=11 // pred_check
          %p567 = pneg %p121
        $region22: #{encoder_layer_forward.3} parent=11 // pred_check_branch
          %569 = sbr.rel (%p567) target = $region24
        $region23: #{encoder_layer_forward.3} parent=11 // pred_region
          _
        $region24: #{encoder_layer_forward.3} parent=11 // pred_fallthru
          _
        // Predicated region
        $region25: #{encoder_layer_forward.3} parent=11 // pred_check
          %p570 = pneg %p142
        $region26: #{encoder_layer_forward.3} parent=11 // pred_check_branch
          %572 = sbr.rel (%p570) target = $region28
        $region27: #{encoder_layer_forward.3} parent=11 // pred_region
          _
        $region28: #{encoder_layer_forward.3} parent=11 // pred_fallthru
          _
        // Predicated region
        $region29: #{encoder_layer_forward.3} parent=11 // pred_check
          %p573 = pneg %p163
        $region30: #{encoder_layer_forward.3} parent=11 // pred_check_branch
          %575 = sbr.rel (%p573) target = $region32
        $region31: #{encoder_layer_forward.3} parent=11 // pred_region
          _
        $region32: #{encoder_layer_forward.3} parent=11 // pred_fallthru
          _
        // Predicated region
        $region33: #{encoder_layer_forward.3} parent=11 // pred_check
          %p576 = pneg %p184
        $region34: #{encoder_layer_forward.3} parent=11 // pred_check_branch
          %578 = sbr.rel (%p576) target = $region36
        $region35: #{encoder_layer_forward.3} parent=11 // pred_region
          _
        $region36: #{encoder_layer_forward.3} parent=11 // pred_fallthru
          _
        // Predicated region
        $region37: #{encoder_layer_forward.3} parent=11 // pred_check
          %p579 = pneg %p205
        $region38: #{encoder_layer_forward.3} parent=11 // pred_check_branch
          %581 = sbr.rel (%p579) target = $region40
        $region39: #{encoder_layer_forward.3} parent=11 // pred_region
          _
        $region40: #{encoder_layer_forward.3} parent=11 // pred_fallthru
          _
        // Predicated region
        $region41: #{encoder_layer_forward.3} parent=11 // pred_check
          %p582 = pneg %p226
        $region42: #{encoder_layer_forward.3} parent=11 // pred_check_branch
          %584 = sbr.rel (%p582) target = $region44
        $region43: #{encoder_layer_forward.3} parent=11 // pred_region
          _
        $region44: #{encoder_layer_forward.3} parent=11 // pred_fallthru
          _
        // Predicated region
        $region45: #{encoder_layer_forward.3} parent=11 // pred_check
          %p585 = pneg %p247
        $region46: #{encoder_layer_forward.3} parent=11 // pred_check_branch
          %587 = sbr.rel (%p585) target = $region48
        $region47: #{encoder_layer_forward.3} parent=11 // pred_region
          _
        $region48: #{encoder_layer_forward.3} parent=11 // pred_fallthru
          _
        // Predicated region
        $region49: #{encoder_layer_forward.3} parent=11 // pred_check
          %p588 = pneg %p268
        $region50: #{encoder_layer_forward.3} parent=11 // pred_check_branch
          %590 = sbr.rel (%p588) target = $region52
        $region51: #{encoder_layer_forward.3} parent=11 // pred_region
          _
        $region52: #{encoder_layer_forward.3} parent=11 // pred_fallthru
          _
        // Predicated region
        $region53: #{encoder_layer_forward.3} parent=11 // pred_check
          %p591 = pneg %p289
        $region54: #{encoder_layer_forward.3} parent=11 // pred_check_branch
          %593 = sbr.rel (%p591) target = $region56
        $region55: #{encoder_layer_forward.3} parent=11 // pred_region
          _
        $region56: #{encoder_layer_forward.3} parent=11 // pred_fallthru
          _
        // Predicated region
        $region57: #{encoder_layer_forward.3} parent=11 // pred_check
          %p594 = pneg %p310
        $region58: #{encoder_layer_forward.3} parent=11 // pred_check_branch
          %596 = sbr.rel (%p594) target = $region60
        $region59: #{encoder_layer_forward.3} parent=11 // pred_region
          _
        $region60: #{encoder_layer_forward.3} parent=11 // pred_fallthru
          _
        // Predicated region
        $region61: #{encoder_layer_forward.3} parent=11 // pred_check
          %p597 = pneg %p331
        $region62: #{encoder_layer_forward.3} parent=11 // pred_check_branch
          %599 = sbr.rel (%p597) target = $region64
        $region63: #{encoder_layer_forward.3} parent=11 // pred_region
          _
        $region64: #{encoder_layer_forward.3} parent=11 // pred_fallthru
          _
        // Predicated region
        $region65: #{encoder_layer_forward.3} parent=11 // pred_check
          %p600 = pneg %p352
        $region66: #{encoder_layer_forward.3} parent=11 // pred_check_branch
          %602 = sbr.rel (%p600) target = $region68
        $region67: #{encoder_layer_forward.3} parent=11 // pred_region
          _
        $region68: #{encoder_layer_forward.3} parent=11 // pred_fallthru
          _
        // Predicated region
        $region69: #{encoder_layer_forward.3} parent=11 // pred_check
          %p603 = pneg %p373
        $region70: #{encoder_layer_forward.3} parent=11 // pred_check_branch
          %605 = sbr.rel (%p603) target = $region72
        $region71: #{encoder_layer_forward.3} parent=11 // pred_region
          _
        $region72: #{encoder_layer_forward.3} parent=11 // pred_fallthru
          _
        // Predicated region
        $region73: #{encoder_layer_forward.3} parent=11 // pred_check
          %p606 = pneg %p394
        $region74: #{encoder_layer_forward.3} parent=11 // pred_check_branch
          %608 = sbr.rel (%p606) target = $region76
        $region75: #{encoder_layer_forward.3} parent=11 // pred_region
          _
        $region76: #{encoder_layer_forward.3} parent=11 // pred_fallthru
          _
        // Predicated region
        $region77: #{encoder_layer_forward.3} parent=11 // pred_check
          %p609 = pneg %p415
        $region78: #{encoder_layer_forward.3} parent=11 // pred_check_branch
          %611 = sbr.rel (%p609) target = $region80
        $region79: #{encoder_layer_forward.3} parent=11 // pred_region
          _
        $region80: #{encoder_layer_forward.3} parent=11 // pred_fallthru
          _
        // Predicated region
        $region81: #{encoder_layer_forward.3} parent=11 // pred_check
          %p612 = pneg %p436
        $region82: #{encoder_layer_forward.3} parent=11 // pred_check_branch
          %614 = sbr.rel (%p612) target = $region84
        $region83: #{encoder_layer_forward.3} parent=11 // pred_region
          _
        $region84: #{encoder_layer_forward.3} parent=11 // pred_fallthru
          _
        // Predicated region
        $region85: #{encoder_layer_forward.3} parent=11 // pred_check
          %p615 = pneg %p457
        $region86: #{encoder_layer_forward.3} parent=11 // pred_check_branch
          %617 = sbr.rel (%p615) target = $region88
        $region87: #{encoder_layer_forward.3} parent=11 // pred_region
          _
        $region88: #{encoder_layer_forward.3} parent=11 // pred_fallthru
          _
        // Predicated region
        $region89: #{encoder_layer_forward.3} parent=11 // pred_check
          %p618 = pneg %p478
        $region90: #{encoder_layer_forward.3} parent=11 // pred_check_branch
          %620 = sbr.rel (%p618) target = $region92
        $region91: #{encoder_layer_forward.3} parent=11 // pred_region
          _
        $region92: #{encoder_layer_forward.3} parent=11 // pred_fallthru
          _
        // Predicated region
        $region93: #{encoder_layer_forward.3} parent=11 // pred_check
          %p621 = pneg %p499
        $region94: #{encoder_layer_forward.3} parent=11 // pred_check_branch
          %623 = sbr.rel (%p621) target = $region96
        $region95: #{encoder_layer_forward.3} parent=11 // pred_region
          _
        $region96: #{encoder_layer_forward.3} parent=11 // pred_fallthru
          _
        // Predicated region
        $region97: #{encoder_layer_forward.3} parent=11 // pred_check
          %p624 = pneg %p520
        $region98: #{encoder_layer_forward.3} parent=11 // pred_check_branch
          %626 = sbr.rel (%p624) target = $region100
        $region99: #{encoder_layer_forward.3} parent=11 // pred_region
          _
        $region100: #{encoder_layer_forward.3} parent=11 // pred_fallthru
          _
      $region12: #{encoder_layer_forward.3} parent=5 // pred_fallthru
        _
      %p627 = scmp.lt.s32.totalorder %s32, 2
      // Predicated region
      $region101: #{encoder_layer_forward.3} parent=5 // pred_check
        %p628 = pneg %p627
      $region102: #{encoder_layer_forward.3} parent=5 // pred_check_branch
        %630 = sbr.rel (%p628) target = $region104
      $region103: #{encoder_layer_forward.3} parent=5 // pred_region
        // Predicated region
        $region105: #{encoder_layer_forward.3} parent=103 // pred_check
          %p631 = pneg %p52
        $region106: #{encoder_layer_forward.3} parent=103 // pred_check_branch
          %633 = sbr.rel (%p631) target = $region108
        $region107: #{encoder_layer_forward.3} parent=103 // pred_region
          %s634 = smul.u32 2, %s32
          %p635 = scmp.lt.s32.totalorder %s634, 3
          %s636 = scalar_select %p635, %s634, 3
          %s637 = smul.addr %s636, 8
          %s638 = scalar_lea.vmem %s0, %s637
          %s639 = smul.u32 2, %s32
        $region108: #{encoder_layer_forward.3} parent=103 // pred_fallthru
          _
      $region104: #{encoder_layer_forward.3} parent=5 // pred_fallthru
        _
      %p640 = scmp.le.s32.totalorder 1, %s32
      %p641 = scmp.lt.s32.totalorder %s32, 3
      %p642 = pnand %p640, %p641
      %p643 = pneg %p642
      // Predicated region
      $region109: #{encoder_layer_forward.3} parent=5 // pred_check
        _
      $region110: #{encoder_layer_forward.3} parent=5 // pred_check_branch
        %645 = sbr.rel (%p642) target = $region112
      $region111: #{encoder_layer_forward.3} parent=5 // pred_region
        %s646 = ssub.s32 %s32, 1
        %s647 = smul.u32 2, %s37
        %p648 = scmp.lt.s32.totalorder %s647, 3
        %s649 = scalar_select %p648, %s647, 3
        %s650 = smul.addr %s649, 8
        %s651 = scalar_lea.vmem %s0, %s650
        %p652 = pneg %p58
        %p653 = pneg %p55
        %p654 = pneg %p79
        %p655 = pneg %p76
        %p656 = pneg %p100
        %p657 = pneg %p97
        %p658 = pneg %p121
        %p659 = pneg %p118
        %p660 = pneg %p142
        %p661 = pneg %p139
        %p662 = pneg %p163
        %p663 = pneg %p160
        %p664 = pneg %p184
        %p665 = pneg %p181
        %p666 = pneg %p205
        %p667 = pneg %p202
        %p668 = pneg %p226
        %p669 = pneg %p223
        %p670 = pneg %p247
        %p671 = pneg %p244
        %p672 = pneg %p268
        %p673 = pneg %p265
        %p674 = pneg %p289
        %p675 = pneg %p286
        %p676 = pneg %p310
        %p677 = pneg %p307
        %p678 = pneg %p331
        %p679 = pneg %p328
        %p680 = pneg %p352
        %p681 = pneg %p349
        %p682 = pneg %p373
        %p683 = pneg %p370
        %p684 = pneg %p394
        %p685 = pneg %p391
        %p686 = pneg %p415
        %p687 = pneg %p412
        %p688 = pneg %p436
        %p689 = pneg %p433
        %p690 = pneg %p457
        %p691 = pneg %p454
        %p692 = pneg %p478
        %p693 = pneg %p475
        %p694 = pneg %p499
        %p695 = pneg %p496
        %p696 = pneg %p520
        %p697 = pneg %p517
        %p698 = pneg %p546
        %p699 = pneg %p543
        %s700 = sand.u32 %s533, 1
        %s701 = scalar_lea.sflag [#allocation3], %s700
        %s702 = sand.u32 %s533, 1
        %s703 = smul.addr %s702, 16
        %s704 = scalar_lea.vmem [#allocation2], %s703
        %s705 = smul.u32 2, %s37
        %p706 = scmp.lt.s32.totalorder %s705, 3
        %s707 = scalar_select %p706, %s705, 3
        %s708 = smul.addr %s707, 8
        %s709 = scalar_lea.vmem %s0, %s708
        %s710 = smul.u32 2, %s37
        %s711 = smul.u32 2, %s37
        %v712 = vld [vmem:[%s709] sm:$0xff]
        %v713 = vld [vmem:[%s709 + $0x8] sm:$0xff]
        %v714 = vld [vmem:[%s1] sm:$0xff]
        %v715 = vld [vmem:[%s1 + $0x8] sm:$0xff]
        %v716 = vld [vmem:[%s1 + $0x10] sm:$0xff]
        %v717 = vld [vmem:[%s1 + $0x18] sm:$0xff]
        %v718 = vld [vmem:[%s2] sm:$0x1]
        %v720 = vlaneseq
        %v721 = vshrl.u32 %v720, 7
        %v722 = vsub.s32 0, %v721
        %v723 = vrot.slane %v718, %v722
        %vm725 = vcmask 261120
        %v727 = vsel %vm725, %v712, 0
        %v730 = vsel %vm725, %v713, 0
        %732 = vmatprep.subr.mxu0 0.0
        %733 = vmatpush1.msra.mxu0 %v714
        %734 = vmatprep.subr.mxu0 0.0
        %735 = vmatpush1.msra.mxu0 %v715
        %736 = vmatprep.subr.mxu0 0.0
        %737 = vmatpush1.msra.mxu0 %v716
        %738 = vmatprep.subr.mxu0 0.0
        %739 = vmatpush1.msra.mxu0 %v717
        %740 = vmatprep.subr.mxu0 0.0
        %741 = vmatpush1.msra.mxu0 0.0
        %742 = vmatprep.subr.mxu0 0.0
        %743 = vmatpush1.msra.mxu0 0.0
        %744 = vmatprep.subr.mxu0 0.0
        %745 = vmatpush1.msra.mxu0 0.0
        %746 = vmatprep.subr.mxu0 0.0
        %747 = vmatpush1.msra.mxu0 0.0
        %748 = vmatprep.subr.mxu0 0.0
        %749 = vmatpush1.msra.mxu0 0.0
        %750 = vmatprep.subr.mxu0 0.0
        %751 = vmatpush1.msra.mxu0 0.0
        %752 = vmatprep.subr.mxu0 0.0
        %753 = vmatpush1.msra.mxu0 0.0
        %754 = vmatprep.subr.mxu0 0.0
        %755 = vmatpush1.msra.mxu0 0.0
        %756 = vmatprep.subr.mxu0 0.0
        %757 = vmatpush1.msra.mxu0 0.0
        %758 = vmatprep.subr.mxu0 0.0
        %759 = vmatpush1.msra.mxu0 0.0
        %760 = vmatprep.subr.mxu0 0.0
        %761 = vmatpush1.msra.mxu0 0.0
        %762 = vmatprep.subr.mxu0 0.0
        %763 = vmatpush1.msra.mxu0 0.0
        %764 = vmatprep.subr.mxu0 0.0
        %765 = vmatpush1.msra.mxu0 0.0
        %766 = vmatprep.subr.mxu0 0.0
        %767 = vmatpush1.msra.mxu0 0.0
        %768 = vmatprep.subr.mxu0 0.0
        %769 = vmatpush1.msra.mxu0 0.0
        %770 = vmatprep.subr.mxu0 0.0
        %771 = vmatpush1.msra.mxu0 0.0
        %772 = vmatprep.subr.mxu0 0.0
        %773 = vmatpush1.msra.mxu0 0.0
        %774 = vmatprep.subr.mxu0 0.0
        %775 = vmatpush1.msra.mxu0 0.0
        %776 = vmatprep.subr.mxu0 0.0
        %777 = vmatpush1.msra.mxu0 0.0
        %778 = vmatprep.subr.mxu0 0.0
        %779 = vmatpush1.msra.mxu0 0.0
        %780 = vmatprep.subr.mxu0 0.0
        %781 = vmatpush1.msra.mxu0 0.0
        %782 = vmatprep.subr.mxu0 0.0
        %783 = vmatpush1.msra.mxu0 0.0
        %784 = vmatprep.subr.mxu0 0.0
        %785 = vmatpush1.msra.mxu0 0.0
        %786 = vmatprep.subr.mxu0 0.0
        %787 = vmatpush1.msra.mxu0 0.0
        %788 = vmatprep.subr.mxu0 0.0
        %789 = vmatpush1.msra.mxu0 0.0
        %790 = vmatprep.subr.mxu0 0.0
        %791 = vmatpush1.msra.mxu0 0.0
        %792 = vmatprep.subr.mxu0 0.0
        %793 = vmatpush1.msra.mxu0 0.0
        %794 = vmatprep.subr.mxu0 0.0
        %795 = vmatpush1.msra.mxu0 0.0
        %796 = vmatprep.mubr.f32.mxu0 0.0
        %797 = vmatmul.mubr.f32.gmra.mrb[0].mxu0 %v727
        %v798 = vpop.f32.mrb[0].mxu0
        %v799 = vadd.f32 %v723, %v798
        %v800 = vpop.f32.mrb[0].mxu0
        %801 = vmatprep.mubr.f32.mxu0 0.0
        %802 = vmatmul.mubr.f32.gmra.mrb[0].mxu0 %v730
        %v803 = vpop.f32.mrb[0].mxu0
        %v804 = vadd.f32 %v723, %v803
        %v805 = vpop.f32.mrb[0].mxu0
        %806 = vdwg.mxu0
        %v807 = vmax.f32 %v799, 0.0
        %v808 = vmax.f32 %v804, 0.0
        %v809 = vld [vmem:[%s3] sm:$0xff]
        %v810 = vld [vmem:[%s3 + $0x8] sm:$0xff]
        %v811 = vld [vmem:[%s3 + $0x10] sm:$0xff]
        %v812 = vld [vmem:[%s3 + $0x18] sm:$0xff]
        %v813 = vld [vmem:[%s3 + $0x20] sm:$0xff]
        %v814 = vld [vmem:[%s3 + $0x28] sm:$0xff]
        %v815 = vld [vmem:[%s3 + $0x30] sm:$0xff]
        %v816 = vld [vmem:[%s3 + $0x38] sm:$0xff]
        %v817 = vld [vmem:[%s3 + $0x40] sm:$0xff]
        %v818 = vld [vmem:[%s3 + $0x48] sm:$0xff]
        %v819 = vld [vmem:[%s3 + $0x50] sm:$0xff]
        %v820 = vld [vmem:[%s3 + $0x58] sm:$0xff]
        %v821 = vld [vmem:[%s3 + $0x60] sm:$0xff]
        %v822 = vld [vmem:[%s3 + $0x68] sm:$0xff]
        %v823 = vld [vmem:[%s3 + $0x70] sm:$0xff]
        %v824 = vld [vmem:[%s3 + $0x78] sm:$0xff]
        %v825 = vld [vmem:[%s4] sm:$0x1]
        %v827 = vlaneseq
        %v828 = vshrl.u32 %v827, 7
        %v829 = vsub.s32 0, %v828
        %v830 = vrot.slane %v825, %v829
        %832 = vmatprep.subr.mxu0 0.0
        %833 = vmatpush1.msra.mxu0 %v809
        %834 = vmatprep.subr.mxu0 0.0
        %835 = vmatpush1.msra.mxu0 %v810
        %836 = vmatprep.subr.mxu0 0.0
        %837 = vmatpush1.msra.mxu0 %v811
        %838 = vmatprep.subr.mxu0 0.0
        %839 = vmatpush1.msra.mxu0 %v812
        %840 = vmatprep.subr.mxu0 0.0
        %841 = vmatpush1.msra.mxu0 %v813
        %842 = vmatprep.subr.mxu0 0.0
        %843 = vmatpush1.msra.mxu0 %v814
        %844 = vmatprep.subr.mxu0 0.0
        %845 = vmatpush1.msra.mxu0 %v815
        %846 = vmatprep.subr.mxu0 0.0
        %847 = vmatpush1.msra.mxu0 %v816
        %848 = vmatprep.subr.mxu0 0.0
        %849 = vmatpush1.msra.mxu0 %v817
        %850 = vmatprep.subr.mxu0 0.0
        %851 = vmatpush1.msra.mxu0 %v818
        %852 = vmatprep.subr.mxu0 0.0
        %853 = vmatpush1.msra.mxu0 %v819
        %854 = vmatprep.subr.mxu0 0.0
        %855 = vmatpush1.msra.mxu0 %v820
        %856 = vmatprep.subr.mxu0 0.0
        %857 = vmatpush1.msra.mxu0 %v821
        %858 = vmatprep.subr.mxu0 0.0
        %859 = vmatpush1.msra.mxu0 %v822
        %860 = vmatprep.subr.mxu0 0.0
        %861 = vmatpush1.msra.mxu0 %v823
        %862 = vmatprep.subr.mxu0 0.0
        %863 = vmatpush1.msra.mxu0 %v824
        %864 = vmatprep.subr.mxu0 0.0
        %865 = vmatpush1.msra.mxu0 0.0
        %866 = vmatprep.subr.mxu0 0.0
        %867 = vmatpush1.msra.mxu0 0.0
        %868 = vmatprep.subr.mxu0 0.0
        %869 = vmatpush1.msra.mxu0 0.0
        %870 = vmatprep.subr.mxu0 0.0
        %871 = vmatpush1.msra.mxu0 0.0
        %872 = vmatprep.subr.mxu0 0.0
        %873 = vmatpush1.msra.mxu0 0.0
        %874 = vmatprep.subr.mxu0 0.0
        %875 = vmatpush1.msra.mxu0 0.0
        %876 = vmatprep.subr.mxu0 0.0
        %877 = vmatpush1.msra.mxu0 0.0
        %878 = vmatprep.subr.mxu0 0.0
        %879 = vmatpush1.msra.mxu0 0.0
        %880 = vmatprep.subr.mxu0 0.0
        %881 = vmatpush1.msra.mxu0 0.0
        %882 = vmatprep.subr.mxu0 0.0
        %883 = vmatpush1.msra.mxu0 0.0
        %884 = vmatprep.subr.mxu0 0.0
        %885 = vmatpush1.msra.mxu0 0.0
        %886 = vmatprep.subr.mxu0 0.0
        %887 = vmatpush1.msra.mxu0 0.0
        %888 = vmatprep.subr.mxu0 0.0
        %889 = vmatpush1.msra.mxu0 0.0
        %890 = vmatprep.subr.mxu0 0.0
        %891 = vmatpush1.msra.mxu0 0.0
        %892 = vmatprep.subr.mxu0 0.0
        %893 = vmatpush1.msra.mxu0 0.0
        %894 = vmatprep.subr.mxu0 0.0
        %895 = vmatpush1.msra.mxu0 0.0
        %896 = vmatprep.mubr.f32.mxu0 0.0
        %897 = vmatmul.mubr.f32.gmra.mrb[0].mxu0 %v807
        %v898 = vpop.f32.mrb[0].mxu0
        %v899 = vadd.f32 %v830, %v898
        %v900 = vpop.f32.mrb[0].mxu0
        %901 = vmatprep.mubr.f32.mxu0 0.0
        %902 = vmatmul.mubr.f32.gmra.mrb[0].mxu0 %v808
        %v903 = vpop.f32.mrb[0].mxu0
        %v904 = vadd.f32 %v830, %v903
        %v905 = vpop.f32.mrb[0].mxu0
        %906 = vdwg.mxu0
        %v907 = vld [vmem:[%s5] sm:$0xff]
        %v908 = vld [vmem:[%s5 + $0x8] sm:$0xff]
        %v909 = vld [vmem:[%s5 + $0x10] sm:$0xff]
        %v910 = vld [vmem:[%s5 + $0x18] sm:$0xff]
        %v911 = vld [vmem:[%s6] sm:$0x1]
        %v913 = vlaneseq
        %v914 = vshrl.u32 %v913, 7
        %v915 = vsub.s32 0, %v914
        %v916 = vrot.slane %v911, %v915
        %918 = vmatprep.subr.mxu0 0.0
        %919 = vmatpush1.msra.mxu0 %v907
        %920 = vmatprep.subr.mxu0 0.0
        %921 = vmatpush1.msra.mxu0 %v908
        %922 = vmatprep.subr.mxu0 0.0
        %923 = vmatpush1.msra.mxu0 %v909
        %924 = vmatprep.subr.mxu0 0.0
        %925 = vmatpush1.msra.mxu0 %v910
        %926 = vmatprep.subr.mxu0 0.0
        %927 = vmatpush1.msra.mxu0 0.0
        %928 = vmatprep.subr.mxu0 0.0
        %929 = vmatpush1.msra.mxu0 0.0
        %930 = vmatprep.subr.mxu0 0.0
        %931 = vmatpush1.msra.mxu0 0.0
        %932 = vmatprep.subr.mxu0 0.0
        %933 = vmatpush1.msra.mxu0 0.0
        %934 = vmatprep.subr.mxu0 0.0
        %935 = vmatpush1.msra.mxu0 0.0
        %936 = vmatprep.subr.mxu0 0.0
        %937 = vmatpush1.msra.mxu0 0.0
        %938 = vmatprep.subr.mxu0 0.0
        %939 = vmatpush1.msra.mxu0 0.0
        %940 = vmatprep.subr.mxu0 0.0
        %941 = vmatpush1.msra.mxu0 0.0
        %942 = vmatprep.subr.mxu0 0.0
        %943 = vmatpush1.msra.mxu0 0.0
        %944 = vmatprep.subr.mxu0 0.0
        %945 = vmatpush1.msra.mxu0 0.0
        %946 = vmatprep.subr.mxu0 0.0
        %947 = vmatpush1.msra.mxu0 0.0
        %948 = vmatprep.subr.mxu0 0.0
        %949 = vmatpush1.msra.mxu0 0.0
        %950 = vmatprep.subr.mxu0 0.0
        %951 = vmatpush1.msra.mxu0 0.0
        %952 = vmatprep.subr.mxu0 0.0
        %953 = vmatpush1.msra.mxu0 0.0
        %954 = vmatprep.subr.mxu0 0.0
        %955 = vmatpush1.msra.mxu0 0.0
        %956 = vmatprep.subr.mxu0 0.0
        %957 = vmatpush1.msra.mxu0 0.0
        %958 = vmatprep.subr.mxu0 0.0
        %959 = vmatpush1.msra.mxu0 0.0
        %960 = vmatprep.subr.mxu0 0.0
        %961 = vmatpush1.msra.mxu0 0.0
        %962 = vmatprep.subr.mxu0 0.0
        %963 = vmatpush1.msra.mxu0 0.0
        %964 = vmatprep.subr.mxu0 0.0
        %965 = vmatpush1.msra.mxu0 0.0
        %966 = vmatprep.subr.mxu0 0.0
        %967 = vmatpush1.msra.mxu0 0.0
        %968 = vmatprep.subr.mxu0 0.0
        %969 = vmatpush1.msra.mxu0 0.0
        %970 = vmatprep.subr.mxu0 0.0
        %971 = vmatpush1.msra.mxu0 0.0
        %972 = vmatprep.subr.mxu0 0.0
        %973 = vmatpush1.msra.mxu0 0.0
        %974 = vmatprep.subr.mxu0 0.0
        %975 = vmatpush1.msra.mxu0 0.0
        %976 = vmatprep.subr.mxu0 0.0
        %977 = vmatpush1.msra.mxu0 0.0
        %978 = vmatprep.subr.mxu0 0.0
        %979 = vmatpush1.msra.mxu0 0.0
        %980 = vmatprep.subr.mxu0 0.0
        %981 = vmatpush1.msra.mxu0 0.0
        %982 = vmatprep.mubr.f32.mxu0 0.0
        %983 = vmatmul.mubr.f32.gmra.mrb[0].mxu0 %v727
        %v984 = vpop.f32.mrb[0].mxu0
        %v985 = vadd.f32 %v916, %v984
        %v986 = vpop.f32.mrb[0].mxu0
        %987 = vmatprep.mubr.f32.mxu0 0.0
        %988 = vmatmul.mubr.f32.gmra.mrb[0].mxu0 %v730
        %v989 = vpop.f32.mrb[0].mxu0
        %v990 = vadd.f32 %v916, %v989
        %v991 = vpop.f32.mrb[0].mxu0
        %992 = vdwg.mxu0
        %v993 = vmax.f32 %v985, 0.0
        %v994 = vmax.f32 %v990, 0.0
        %v995 = vld [vmem:[%s7] sm:$0xff]
        %v996 = vld [vmem:[%s7 + $0x8] sm:$0xff]
        %v997 = vld [vmem:[%s7 + $0x10] sm:$0xff]
        %v998 = vld [vmem:[%s7 + $0x18] sm:$0xff]
        %v999 = vld [vmem:[%s7 + $0x20] sm:$0xff]
        %v1000 = vld [vmem:[%s7 + $0x28] sm:$0xff]
        %v1001 = vld [vmem:[%s7 + $0x30] sm:$0xff]
        %v1002 = vld [vmem:[%s7 + $0x38] sm:$0xff]
        %v1003 = vld [vmem:[%s7 + $0x40] sm:$0xff]
        %v1004 = vld [vmem:[%s7 + $0x48] sm:$0xff]
        %v1005 = vld [vmem:[%s7 + $0x50] sm:$0xff]
        %v1006 = vld [vmem:[%s7 + $0x58] sm:$0xff]
        %v1007 = vld [vmem:[%s7 + $0x60] sm:$0xff]
        %v1008 = vld [vmem:[%s7 + $0x68] sm:$0xff]
        %v1009 = vld [vmem:[%s7 + $0x70] sm:$0xff]
        %v1010 = vld [vmem:[%s7 + $0x78] sm:$0xff]
        %v1011 = vld [vmem:[%s8] sm:$0x1]
        %v1013 = vlaneseq
        %v1014 = vshrl.u32 %v1013, 7
        %v1015 = vsub.s32 0, %v1014
        %v1016 = vrot.slane %v1011, %v1015
        %1018 = vmatprep.subr.mxu0 0.0
        %1019 = vmatpush1.msra.mxu0 %v995
        %1020 = vmatprep.subr.mxu0 0.0
        %1021 = vmatpush1.msra.mxu0 %v996
        %1022 = vmatprep.subr.mxu0 0.0
        %1023 = vmatpush1.msra.mxu0 %v997
        %1024 = vmatprep.subr.mxu0 0.0
        %1025 = vmatpush1.msra.mxu0 %v998
        %1026 = vmatprep.subr.mxu0 0.0
        %1027 = vmatpush1.msra.mxu0 %v999
        %1028 = vmatprep.subr.mxu0 0.0
        %1029 = vmatpush1.msra.mxu0 %v1000
        %1030 = vmatprep.subr.mxu0 0.0
        %1031 = vmatpush1.msra.mxu0 %v1001
        %1032 = vmatprep.subr.mxu0 0.0
        %1033 = vmatpush1.msra.mxu0 %v1002
        %1034 = vmatprep.subr.mxu0 0.0
        %1035 = vmatpush1.msra.mxu0 %v1003
        %1036 = vmatprep.subr.mxu0 0.0
        %1037 = vmatpush1.msra.mxu0 %v1004
        %1038 = vmatprep.subr.mxu0 0.0
        %1039 = vmatpush1.msra.mxu0 %v1005
        %1040 = vmatprep.subr.mxu0 0.0
        %1041 = vmatpush1.msra.mxu0 %v1006
        %1042 = vmatprep.subr.mxu0 0.0
        %1043 = vmatpush1.msra.mxu0 %v1007
        %1044 = vmatprep.subr.mxu0 0.0
        %1045 = vmatpush1.msra.mxu0 %v1008
        %1046 = vmatprep.subr.mxu0 0.0
        %1047 = vmatpush1.msra.mxu0 %v1009
        %1048 = vmatprep.subr.mxu0 0.0
        %1049 = vmatpush1.msra.mxu0 %v1010
        %1050 = vmatprep.subr.mxu0 0.0
        %1051 = vmatpush1.msra.mxu0 0.0
        %1052 = vmatprep.subr.mxu0 0.0
        %1053 = vmatpush1.msra.mxu0 0.0
        %1054 = vmatprep.subr.mxu0 0.0
        %1055 = vmatpush1.msra.mxu0 0.0
        %1056 = vmatprep.subr.mxu0 0.0
        %1057 = vmatpush1.msra.mxu0 0.0
        %1058 = vmatprep.subr.mxu0 0.0
        %1059 = vmatpush1.msra.mxu0 0.0
        %1060 = vmatprep.subr.mxu0 0.0
        %1061 = vmatpush1.msra.mxu0 0.0
        %1062 = vmatprep.subr.mxu0 0.0
        %1063 = vmatpush1.msra.mxu0 0.0
        %1064 = vmatprep.subr.mxu0 0.0
        %1065 = vmatpush1.msra.mxu0 0.0
        %1066 = vmatprep.subr.mxu0 0.0
        %1067 = vmatpush1.msra.mxu0 0.0
        %1068 = vmatprep.subr.mxu0 0.0
        %1069 = vmatpush1.msra.mxu0 0.0
        %1070 = vmatprep.subr.mxu0 0.0
        %1071 = vmatpush1.msra.mxu0 0.0
        %1072 = vmatprep.subr.mxu0 0.0
        %1073 = vmatpush1.msra.mxu0 0.0
        %1074 = vmatprep.subr.mxu0 0.0
        %1075 = vmatpush1.msra.mxu0 0.0
        %1076 = vmatprep.subr.mxu0 0.0
        %1077 = vmatpush1.msra.mxu0 0.0
        %1078 = vmatprep.subr.mxu0 0.0
        %1079 = vmatpush1.msra.mxu0 0.0
        %1080 = vmatprep.subr.mxu0 0.0
        %1081 = vmatpush1.msra.mxu0 0.0
        %1082 = vmatprep.mubr.f32.mxu0 0.0
        %1083 = vmatmul.mubr.f32.gmra.mrb[0].mxu0 %v993
        %v1084 = vpop.f32.mrb[0].mxu0
        %v1085 = vadd.f32 %v1016, %v1084
        %v1086 = vpop.f32.mrb[0].mxu0
        %1087 = vmatprep.mubr.f32.mxu0 0.0
        %1088 = vmatmul.mubr.f32.gmra.mrb[0].mxu0 %v994
        %v1089 = vpop.f32.mrb[0].mxu0
        %v1090 = vadd.f32 %v1016, %v1089
        %v1091 = vpop.f32.mrb[0].mxu0
        %1092 = vdwg.mxu0
        %v1093 = vld [vmem:[%s9] sm:$0xff]
        %v1094 = vld [vmem:[%s9 + $0x8] sm:$0xff]
        %v1095 = vld [vmem:[%s9 + $0x10] sm:$0xff]
        %v1096 = vld [vmem:[%s9 + $0x18] sm:$0xff]
        %v1097 = vld [vmem:[%s10] sm:$0x1]
        %v1099 = vlaneseq
        %v1100 = vshrl.u32 %v1099, 7
        %v1101 = vsub.s32 0, %v1100
        %v1102 = vrot.slane %v1097, %v1101
        %v1105 = vsel %vm725, %v899, 0
        %v1108 = vsel %vm725, %v904, 0
        %1110 = vmatprep.subr.mxu0 0.0
        %1111 = vmatpush1.msra.mxu0 %v1093
        %1112 = vmatprep.subr.mxu0 0.0
        %1113 = vmatpush1.msra.mxu0 %v1094
        %1114 = vmatprep.subr.mxu0 0.0
        %1115 = vmatpush1.msra.mxu0 %v1095
        %1116 = vmatprep.subr.mxu0 0.0
        %1117 = vmatpush1.msra.mxu0 %v1096
        %1118 = vmatprep.subr.mxu0 0.0
        %1119 = vmatpush1.msra.mxu0 0.0
        %1120 = vmatprep.subr.mxu0 0.0
        %1121 = vmatpush1.msra.mxu0 0.0
        %1122 = vmatprep.subr.mxu0 0.0
        %1123 = vmatpush1.msra.mxu0 0.0
        %1124 = vmatprep.subr.mxu0 0.0
        %1125 = vmatpush1.msra.mxu0 0.0
        %1126 = vmatprep.subr.mxu0 0.0
        %1127 = vmatpush1.msra.mxu0 0.0
        %1128 = vmatprep.subr.mxu0 0.0
        %1129 = vmatpush1.msra.mxu0 0.0
        %1130 = vmatprep.subr.mxu0 0.0
        %1131 = vmatpush1.msra.mxu0 0.0
        %1132 = vmatprep.subr.mxu0 0.0
        %1133 = vmatpush1.msra.mxu0 0.0
        %1134 = vmatprep.subr.mxu0 0.0
        %1135 = vmatpush1.msra.mxu0 0.0
        %1136 = vmatprep.subr.mxu0 0.0
        %1137 = vmatpush1.msra.mxu0 0.0
        %1138 = vmatprep.subr.mxu0 0.0
        %1139 = vmatpush1.msra.mxu0 0.0
        %1140 = vmatprep.subr.mxu0 0.0
        %1141 = vmatpush1.msra.mxu0 0.0
        %1142 = vmatprep.subr.mxu0 0.0
        %1143 = vmatpush1.msra.mxu0 0.0
        %1144 = vmatprep.subr.mxu0 0.0
        %1145 = vmatpush1.msra.mxu0 0.0
        %1146 = vmatprep.subr.mxu0 0.0
        %1147 = vmatpush1.msra.mxu0 0.0
        %1148 = vmatprep.subr.mxu0 0.0
        %1149 = vmatpush1.msra.mxu0 0.0
        %1150 = vmatprep.subr.mxu0 0.0
        %1151 = vmatpush1.msra.mxu0 0.0
        %1152 = vmatprep.subr.mxu0 0.0
        %1153 = vmatpush1.msra.mxu0 0.0
        %1154 = vmatprep.subr.mxu0 0.0
        %1155 = vmatpush1.msra.mxu0 0.0
        %1156 = vmatprep.subr.mxu0 0.0
        %1157 = vmatpush1.msra.mxu0 0.0
        %1158 = vmatprep.subr.mxu0 0.0
        %1159 = vmatpush1.msra.mxu0 0.0
        %1160 = vmatprep.subr.mxu0 0.0
        %1161 = vmatpush1.msra.mxu0 0.0
        %1162 = vmatprep.subr.mxu0 0.0
        %1163 = vmatpush1.msra.mxu0 0.0
        %1164 = vmatprep.subr.mxu0 0.0
        %1165 = vmatpush1.msra.mxu0 0.0
        %1166 = vmatprep.subr.mxu0 0.0
        %1167 = vmatpush1.msra.mxu0 0.0
        %1168 = vmatprep.subr.mxu0 0.0
        %1169 = vmatpush1.msra.mxu0 0.0
        %1170 = vmatprep.subr.mxu0 0.0
        %1171 = vmatpush1.msra.mxu0 0.0
        %1172 = vmatprep.subr.mxu0 0.0
        %1173 = vmatpush1.msra.mxu0 0.0
        %1174 = vmatprep.mubr.f32.mxu0 0.0
        %1175 = vmatmul.mubr.f32.gmra.mrb[0].mxu0 %v1105
        %v1176 = vpop.f32.mrb[0].mxu0
        %v1177 = vadd.f32 %v1102, %v1176
        %v1178 = vpop.f32.mrb[0].mxu0
        %1179 = vmatprep.mubr.f32.mxu0 0.0
        %1180 = vmatmul.mubr.f32.gmra.mrb[0].mxu0 %v1108
        %v1181 = vpop.f32.mrb[0].mxu0
        %v1182 = vadd.f32 %v1102, %v1181
        %v1183 = vpop.f32.mrb[0].mxu0
        %1184 = vdwg.mxu0
        %v1185 = vsub.f32 0.0, %v1177
        %v1186 = vsub.f32 0.0, %v1182
        %v1187 = vmul.f32 %v1185, 1.442695
        %v1188 = vpow.pop %v1187
        %v1189 = vmul.f32 %v1186, 1.442695
        %v1190 = vpow.pop %v1189
        %v1191 = vadd.f32 %v1188, 1.0
        %v1192 = vadd.f32 %v1190, 1.0
        %v1193 = vrcp.pop %v1191
        %v1194 = vmul.f32 1.0, %v1193
        %v1195 = vrcp.pop %v1192
        %v1196 = vmul.f32 1.0, %v1195
        %v1197 = vld [vmem:[%s11] sm:$0xff]
        %v1198 = vld [vmem:[%s11 + $0x8] sm:$0xff]
        %v1199 = vld [vmem:[%s11 + $0x10] sm:$0xff]
        %v1200 = vld [vmem:[%s11 + $0x18] sm:$0xff]
        %v1201 = vld [vmem:[%s12] sm:$0x1]
        %v1203 = vlaneseq
        %v1204 = vshrl.u32 %v1203, 7
        %v1205 = vsub.s32 0, %v1204
        %v1206 = vrot.slane %v1201, %v1205
        %v1209 = vsel %vm725, %v1085, 0
        %v1212 = vsel %vm725, %v1090, 0
        %1214 = vmatprep.subr.mxu0 0.0
        %1215 = vmatpush1.msra.mxu0 %v1197
        %1216 = vmatprep.subr.mxu0 0.0
        %1217 = vmatpush1.msra.mxu0 %v1198
        %1218 = vmatprep.subr.mxu0 0.0
        %1219 = vmatpush1.msra.mxu0 %v1199
        %1220 = vmatprep.subr.mxu0 0.0
        %1221 = vmatpush1.msra.mxu0 %v1200
        %1222 = vmatprep.subr.mxu0 0.0
        %1223 = vmatpush1.msra.mxu0 0.0
        %1224 = vmatprep.subr.mxu0 0.0
        %1225 = vmatpush1.msra.mxu0 0.0
        %1226 = vmatprep.subr.mxu0 0.0
        %1227 = vmatpush1.msra.mxu0 0.0
        %1228 = vmatprep.subr.mxu0 0.0
        %1229 = vmatpush1.msra.mxu0 0.0
        %1230 = vmatprep.subr.mxu0 0.0
        %1231 = vmatpush1.msra.mxu0 0.0
        %1232 = vmatprep.subr.mxu0 0.0
        %1233 = vmatpush1.msra.mxu0 0.0
        %1234 = vmatprep.subr.mxu0 0.0
        %1235 = vmatpush1.msra.mxu0 0.0
        %1236 = vmatprep.subr.mxu0 0.0
        %1237 = vmatpush1.msra.mxu0 0.0
        %1238 = vmatprep.subr.mxu0 0.0
        %1239 = vmatpush1.msra.mxu0 0.0
        %1240 = vmatprep.subr.mxu0 0.0
        %1241 = vmatpush1.msra.mxu0 0.0
        %1242 = vmatprep.subr.mxu0 0.0
        %1243 = vmatpush1.msra.mxu0 0.0
        %1244 = vmatprep.subr.mxu0 0.0
        %1245 = vmatpush1.msra.mxu0 0.0
        %1246 = vmatprep.subr.mxu0 0.0
        %1247 = vmatpush1.msra.mxu0 0.0
        %1248 = vmatprep.subr.mxu0 0.0
        %1249 = vmatpush1.msra.mxu0 0.0
        %1250 = vmatprep.subr.mxu0 0.0
        %1251 = vmatpush1.msra.mxu0 0.0
        %1252 = vmatprep.subr.mxu0 0.0
        %1253 = vmatpush1.msra.mxu0 0.0
        %1254 = vmatprep.subr.mxu0 0.0
        %1255 = vmatpush1.msra.mxu0 0.0
        %1256 = vmatprep.subr.mxu0 0.0
        %1257 = vmatpush1.msra.mxu0 0.0
        %1258 = vmatprep.subr.mxu0 0.0
        %1259 = vmatpush1.msra.mxu0 0.0
        %1260 = vmatprep.subr.mxu0 0.0
        %1261 = vmatpush1.msra.mxu0 0.0
        %1262 = vmatprep.subr.mxu0 0.0
        %1263 = vmatpush1.msra.mxu0 0.0
        %1264 = vmatprep.subr.mxu0 0.0
        %1265 = vmatpush1.msra.mxu0 0.0
        %1266 = vmatprep.subr.mxu0 0.0
        %1267 = vmatpush1.msra.mxu0 0.0
        %1268 = vmatprep.subr.mxu0 0.0
        %1269 = vmatpush1.msra.mxu0 0.0
        %1270 = vmatprep.subr.mxu0 0.0
        %1271 = vmatpush1.msra.mxu0 0.0
        %1272 = vmatprep.subr.mxu0 0.0
        %1273 = vmatpush1.msra.mxu0 0.0
        %1274 = vmatprep.subr.mxu0 0.0
        %1275 = vmatpush1.msra.mxu0 0.0
        %1276 = vmatprep.subr.mxu0 0.0
        %1277 = vmatpush1.msra.mxu0 0.0
        %1278 = vmatprep.mubr.f32.mxu0 0.0
        %1279 = vmatmul.mubr.f32.gmra.mrb[0].mxu0 %v1209
        %v1280 = vpop.f32.mrb[0].mxu0
        %v1281 = vadd.f32 %v1206, %v1280
        %v1282 = vpop.f32.mrb[0].mxu0
        %1283 = vmatprep.mubr.f32.mxu0 0.0
        %1284 = vmatmul.mubr.f32.gmra.mrb[0].mxu0 %v1212
        %v1285 = vpop.f32.mrb[0].mxu0
        %v1286 = vadd.f32 %v1206, %v1285
        %v1287 = vpop.f32.mrb[0].mxu0
        %1288 = vdwg.mxu0
        %v1289 = vsub.f32 0.0, %v1281
        %v1290 = vsub.f32 0.0, %v1286
        %v1291 = vmul.f32 %v1289, 1.442695
        %v1292 = vpow.pop %v1291
        %v1293 = vmul.f32 %v1290, 1.442695
        %v1294 = vpow.pop %v1293
        %v1295 = vadd.f32 %v1292, 1.0
        %v1296 = vadd.f32 %v1294, 1.0
        %v1297 = vrcp.pop %v1295
        %v1298 = vmul.f32 1.0, %v1297
        %v1299 = vrcp.pop %v1296
        %v1300 = vmul.f32 1.0, %v1299
        %v1301 = vmul.f32 %v1194, %v899
        %v1302 = vmul.f32 %v1196, %v904
        %v1303 = vsub.f32 1.0, %v1194
        %v1304 = vsub.f32 1.0, %v1196
        %v1305 = vmul.f32 %v1303, %v1085
        %v1306 = vmul.f32 %v1304, %v1090
        %v1307 = vadd.f32 %v1301, %v1305
        %v1308 = vadd.f32 %v1302, %v1306
        %v1309 = vmul.f32 %v1298, %v1085
        %v1310 = vmul.f32 %v1300, %v1090
        %v1311 = vsub.f32 1.0, %v1298
        %v1312 = vsub.f32 1.0, %v1300
        %v1313 = vmul.f32 %v1311, %v899
        %v1314 = vmul.f32 %v1312, %v904
        %v1315 = vadd.f32 %v1309, %v1313
        %v1316 = vadd.f32 %v1310, %v1314
        %v1317 = vld [vmem:[%s13] sm:$0xff]
        %v1318 = vld [vmem:[%s13 + $0x8] sm:$0xff]
        %v1319 = vld [vmem:[%s13 + $0x10] sm:$0xff]
        %v1320 = vld [vmem:[%s13 + $0x18] sm:$0xff]
        %v1321 = vld [vmem:[%s14] sm:$0x1]
        %v1323 = vlaneseq
        %v1324 = vshrl.u32 %v1323, 7
        %v1325 = vsub.s32 0, %v1324
        %v1326 = vrot.slane %v1321, %v1325
        %v1329 = vsel %vm725, %v1307, 0
        %v1332 = vsel %vm725, %v1308, 0
        %1334 = vmatprep.subr.mxu0 0.0
        %1335 = vmatpush1.msra.mxu0 %v1317
        %1336 = vmatprep.subr.mxu0 0.0
        %1337 = vmatpush1.msra.mxu0 %v1318
        %1338 = vmatprep.subr.mxu0 0.0
        %1339 = vmatpush1.msra.mxu0 %v1319
        %1340 = vmatprep.subr.mxu0 0.0
        %1341 = vmatpush1.msra.mxu0 %v1320
        %1342 = vmatprep.subr.mxu0 0.0
        %1343 = vmatpush1.msra.mxu0 0.0
        %1344 = vmatprep.subr.mxu0 0.0
        %1345 = vmatpush1.msra.mxu0 0.0
        %1346 = vmatprep.subr.mxu0 0.0
        %1347 = vmatpush1.msra.mxu0 0.0
        %1348 = vmatprep.subr.mxu0 0.0
        %1349 = vmatpush1.msra.mxu0 0.0
        %1350 = vmatprep.subr.mxu0 0.0
        %1351 = vmatpush1.msra.mxu0 0.0
        %1352 = vmatprep.subr.mxu0 0.0
        %1353 = vmatpush1.msra.mxu0 0.0
        %1354 = vmatprep.subr.mxu0 0.0
        %1355 = vmatpush1.msra.mxu0 0.0
        %1356 = vmatprep.subr.mxu0 0.0
        %1357 = vmatpush1.msra.mxu0 0.0
        %1358 = vmatprep.subr.mxu0 0.0
        %1359 = vmatpush1.msra.mxu0 0.0
        %1360 = vmatprep.subr.mxu0 0.0
        %1361 = vmatpush1.msra.mxu0 0.0
        %1362 = vmatprep.subr.mxu0 0.0
        %1363 = vmatpush1.msra.mxu0 0.0
        %1364 = vmatprep.subr.mxu0 0.0
        %1365 = vmatpush1.msra.mxu0 0.0
        %1366 = vmatprep.subr.mxu0 0.0
        %1367 = vmatpush1.msra.mxu0 0.0
        %1368 = vmatprep.subr.mxu0 0.0
        %1369 = vmatpush1.msra.mxu0 0.0
        %1370 = vmatprep.subr.mxu0 0.0
        %1371 = vmatpush1.msra.mxu0 0.0
        %1372 = vmatprep.subr.mxu0 0.0
        %1373 = vmatpush1.msra.mxu0 0.0
        %1374 = vmatprep.subr.mxu0 0.0
        %1375 = vmatpush1.msra.mxu0 0.0
        %1376 = vmatprep.subr.mxu0 0.0
        %1377 = vmatpush1.msra.mxu0 0.0
        %1378 = vmatprep.subr.mxu0 0.0
        %1379 = vmatpush1.msra.mxu0 0.0
        %1380 = vmatprep.subr.mxu0 0.0
        %1381 = vmatpush1.msra.mxu0 0.0
        %1382 = vmatprep.subr.mxu0 0.0
        %1383 = vmatpush1.msra.mxu0 0.0
        %1384 = vmatprep.subr.mxu0 0.0
        %1385 = vmatpush1.msra.mxu0 0.0
        %1386 = vmatprep.subr.mxu0 0.0
        %1387 = vmatpush1.msra.mxu0 0.0
        %1388 = vmatprep.subr.mxu0 0.0
        %1389 = vmatpush1.msra.mxu0 0.0
        %1390 = vmatprep.subr.mxu0 0.0
        %1391 = vmatpush1.msra.mxu0 0.0
        %1392 = vmatprep.subr.mxu0 0.0
        %1393 = vmatpush1.msra.mxu0 0.0
        %1394 = vmatprep.subr.mxu0 0.0
        %1395 = vmatpush1.msra.mxu0 0.0
        %1396 = vmatprep.subr.mxu0 0.0
        %1397 = vmatpush1.msra.mxu0 0.0
        %1398 = vmatprep.mubr.f32.mxu0 0.0
        %1399 = vmatmul.mubr.f32.gmra.mrb[0].mxu0 %v1329
        %v1400 = vpop.f32.mrb[0].mxu0
        %v1401 = vadd.f32 %v1326, %v1400
        %v1402 = vpop.f32.mrb[0].mxu0
        %1403 = vmatprep.mubr.f32.mxu0 0.0
        %1404 = vmatmul.mubr.f32.gmra.mrb[0].mxu0 %v1332
        %v1405 = vpop.f32.mrb[0].mxu0
        %v1406 = vadd.f32 %v1326, %v1405
        %v1407 = vpop.f32.mrb[0].mxu0
        %1408 = vdwg.mxu0
        %v1409 = vmax.f32 %v1401, 0.0
        %v1410 = vmax.f32 %v1406, 0.0
        %v1411 = vld [vmem:[%s15] sm:$0xff]
        %v1412 = vld [vmem:[%s15 + $0x8] sm:$0xff]
        %v1413 = vld [vmem:[%s15 + $0x10] sm:$0xff]
        %v1414 = vld [vmem:[%s15 + $0x18] sm:$0xff]
        %v1415 = vld [vmem:[%s15 + $0x20] sm:$0xff]
        %v1416 = vld [vmem:[%s15 + $0x28] sm:$0xff]
        %v1417 = vld [vmem:[%s15 + $0x30] sm:$0xff]
        %v1418 = vld [vmem:[%s15 + $0x38] sm:$0xff]
        %v1419 = vld [vmem:[%s15 + $0x40] sm:$0xff]
        %v1420 = vld [vmem:[%s15 + $0x48] sm:$0xff]
        %v1421 = vld [vmem:[%s15 + $0x50] sm:$0xff]
        %v1422 = vld [vmem:[%s15 + $0x58] sm:$0xff]
        %v1423 = vld [vmem:[%s15 + $0x60] sm:$0xff]
        %v1424 = vld [vmem:[%s15 + $0x68] sm:$0xff]
        %v1425 = vld [vmem:[%s15 + $0x70] sm:$0xff]
        %v1426 = vld [vmem:[%s15 + $0x78] sm:$0xff]
        %v1427 = vld [vmem:[%s16] sm:$0x1]
        %v1429 = vlaneseq
        %v1430 = vshrl.u32 %v1429, 7
        %v1431 = vsub.s32 0, %v1430
        %v1432 = vrot.slane %v1427, %v1431
        %1434 = vmatprep.subr.mxu0 0.0
        %1435 = vmatpush1.msra.mxu0 %v1411
        %1436 = vmatprep.subr.mxu0 0.0
        %1437 = vmatpush1.msra.mxu0 %v1412
        %1438 = vmatprep.subr.mxu0 0.0
        %1439 = vmatpush1.msra.mxu0 %v1413
        %1440 = vmatprep.subr.mxu0 0.0
        %1441 = vmatpush1.msra.mxu0 %v1414
        %1442 = vmatprep.subr.mxu0 0.0
        %1443 = vmatpush1.msra.mxu0 %v1415
        %1444 = vmatprep.subr.mxu0 0.0
        %1445 = vmatpush1.msra.mxu0 %v1416
        %1446 = vmatprep.subr.mxu0 0.0
        %1447 = vmatpush1.msra.mxu0 %v1417
        %1448 = vmatprep.subr.mxu0 0.0
        %1449 = vmatpush1.msra.mxu0 %v1418
        %1450 = vmatprep.subr.mxu0 0.0
        %1451 = vmatpush1.msra.mxu0 %v1419
        %1452 = vmatprep.subr.mxu0 0.0
        %1453 = vmatpush1.msra.mxu0 %v1420
        %1454 = vmatprep.subr.mxu0 0.0
        %1455 = vmatpush1.msra.mxu0 %v1421
        %1456 = vmatprep.subr.mxu0 0.0
        %1457 = vmatpush1.msra.mxu0 %v1422
        %1458 = vmatprep.subr.mxu0 0.0
        %1459 = vmatpush1.msra.mxu0 %v1423
        %1460 = vmatprep.subr.mxu0 0.0
        %1461 = vmatpush1.msra.mxu0 %v1424
        %1462 = vmatprep.subr.mxu0 0.0
        %1463 = vmatpush1.msra.mxu0 %v1425
        %1464 = vmatprep.subr.mxu0 0.0
        %1465 = vmatpush1.msra.mxu0 %v1426
        %1466 = vmatprep.subr.mxu0 0.0
        %1467 = vmatpush1.msra.mxu0 0.0
        %1468 = vmatprep.subr.mxu0 0.0
        %1469 = vmatpush1.msra.mxu0 0.0
        %1470 = vmatprep.subr.mxu0 0.0
        %1471 = vmatpush1.msra.mxu0 0.0
        %1472 = vmatprep.subr.mxu0 0.0
        %1473 = vmatpush1.msra.mxu0 0.0
        %1474 = vmatprep.subr.mxu0 0.0
        %1475 = vmatpush1.msra.mxu0 0.0
        %1476 = vmatprep.subr.mxu0 0.0
        %1477 = vmatpush1.msra.mxu0 0.0
        %1478 = vmatprep.subr.mxu0 0.0
        %1479 = vmatpush1.msra.mxu0 0.0
        %1480 = vmatprep.subr.mxu0 0.0
        %1481 = vmatpush1.msra.mxu0 0.0
        %1482 = vmatprep.subr.mxu0 0.0
        %1483 = vmatpush1.msra.mxu0 0.0
        %1484 = vmatprep.subr.mxu0 0.0
        %1485 = vmatpush1.msra.mxu0 0.0
        %1486 = vmatprep.subr.mxu0 0.0
        %1487 = vmatpush1.msra.mxu0 0.0
        %1488 = vmatprep.subr.mxu0 0.0
        %1489 = vmatpush1.msra.mxu0 0.0
        %1490 = vmatprep.subr.mxu0 0.0
        %1491 = vmatpush1.msra.mxu0 0.0
        %1492 = vmatprep.subr.mxu0 0.0
        %1493 = vmatpush1.msra.mxu0 0.0
        %1494 = vmatprep.subr.mxu0 0.0
        %1495 = vmatpush1.msra.mxu0 0.0
        %1496 = vmatprep.subr.mxu0 0.0
        %1497 = vmatpush1.msra.mxu0 0.0
        %1498 = vmatprep.mubr.f32.mxu0 0.0
        %1499 = vmatmul.mubr.f32.gmra.mrb[0].mxu0 %v1409
        %v1500 = vpop.f32.mrb[0].mxu0
        %v1501 = vadd.f32 %v1432, %v1500
        %v1502 = vpop.f32.mrb[0].mxu0
        %1503 = vmatprep.mubr.f32.mxu0 0.0
        %1504 = vmatmul.mubr.f32.gmra.mrb[0].mxu0 %v1410
        %v1505 = vpop.f32.mrb[0].mxu0
        %v1506 = vadd.f32 %v1432, %v1505
        %v1507 = vpop.f32.mrb[0].mxu0
        %1508 = vdwg.mxu0
        %v1509 = vld [vmem:[%s17] sm:$0xff]
        %v1510 = vld [vmem:[%s17 + $0x8] sm:$0xff]
        %v1511 = vld [vmem:[%s17 + $0x10] sm:$0xff]
        %v1512 = vld [vmem:[%s17 + $0x18] sm:$0xff]
        %v1513 = vld [vmem:[%s18] sm:$0x1]
        %v1515 = vlaneseq
        %v1516 = vshrl.u32 %v1515, 7
        %v1517 = vsub.s32 0, %v1516
        %v1518 = vrot.slane %v1513, %v1517
        %v1521 = vsel %vm725, %v1315, 0
        %v1524 = vsel %vm725, %v1316, 0
        %1526 = vmatprep.subr.mxu0 0.0
        %1527 = vmatpush1.msra.mxu0 %v1509
        %1528 = vmatprep.subr.mxu0 0.0
        %1529 = vmatpush1.msra.mxu0 %v1510
        %1530 = vmatprep.subr.mxu0 0.0
        %1531 = vmatpush1.msra.mxu0 %v1511
        %1532 = vmatprep.subr.mxu0 0.0
        %1533 = vmatpush1.msra.mxu0 %v1512
        %1534 = vmatprep.subr.mxu0 0.0
        %1535 = vmatpush1.msra.mxu0 0.0
        %1536 = vmatprep.subr.mxu0 0.0
        %1537 = vmatpush1.msra.mxu0 0.0
        %1538 = vmatprep.subr.mxu0 0.0
        %1539 = vmatpush1.msra.mxu0 0.0
        %1540 = vmatprep.subr.mxu0 0.0
        %1541 = vmatpush1.msra.mxu0 0.0
        %1542 = vmatprep.subr.mxu0 0.0
        %1543 = vmatpush1.msra.mxu0 0.0
        %1544 = vmatprep.subr.mxu0 0.0
        %1545 = vmatpush1.msra.mxu0 0.0
        %1546 = vmatprep.subr.mxu0 0.0
        %1547 = vmatpush1.msra.mxu0 0.0
        %1548 = vmatprep.subr.mxu0 0.0
        %1549 = vmatpush1.msra.mxu0 0.0
        %1550 = vmatprep.subr.mxu0 0.0
        %1551 = vmatpush1.msra.mxu0 0.0
        %1552 = vmatprep.subr.mxu0 0.0
        %1553 = vmatpush1.msra.mxu0 0.0
        %1554 = vmatprep.subr.mxu0 0.0
        %1555 = vmatpush1.msra.mxu0 0.0
        %1556 = vmatprep.subr.mxu0 0.0
        %1557 = vmatpush1.msra.mxu0 0.0
        %1558 = vmatprep.subr.mxu0 0.0
        %1559 = vmatpush1.msra.mxu0 0.0
        %1560 = vmatprep.subr.mxu0 0.0
        %1561 = vmatpush1.msra.mxu0 0.0
        %1562 = vmatprep.subr.mxu0 0.0
        %1563 = vmatpush1.msra.mxu0 0.0
        %1564 = vmatprep.subr.mxu0 0.0
        %1565 = vmatpush1.msra.mxu0 0.0
        %1566 = vmatprep.subr.mxu0 0.0
        %1567 = vmatpush1.msra.mxu0 0.0
        %1568 = vmatprep.subr.mxu0 0.0
        %1569 = vmatpush1.msra.mxu0 0.0
        %1570 = vmatprep.subr.mxu0 0.0
        %1571 = vmatpush1.msra.mxu0 0.0
        %1572 = vmatprep.subr.mxu0 0.0
        %1573 = vmatpush1.msra.mxu0 0.0
        %1574 = vmatprep.subr.mxu0 0.0
        %1575 = vmatpush1.msra.mxu0 0.0
        %1576 = vmatprep.subr.mxu0 0.0
        %1577 = vmatpush1.msra.mxu0 0.0
        %1578 = vmatprep.subr.mxu0 0.0
        %1579 = vmatpush1.msra.mxu0 0.0
        %1580 = vmatprep.subr.mxu0 0.0
        %1581 = vmatpush1.msra.mxu0 0.0
        %1582 = vmatprep.subr.mxu0 0.0
        %1583 = vmatpush1.msra.mxu0 0.0
        %1584 = vmatprep.subr.mxu0 0.0
        %1585 = vmatpush1.msra.mxu0 0.0
        %1586 = vmatprep.subr.mxu0 0.0
        %1587 = vmatpush1.msra.mxu0 0.0
        %1588 = vmatprep.subr.mxu0 0.0
        %1589 = vmatpush1.msra.mxu0 0.0
        %1590 = vmatprep.mubr.f32.mxu0 0.0
        %1591 = vmatmul.mubr.f32.gmra.mrb[0].mxu0 %v1521
        %v1592 = vpop.f32.mrb[0].mxu0
        %v1593 = vadd.f32 %v1518, %v1592
        %v1594 = vpop.f32.mrb[0].mxu0
        %1595 = vmatprep.mubr.f32.mxu0 0.0
        %1596 = vmatmul.mubr.f32.gmra.mrb[0].mxu0 %v1524
        %v1597 = vpop.f32.mrb[0].mxu0
        %v1598 = vadd.f32 %v1518, %v1597
        %v1599 = vpop.f32.mrb[0].mxu0
        %1600 = vdwg.mxu0
        %v1601 = vmax.f32 %v1593, 0.0
        %v1602 = vmax.f32 %v1598, 0.0
        %v1603 = vld [vmem:[%s19] sm:$0xff]
        %v1604 = vld [vmem:[%s19 + $0x8] sm:$0xff]
        %v1605 = vld [vmem:[%s19 + $0x10] sm:$0xff]
        %v1606 = vld [vmem:[%s19 + $0x18] sm:$0xff]
        %v1607 = vld [vmem:[%s19 + $0x20] sm:$0xff]
        %v1608 = vld [vmem:[%s19 + $0x28] sm:$0xff]
        %v1609 = vld [vmem:[%s19 + $0x30] sm:$0xff]
        %v1610 = vld [vmem:[%s19 + $0x38] sm:$0xff]
        %v1611 = vld [vmem:[%s19 + $0x40] sm:$0xff]
        %v1612 = vld [vmem:[%s19 + $0x48] sm:$0xff]
        %v1613 = vld [vmem:[%s19 + $0x50] sm:$0xff]
        %v1614 = vld [vmem:[%s19 + $0x58] sm:$0xff]
        %v1615 = vld [vmem:[%s19 + $0x60] sm:$0xff]
        %v1616 = vld [vmem:[%s19 + $0x68] sm:$0xff]
        %v1617 = vld [vmem:[%s19 + $0x70] sm:$0xff]
        %v1618 = vld [vmem:[%s19 + $0x78] sm:$0xff]
        %v1619 = vld [vmem:[%s20] sm:$0x1]
        %v1621 = vlaneseq
        %v1622 = vshrl.u32 %v1621, 7
        %v1623 = vsub.s32 0, %v1622
        %v1624 = vrot.slane %v1619, %v1623
        %1626 = vmatprep.subr.mxu0 0.0
        %1627 = vmatpush1.msra.mxu0 %v1603
        %1628 = vmatprep.subr.mxu0 0.0
        %1629 = vmatpush1.msra.mxu0 %v1604
        %1630 = vmatprep.subr.mxu0 0.0
        %1631 = vmatpush1.msra.mxu0 %v1605
        %1632 = vmatprep.subr.mxu0 0.0
        %1633 = vmatpush1.msra.mxu0 %v1606
        %1634 = vmatprep.subr.mxu0 0.0
        %1635 = vmatpush1.msra.mxu0 %v1607
        %1636 = vmatprep.subr.mxu0 0.0
        %1637 = vmatpush1.msra.mxu0 %v1608
        %1638 = vmatprep.subr.mxu0 0.0
        %1639 = vmatpush1.msra.mxu0 %v1609
        %1640 = vmatprep.subr.mxu0 0.0
        %1641 = vmatpush1.msra.mxu0 %v1610
        %1642 = vmatprep.subr.mxu0 0.0
        %1643 = vmatpush1.msra.mxu0 %v1611
        %1644 = vmatprep.subr.mxu0 0.0
        %1645 = vmatpush1.msra.mxu0 %v1612
        %1646 = vmatprep.subr.mxu0 0.0
        %1647 = vmatpush1.msra.mxu0 %v1613
        %1648 = vmatprep.subr.mxu0 0.0
        %1649 = vmatpush1.msra.mxu0 %v1614
        %1650 = vmatprep.subr.mxu0 0.0
        %1651 = vmatpush1.msra.mxu0 %v1615
        %1652 = vmatprep.subr.mxu0 0.0
        %1653 = vmatpush1.msra.mxu0 %v1616
        %1654 = vmatprep.subr.mxu0 0.0
        %1655 = vmatpush1.msra.mxu0 %v1617
        %1656 = vmatprep.subr.mxu0 0.0
        %1657 = vmatpush1.msra.mxu0 %v1618
        %1658 = vmatprep.subr.mxu0 0.0
        %1659 = vmatpush1.msra.mxu0 0.0
        %1660 = vmatprep.subr.mxu0 0.0
        %1661 = vmatpush1.msra.mxu0 0.0
        %1662 = vmatprep.subr.mxu0 0.0
        %1663 = vmatpush1.msra.mxu0 0.0
        %1664 = vmatprep.subr.mxu0 0.0
        %1665 = vmatpush1.msra.mxu0 0.0
        %1666 = vmatprep.subr.mxu0 0.0
        %1667 = vmatpush1.msra.mxu0 0.0
        %1668 = vmatprep.subr.mxu0 0.0
        %1669 = vmatpush1.msra.mxu0 0.0
        %1670 = vmatprep.subr.mxu0 0.0
        %1671 = vmatpush1.msra.mxu0 0.0
        %1672 = vmatprep.subr.mxu0 0.0
        %1673 = vmatpush1.msra.mxu0 0.0
        %1674 = vmatprep.subr.mxu0 0.0
        %1675 = vmatpush1.msra.mxu0 0.0
        %1676 = vmatprep.subr.mxu0 0.0
        %1677 = vmatpush1.msra.mxu0 0.0
        %1678 = vmatprep.subr.mxu0 0.0
        %1679 = vmatpush1.msra.mxu0 0.0
        %1680 = vmatprep.subr.mxu0 0.0
        %1681 = vmatpush1.msra.mxu0 0.0
        %1682 = vmatprep.subr.mxu0 0.0
        %1683 = vmatpush1.msra.mxu0 0.0
        %1684 = vmatprep.subr.mxu0 0.0
        %1685 = vmatpush1.msra.mxu0 0.0
        %1686 = vmatprep.subr.mxu0 0.0
        %1687 = vmatpush1.msra.mxu0 0.0
        %1688 = vmatprep.subr.mxu0 0.0
        %1689 = vmatpush1.msra.mxu0 0.0
        %1690 = vmatprep.mubr.f32.mxu0 0.0
        %1691 = vmatmul.mubr.f32.gmra.mrb[0].mxu0 %v1601
        %v1692 = vpop.f32.mrb[0].mxu0
        %v1693 = vadd.f32 %v1624, %v1692
        %v1694 = vpop.f32.mrb[0].mxu0
        %1695 = vmatprep.mubr.f32.mxu0 0.0
        %1696 = vmatmul.mubr.f32.gmra.mrb[0].mxu0 %v1602
        %v1697 = vpop.f32.mrb[0].mxu0
        %v1698 = vadd.f32 %v1624, %v1697
        %v1699 = vpop.f32.mrb[0].mxu0
        %1700 = vdwg.mxu0
        %v1701 = vadd.f32 %v712, %v1501
        %v1702 = vadd.f32 %v713, %v1506
        %v1703 = vadd.f32 %v1701, %v1693
        %v1704 = vadd.f32 %v1702, %v1698
        %v1705 = vsel %vm725, %v1703, 0.0
        %1706 = vadd.xlane.f32.xlu0 %v1705
        %v1707 = vpop.xlane.xlu0 %1706
        %v1708 = vsel %vm725, %v1704, 0.0
        %1709 = vadd.xlane.f32.xlu0 %v1708
        %v1710 = vpop.xlane.xlu0 %1709
        %v1711 = vrcp.pop 32.0
        %v1712 = vmul.f32 %v1707, %v1711
        %v1713 = vmul.f32 %v1710, %v1711
        %v1714 = vsub.f32 %v1703, %v1712
        %v1715 = vsub.f32 %v1704, %v1713
        %v1716 = vmul.f32 %v1714, %v1714
        %v1717 = vmul.f32 %v1715, %v1715
        %v1718 = vsel %vm725, %v1716, 0.0
        %1719 = vadd.xlane.f32.xlu0 %v1718
        %v1720 = vpop.xlane.xlu0 %1719
        %v1721 = vsel %vm725, %v1717, 0.0
        %1722 = vadd.xlane.f32.xlu0 %v1721
        %v1723 = vpop.xlane.xlu0 %1722
        %v1724 = vmul.f32 %v1720, %v1711
        %v1725 = vmul.f32 %v1723, %v1711
        %v1726 = vadd.f32 %v1724, 1e-05
        %v1727 = vadd.f32 %v1725, 1e-05
        %v1728 = vrsqrt.pop %v1726
        %v1729 = vrsqrt.pop %v1727
        %v1730 = vmul.f32 %v1714, %v1728
        %v1731 = vmul.f32 %v1715, %v1729
        %v1732 = vld [vmem:[%s21] sm:$0x1]
        %v1734 = vlaneseq
        %v1735 = vshrl.u32 %v1734, 7
        %v1736 = vsub.s32 0, %v1735
        %v1737 = vrot.slane %v1732, %v1736
        %v1739 = vmul.f32 %v1730, %v1737
        %v1740 = vmul.f32 %v1731, %v1737
        %v1741 = vld [vmem:[%s22] sm:$0x1]
        %v1743 = vlaneseq
        %v1744 = vshrl.u32 %v1743, 7
        %v1745 = vsub.s32 0, %v1744
        %v1746 = vrot.slane %v1741, %v1745
        %v1748 = vadd.f32 %v1739, %v1746
        %v1749 = vadd.f32 %v1740, %v1746
        %1750 = vst.msk [vmem:[%s704] sm:$0xff] %vm725, %v1748
        %1751 = vst.msk [vmem:[%s704 + $0x8] sm:$0xff] %vm725, %v1749
        %s1752 = sand.u32 %s533, 1
        %s1753 = scalar_lea.sflag [#allocation3], %s1752
        %s1754 = sand.u32 %s533, 1
        %s1755 = smul.addr %s1754, 16
        %s1756 = scalar_lea.vmem [#allocation2], %s1755
        // Predicated region
        $region113: #{encoder_layer_forward.3} parent=111 // pred_check
          %p1757 = pneg %p543
        $region114: #{encoder_layer_forward.3} parent=111 // pred_check_branch
          %1759 = sbr.rel (%p1757) target = $region116
        $region115: #{encoder_layer_forward.3} parent=111 // pred_region
          %s1760 = smul.u32 2, %s37
          %s1762 = ssub.s32 256, 256
          %1763 = vsyncadd %s1753, %s1762
          %s1764 = smul.addr %s1760, 128
          %s1765 = scalar_lea.hbm %s23, %s1764
          %s1766 = sshll.u32 %s1756, 4
          %s1767 = int_to_ptr.vmem [resolvable:$true] %s1766
          %1772 = dma.vmem_to_hbm [thread:$0]  %s1767, 256, %s1765, %s1753, 128, 128, 8
        $region116: #{encoder_layer_forward.3} parent=111 // pred_fallthru
          _
      $region112: #{encoder_layer_forward.3} parent=5 // pred_fallthru
        _
      %p1773 = scmp.le.s32.totalorder 2, %s32
      // Predicated region
      $region117: #{encoder_layer_forward.3} parent=5 // pred_check
        %p1774 = pneg %p1773
      $region118: #{encoder_layer_forward.3} parent=5 // pred_check_branch
        %1776 = sbr.rel (%p1774) target = $region120
      $region119: #{encoder_layer_forward.3} parent=5 // pred_region
        %s1777 = ssub.s32 %s32, 2
        // Predicated region
        $region121: #{encoder_layer_forward.3} parent=119 // pred_check
          %p1778 = pneg %p549
        $region122: #{encoder_layer_forward.3} parent=119 // pred_check_branch
          %1780 = sbr.rel (%p1778) target = $region124
        $region123: #{encoder_layer_forward.3} parent=119 // pred_region
          %s1781 = sand.u32 %s534, 1
          %s1782 = scalar_lea.sflag [#allocation3], %s1781
          %s1783 = sand.u32 %s534, 1
          %s1784 = smul.addr %s1783, 16
          %s1785 = scalar_lea.vmem [#allocation2], %s1784
          %1786 = dma.done %s1782, 256
        $region124: #{encoder_layer_forward.3} parent=119 // pred_fallthru
          _
      $region120: #{encoder_layer_forward.3} parent=5 // pred_fallthru
        _
    $region6: #{encoder_layer_forward.3} parent=1 // loop_footer
      %s36 = sadd.s32 1, %s32
    $region7: #{encoder_layer_forward.3} parent=1 // loop_footer_branch
      %31 = sbr.rel target = $region3
    $region8: #{encoder_layer_forward.3} parent=1 // loop_exit
      _
    %1787 = vsyncpa [#allocation3], 1
    %s1788 = scalar_lea.sflag [#allocation3], 1
    %1789 = vsyncpa %s1788, 1

</llo_original>
